<compile_context>
chip_gen: v5e
topology: v5e:2x2
jax: 0.10.0
libtpu: 0.0.40
codegen_flags: <defaults>
</compile_context>

<pallas_src>
import jax
import jax.numpy as jnp
from jax.experimental import pallas as pl
from jax.experimental.pallas import tpu as pltpu

# Layer widths of ANNmodel: inputsize -> 256 -> 512 -> 1024 -> 512 -> 256 -> 128 -> 64 -> 4
REAL_OUT_SIZES = [256, 512, 1024, 512, 256, 128, 64, 4]
NUM_LAYERS = 8
OUT_FEATURES = 4
NEG_SLOPE = 0.01
BN_EPS = 1e-5


def _round_up(n, m):
    return ((n + m - 1) // m) * m


def ann_kernel(*refs):
    """Fused forward pass over one batch tile.

    refs layout: x_ref, [w_bf16, shift_f32] * 8, out_ref
    (BN + bias already folded into w/shift on the host.)
    """
    x_ref = refs[0]
    out_ref = refs[-1]
    params = refs[1:-1]

    h = x_ref[...].astype(jnp.float32)
    for li in range(NUM_LAYERS):
        w = params[2 * li][...]          # bf16, lane-dense padded
        shift = params[2 * li + 1][...]  # f32 (1, out)
        z = jnp.dot(h.astype(jnp.bfloat16), w,
                    preferred_element_type=jnp.float32) + shift
        if li < NUM_LAYERS - 1:
            h = jnp.maximum(z, NEG_SLOPE * z)        # leaky_relu(0.01), single VALU op
        else:
            out_ref[...] = 1.0 / (1.0 + jnp.exp(-z))  # sigmoid (exp on EUP)


def init_params(key, inputsize):
    """Synthetic params mirroring ANNmodel.__init__, with BN+bias folded, padded, bf16.

    Returns a flat list [w0, shift0, w1, shift1, ..., w7, shift7]:
      w_i  : bf16 [in_pad, out_pad]   (PyTorch weight transposed, BN-scale folded)
      s_i  : f32  [1, out_pad]        (bias*scale + beta - mean*scale; plain bias for layer 8)
    Hidden/output widths < 128 are zero-padded to 128 (padded activations stay exactly 0).
    """
    real_sizes = [inputsize] + REAL_OUT_SIZES
    pad_sizes = [inputsize] + [_round_up(s, 128) for s in REAL_OUT_SIZES]

    flat = []
    for li in range(NUM_LAYERS):
        fin, fout = real_sizes[li], real_sizes[li + 1]
        pin, pout = pad_sizes[li], pad_sizes[li + 1]

        key, kw, kb = jax.random.split(key, 3)
        # nn.Linear weight is [out, in]; store transposed [in, out] for x @ W.
        w = jax.random.normal(kw, (fin, fout), jnp.float32) * (1.0 / jnp.sqrt(fin))
        b = 0.01 * jax.random.normal(kb, (1, fout), jnp.float32)

        if li < NUM_LAYERS - 1:
            key, kg, kbeta = jax.random.split(key, 3)
            gamma = 1.0 + 0.1 * jax.random.normal(kg, (fout,), jnp.float32)
            beta = 0.1 * jax.random.normal(kbeta, (fout,), jnp.float32)
            running_mean = jnp.zeros((fout,), jnp.float32)   # PyTorch init values
            running_var = jnp.ones((fout,), jnp.float32)
            scale = gamma / jnp.sqrt(running_var + BN_EPS)
            bn_shift = beta - running_mean * scale
            w_f = w * scale[None, :]
            s_f = (b[0] * scale + bn_shift)[None, :]
        else:
            w_f = w
            s_f = b

        w_pad = jnp.zeros((pin, pout), jnp.float32).at[:fin, :fout].set(w_f)
        s_pad = jnp.zeros((1, pout), jnp.float32).at[:, :fout].set(s_f)
        flat.append(w_pad.astype(jnp.bfloat16))
        flat.append(s_pad)  # keep f32 for the VPU add
    return flat


def ann_forward(x, flat_params):
    batch, in_features = x.shape
    out_pad = flat_params[-1].shape[-1]   # 128

    # Batch tile: multiple of 8 sublanes; cap at 256 so the widest activation
    # tile ([256,1024] f32 = 1 MB) is tiny next to ~2.7 MB of resident bf16 weights.
    tb = min(256, _round_up(max(batch, 1), 8))
    b_pad = _round_up(batch, tb)
    if b_pad != batch:
        x = jnp.pad(x, ((0, b_pad - batch), (0, 0)))

    grid = (pl.cdiv(b_pad, tb),)

    in_specs = [pl.BlockSpec((tb, in_features), lambda i: (i, 0))]
    for p in flat_params:
        # Weights/shifts: full-array block, constant index -> stays VMEM-resident.
        in_specs.append(pl.BlockSpec(p.shape, lambda i: (0, 0)))
    out_specs = pl.BlockSpec((tb, out_pad), lambda i: (i, 0))

    out = pl.pallas_call(
        ann_kernel,
        out_shape=jax.ShapeDtypeStruct((b_pad, out_pad), jnp.float32),
        grid=grid,
        in_specs=in_specs,
        out_specs=out_specs,
        compiler_params=pltpu.CompilerParams(
            dimension_semantics=("parallel",),
            vmem_limit_bytes=32 << 20,   # safe on v5e/v6e/v7x (v7x physical = 64 MiB)
        ),
    )(x, *flat_params)
    return out[:batch, :OUT_FEATURES]


def ann_reference(x, flat_params):
    """Pure-JAX reference using the same (folded, padded, bf16) parameters."""
    h = x.astype(jnp.float32)
    for li in range(NUM_LAYERS):
        w = flat_params[2 * li]
        shift = flat_params[2 * li + 1]
        z = jnp.dot(h.astype(jnp.bfloat16), w,
                    preferred_element_type=jnp.float32) + shift
        if li < NUM_LAYERS - 1:
            h = jnp.maximum(z, NEG_SLOPE * z)
        else:
            h = 1.0 / (1.0 + jnp.exp(-z))
    return h[:, :OUT_FEATURES]


if __name__ == "__main__":
    inputsize = 32
    batch = 8

    key = jax.random.PRNGKey(0)
    key, kx = jax.random.split(key)
    x = jax.random.normal(kx, (batch, inputsize), jnp.float32)
    params = init_params(key, inputsize)

    out = jax.block_until_ready(ann_forward(x, params))
    ref = ann_reference(x, params)

    assert out.shape == (batch, OUT_FEATURES)
    assert jnp.all(jnp.isfinite(out))
    assert jnp.allclose(out, ref, atol=1e-3, rtol=1e-3), "mismatch vs reference"

    print("KERNEL_OK")
</pallas_src>

<mosaic_0001>
module attributes {stable_mosaic.version = 11 : i64} {
  func.func @ann_kernel(%arg0: i32, %arg1: memref<8x32xf32, #tpu.memory_space<vmem>>, %arg2: memref<32x256xbf16, #tpu.memory_space<vmem>>, %arg3: memref<1x256xf32, #tpu.memory_space<vmem>>, %arg4: memref<256x512xbf16, #tpu.memory_space<vmem>>, %arg5: memref<1x512xf32, #tpu.memory_space<vmem>>, %arg6: memref<512x1024xbf16, #tpu.memory_space<vmem>>, %arg7: memref<1x1024xf32, #tpu.memory_space<vmem>>, %arg8: memref<1024x512xbf16, #tpu.memory_space<vmem>>, %arg9: memref<1x512xf32, #tpu.memory_space<vmem>>, %arg10: memref<512x256xbf16, #tpu.memory_space<vmem>>, %arg11: memref<1x256xf32, #tpu.memory_space<vmem>>, %arg12: memref<256x128xbf16, #tpu.memory_space<vmem>>, %arg13: memref<1x128xf32, #tpu.memory_space<vmem>>, %arg14: memref<128x128xbf16, #tpu.memory_space<vmem>>, %arg15: memref<1x128xf32, #tpu.memory_space<vmem>>, %arg16: memref<128x128xbf16, #tpu.memory_space<vmem>>, %arg17: memref<1x128xf32, #tpu.memory_space<vmem>>, %arg18: memref<8x128xf32, #tpu.memory_space<vmem>>) attributes {dimension_semantics = [#tpu.dimension_semantics<parallel>], iteration_bounds = array<i64: 1>, scalar_prefetch = 0 : i64, scratch_operands = 0 : i64, tpu.core_type = #tpu.core_type<tc>, window_params = [{transform_indices = @transform_0, window_bounds = array<i64: 8, 32>}, {pipeline_mode = #tpu.pipeline_mode<synchronous>, transform_indices = @transform_1, window_bounds = array<i64: 32, 256>}, {pipeline_mode = #tpu.pipeline_mode<synchronous>, transform_indices = @transform_2, window_bounds = array<i64: 1, 256>}, {pipeline_mode = #tpu.pipeline_mode<synchronous>, transform_indices = @transform_3, window_bounds = array<i64: 256, 512>}, {pipeline_mode = #tpu.pipeline_mode<synchronous>, transform_indices = @transform_4, window_bounds = array<i64: 1, 512>}, {pipeline_mode = #tpu.pipeline_mode<synchronous>, transform_indices = @transform_5, window_bounds = array<i64: 512, 1024>}, {pipeline_mode = #tpu.pipeline_mode<synchronous>, transform_indices = @transform_6, window_bounds = array<i64: 1, 1024>}, {pipeline_mode = #tpu.pipeline_mode<synchronous>, transform_indices = @transform_7, window_bounds = array<i64: 1024, 512>}, {pipeline_mode = #tpu.pipeline_mode<synchronous>, transform_indices = @transform_8, window_bounds = array<i64: 1, 512>}, {pipeline_mode = #tpu.pipeline_mode<synchronous>, transform_indices = @transform_9, window_bounds = array<i64: 512, 256>}, {pipeline_mode = #tpu.pipeline_mode<synchronous>, transform_indices = @transform_10, window_bounds = array<i64: 1, 256>}, {pipeline_mode = #tpu.pipeline_mode<synchronous>, transform_indices = @transform_11, window_bounds = array<i64: 256, 128>}, {pipeline_mode = #tpu.pipeline_mode<synchronous>, transform_indices = @transform_12, window_bounds = array<i64: 1, 128>}, {pipeline_mode = #tpu.pipeline_mode<synchronous>, transform_indices = @transform_13, window_bounds = array<i64: 128, 128>}, {pipeline_mode = #tpu.pipeline_mode<synchronous>, transform_indices = @transform_14, window_bounds = array<i64: 1, 128>}, {pipeline_mode = #tpu.pipeline_mode<synchronous>, transform_indices = @transform_15, window_bounds = array<i64: 128, 128>}, {pipeline_mode = #tpu.pipeline_mode<synchronous>, transform_indices = @transform_16, window_bounds = array<i64: 1, 128>}, {transform_indices = @transform_17, window_bounds = array<i64: 8, 128>}]} {
    %c0 = arith.constant 0 : index
    %c0_0 = arith.constant 0 : index
    %0 = vector.load %arg1[%c0, %c0_0] : memref<8x32xf32, #tpu.memory_space<vmem>>, vector<8x32xf32>
    %c0_1 = arith.constant 0 : index
    %c0_2 = arith.constant 0 : index
    %1 = vector.load %arg2[%c0_1, %c0_2] : memref<32x256xbf16, #tpu.memory_space<vmem>>, vector<32x256xbf16>
    %c0_3 = arith.constant 0 : index
    %c0_4 = arith.constant 0 : index
    %2 = vector.load %arg3[%c0_3, %c0_4] : memref<1x256xf32, #tpu.memory_space<vmem>>, vector<1x256xf32>
    %3 = arith.truncf %0 : vector<8x32xf32> to vector<8x32xbf16>
    %cst = arith.constant dense<0.000000e+00> : vector<8x256xf32>
    %4 = tpu.matmul %3, %1, %cst {dimension_numbers = #tpu.dot_dimension_numbers<[1], [0], [0], [1], [0, 0, 1, 1], [], []>} : vector<8x32xbf16>, vector<32x256xbf16>, vector<8x256xf32> -> vector<8x256xf32>
    %5 = vector.broadcast %2 : vector<1x256xf32> to vector<8x256xf32>
    %6 = arith.addf %4, %5 : vector<8x256xf32>
    %cst_5 = arith.constant 0.00999999977 : f32
    %7 = vector.broadcast %cst_5 : f32 to vector<8x256xf32>
    %8 = arith.mulf %7, %6 : vector<8x256xf32>
    %9 = arith.maximumf %6, %8 : vector<8x256xf32>
    %c0_6 = arith.constant 0 : index
    %c0_7 = arith.constant 0 : index
    %10 = vector.load %arg4[%c0_6, %c0_7] : memref<256x512xbf16, #tpu.memory_space<vmem>>, vector<256x512xbf16>
    %c0_8 = arith.constant 0 : index
    %c0_9 = arith.constant 0 : index
    %11 = vector.load %arg5[%c0_8, %c0_9] : memref<1x512xf32, #tpu.memory_space<vmem>>, vector<1x512xf32>
    %12 = arith.truncf %9 : vector<8x256xf32> to vector<8x256xbf16>
    %cst_10 = arith.constant dense<0.000000e+00> : vector<8x512xf32>
    %13 = tpu.matmul %12, %10, %cst_10 {dimension_numbers = #tpu.dot_dimension_numbers<[1], [0], [0], [1], [0, 0, 1, 1], [], []>} : vector<8x256xbf16>, vector<256x512xbf16>, vector<8x512xf32> -> vector<8x512xf32>
    %14 = vector.broadcast %11 : vector<1x512xf32> to vector<8x512xf32>
    %15 = arith.addf %13, %14 : vector<8x512xf32>
    %cst_11 = arith.constant 0.00999999977 : f32
    %16 = vector.broadcast %cst_11 : f32 to vector<8x512xf32>
    %17 = arith.mulf %16, %15 : vector<8x512xf32>
    %18 = arith.maximumf %15, %17 : vector<8x512xf32>
    %c0_12 = arith.constant 0 : index
    %c0_13 = arith.constant 0 : index
    %19 = vector.load %arg6[%c0_12, %c0_13] : memref<512x1024xbf16, #tpu.memory_space<vmem>>, vector<512x1024xbf16>
    %c0_14 = arith.constant 0 : index
    %c0_15 = arith.constant 0 : index
    %20 = vector.load %arg7[%c0_14, %c0_15] : memref<1x1024xf32, #tpu.memory_space<vmem>>, vector<1x1024xf32>
    %21 = arith.truncf %18 : vector<8x512xf32> to vector<8x512xbf16>
    %cst_16 = arith.constant dense<0.000000e+00> : vector<8x1024xf32>
    %22 = tpu.matmul %21, %19, %cst_16 {dimension_numbers = #tpu.dot_dimension_numbers<[1], [0], [0], [1], [0, 0, 1, 1], [], []>} : vector<8x512xbf16>, vector<512x1024xbf16>, vector<8x1024xf32> -> vector<8x1024xf32>
    %23 = vector.broadcast %20 : vector<1x1024xf32> to vector<8x1024xf32>
    %24 = arith.addf %22, %23 : vector<8x1024xf32>
    %cst_17 = arith.constant 0.00999999977 : f32
    %25 = vector.broadcast %cst_17 : f32 to vector<8x1024xf32>
    %26 = arith.mulf %25, %24 : vector<8x1024xf32>
    %27 = arith.maximumf %24, %26 : vector<8x1024xf32>
    %c0_18 = arith.constant 0 : index
    %c0_19 = arith.constant 0 : index
    %28 = vector.load %arg8[%c0_18, %c0_19] : memref<1024x512xbf16, #tpu.memory_space<vmem>>, vector<1024x512xbf16>
    %c0_20 = arith.constant 0 : index
    %c0_21 = arith.constant 0 : index
    %29 = vector.load %arg9[%c0_20, %c0_21] : memref<1x512xf32, #tpu.memory_space<vmem>>, vector<1x512xf32>
    %30 = arith.truncf %27 : vector<8x1024xf32> to vector<8x1024xbf16>
    %cst_22 = arith.constant dense<0.000000e+00> : vector<8x512xf32>
    %31 = tpu.matmul %30, %28, %cst_22 {dimension_numbers = #tpu.dot_dimension_numbers<[1], [0], [0], [1], [0, 0, 1, 1], [], []>} : vector<8x1024xbf16>, vector<1024x512xbf16>, vector<8x512xf32> -> vector<8x512xf32>
    %32 = vector.broadcast %29 : vector<1x512xf32> to vector<8x512xf32>
    %33 = arith.addf %31, %32 : vector<8x512xf32>
    %cst_23 = arith.constant 0.00999999977 : f32
    %34 = vector.broadcast %cst_23 : f32 to vector<8x512xf32>
    %35 = arith.mulf %34, %33 : vector<8x512xf32>
    %36 = arith.maximumf %33, %35 : vector<8x512xf32>
    %c0_24 = arith.constant 0 : index
    %c0_25 = arith.constant 0 : index
    %37 = vector.load %arg10[%c0_24, %c0_25] : memref<512x256xbf16, #tpu.memory_space<vmem>>, vector<512x256xbf16>
    %c0_26 = arith.constant 0 : index
    %c0_27 = arith.constant 0 : index
    %38 = vector.load %arg11[%c0_26, %c0_27] : memref<1x256xf32, #tpu.memory_space<vmem>>, vector<1x256xf32>
    %39 = arith.truncf %36 : vector<8x512xf32> to vector<8x512xbf16>
    %cst_28 = arith.constant dense<0.000000e+00> : vector<8x256xf32>
    %40 = tpu.matmul %39, %37, %cst_28 {dimension_numbers = #tpu.dot_dimension_numbers<[1], [0], [0], [1], [0, 0, 1, 1], [], []>} : vector<8x512xbf16>, vector<512x256xbf16>, vector<8x256xf32> -> vector<8x256xf32>
    %41 = vector.broadcast %38 : vector<1x256xf32> to vector<8x256xf32>
    %42 = arith.addf %40, %41 : vector<8x256xf32>
    %cst_29 = arith.constant 0.00999999977 : f32
    %43 = vector.broadcast %cst_29 : f32 to vector<8x256xf32>
    %44 = arith.mulf %43, %42 : vector<8x256xf32>
    %45 = arith.maximumf %42, %44 : vector<8x256xf32>
    %c0_30 = arith.constant 0 : index
    %c0_31 = arith.constant 0 : index
    %46 = vector.load %arg12[%c0_30, %c0_31] : memref<256x128xbf16, #tpu.memory_space<vmem>>, vector<256x128xbf16>
    %c0_32 = arith.constant 0 : index
    %c0_33 = arith.constant 0 : index
    %47 = vector.load %arg13[%c0_32, %c0_33] : memref<1x128xf32, #tpu.memory_space<vmem>>, vector<1x128xf32>
    %48 = arith.truncf %45 : vector<8x256xf32> to vector<8x256xbf16>
    %cst_34 = arith.constant dense<0.000000e+00> : vector<8x128xf32>
    %49 = tpu.matmul %48, %46, %cst_34 {dimension_numbers = #tpu.dot_dimension_numbers<[1], [0], [0], [1], [0, 0, 1, 1], [], []>} : vector<8x256xbf16>, vector<256x128xbf16>, vector<8x128xf32> -> vector<8x128xf32>
    %50 = vector.broadcast %47 : vector<1x128xf32> to vector<8x128xf32>
    %51 = arith.addf %49, %50 : vector<8x128xf32>
    %cst_35 = arith.constant 0.00999999977 : f32
    %52 = vector.broadcast %cst_35 : f32 to vector<8x128xf32>
    %53 = arith.mulf %52, %51 : vector<8x128xf32>
    %54 = arith.maximumf %51, %53 : vector<8x128xf32>
    %c0_36 = arith.constant 0 : index
    %c0_37 = arith.constant 0 : index
    %55 = vector.load %arg14[%c0_36, %c0_37] : memref<128x128xbf16, #tpu.memory_space<vmem>>, vector<128x128xbf16>
    %c0_38 = arith.constant 0 : index
    %c0_39 = arith.constant 0 : index
    %56 = vector.load %arg15[%c0_38, %c0_39] : memref<1x128xf32, #tpu.memory_space<vmem>>, vector<1x128xf32>
    %57 = arith.truncf %54 : vector<8x128xf32> to vector<8x128xbf16>
    %cst_40 = arith.constant dense<0.000000e+00> : vector<8x128xf32>
    %58 = tpu.matmul %57, %55, %cst_40 {dimension_numbers = #tpu.dot_dimension_numbers<[1], [0], [0], [1], [0, 0, 1, 1], [], []>} : vector<8x128xbf16>, vector<128x128xbf16>, vector<8x128xf32> -> vector<8x128xf32>
    %59 = vector.broadcast %56 : vector<1x128xf32> to vector<8x128xf32>
    %60 = arith.addf %58, %59 : vector<8x128xf32>
    %cst_41 = arith.constant 0.00999999977 : f32
    %61 = vector.broadcast %cst_41 : f32 to vector<8x128xf32>
    %62 = arith.mulf %61, %60 : vector<8x128xf32>
    %63 = arith.maximumf %60, %62 : vector<8x128xf32>
    %c0_42 = arith.constant 0 : index
    %c0_43 = arith.constant 0 : index
    %64 = vector.load %arg16[%c0_42, %c0_43] : memref<128x128xbf16, #tpu.memory_space<vmem>>, vector<128x128xbf16>
    %c0_44 = arith.constant 0 : index
    %c0_45 = arith.constant 0 : index
    %65 = vector.load %arg17[%c0_44, %c0_45] : memref<1x128xf32, #tpu.memory_space<vmem>>, vector<1x128xf32>
    %66 = arith.truncf %63 : vector<8x128xf32> to vector<8x128xbf16>
    %cst_46 = arith.constant dense<0.000000e+00> : vector<8x128xf32>
    %67 = tpu.matmul %66, %64, %cst_46 {dimension_numbers = #tpu.dot_dimension_numbers<[1], [0], [0], [1], [0, 0, 1, 1], [], []>} : vector<8x128xbf16>, vector<128x128xbf16>, vector<8x128xf32> -> vector<8x128xf32>
    %68 = vector.broadcast %65 : vector<1x128xf32> to vector<8x128xf32>
    %69 = arith.addf %67, %68 : vector<8x128xf32>
    %cst_47 = arith.constant 0.000000e+00 : f32
    %70 = vector.broadcast %cst_47 : f32 to vector<8x128xf32>
    %71 = arith.subf %70, %69 : vector<8x128xf32>
    %72 = math.exp %71 : vector<8x128xf32>
    %cst_48 = arith.constant 1.000000e+00 : f32
    %73 = vector.broadcast %cst_48 : f32 to vector<8x128xf32>
    %74 = arith.addf %73, %72 : vector<8x128xf32>
    %cst_49 = arith.constant 1.000000e+00 : f32
    %75 = vector.broadcast %cst_49 : f32 to vector<8x128xf32>
    %76 = arith.divf %75, %74 : vector<8x128xf32>
    %c0_50 = arith.constant 0 : index
    %c0_51 = arith.constant 0 : index
    %77 = vector.load %arg18[%c0_50, %c0_51] : memref<8x128xf32, #tpu.memory_space<vmem>>, vector<8x128xf32>
    tpu.vector_store %arg18[%c0_50, %c0_51], %76 {strides = array<i32>} : memref<8x128xf32, #tpu.memory_space<vmem>>, vector<8x128xf32>,
    return
  }
  func.func @transform_0(%arg0: i32) -> (i32, i32) {
    %c0_i32 = arith.constant 0 : i32
    %c0_i32_0 = arith.constant 0 : i32
    return %arg0, %c0_i32 : i32, i32
  }
  func.func @transform_1(%arg0: i32) -> (i32, i32) {
    %c0_i32 = arith.constant 0 : i32
    %c0_i32_0 = arith.constant 0 : i32
    %c0_i32_1 = arith.constant 0 : i32
    return %c0_i32, %c0_i32_0 : i32, i32
  }
  func.func @transform_2(%arg0: i32) -> (i32, i32) {
    %c0_i32 = arith.constant 0 : i32
    %c0_i32_0 = arith.constant 0 : i32
    %c0_i32_1 = arith.constant 0 : i32
    return %c0_i32, %c0_i32_0 : i32, i32
  }
  func.func @transform_3(%arg0: i32) -> (i32, i32) {
    %c0_i32 = arith.constant 0 : i32
    %c0_i32_0 = arith.constant 0 : i32
    %c0_i32_1 = arith.constant 0 : i32
    return %c0_i32, %c0_i32_0 : i32, i32
  }
  func.func @transform_4(%arg0: i32) -> (i32, i32) {
    %c0_i32 = arith.constant 0 : i32
    %c0_i32_0 = arith.constant 0 : i32
    %c0_i32_1 = arith.constant 0 : i32
    return %c0_i32, %c0_i32_0 : i32, i32
  }
  func.func @transform_5(%arg0: i32) -> (i32, i32) {
    %c0_i32 = arith.constant 0 : i32
    %c0_i32_0 = arith.constant 0 : i32
    %c0_i32_1 = arith.constant 0 : i32
    return %c0_i32, %c0_i32_0 : i32, i32
  }
  func.func @transform_6(%arg0: i32) -> (i32, i32) {
    %c0_i32 = arith.constant 0 : i32
    %c0_i32_0 = arith.constant 0 : i32
    %c0_i32_1 = arith.constant 0 : i32
    return %c0_i32, %c0_i32_0 : i32, i32
  }
  func.func @transform_7(%arg0: i32) -> (i32, i32) {
    %c0_i32 = arith.constant 0 : i32
    %c0_i32_0 = arith.constant 0 : i32
    %c0_i32_1 = arith.constant 0 : i32
    return %c0_i32, %c0_i32_0 : i32, i32
  }
  func.func @transform_8(%arg0: i32) -> (i32, i32) {
    %c0_i32 = arith.constant 0 : i32
    %c0_i32_0 = arith.constant 0 : i32
    %c0_i32_1 = arith.constant 0 : i32
    return %c0_i32, %c0_i32_0 : i32, i32
  }
  func.func @transform_9(%arg0: i32) -> (i32, i32) {
    %c0_i32 = arith.constant 0 : i32
    %c0_i32_0 = arith.constant 0 : i32
    %c0_i32_1 = arith.constant 0 : i32
    return %c0_i32, %c0_i32_0 : i32, i32
  }
  func.func @transform_10(%arg0: i32) -> (i32, i32) {
    %c0_i32 = arith.constant 0 : i32
    %c0_i32_0 = arith.constant 0 : i32
    %c0_i32_1 = arith.constant 0 : i32
    return %c0_i32, %c0_i32_0 : i32, i32
  }
  func.func @transform_11(%arg0: i32) -> (i32, i32) {
    %c0_i32 = arith.constant 0 : i32
    %c0_i32_0 = arith.constant 0 : i32
    %c0_i32_1 = arith.constant 0 : i32
    return %c0_i32, %c0_i32_0 : i32, i32
  }
  func.func @transform_12(%arg0: i32) -> (i32, i32) {
    %c0_i32 = arith.constant 0 : i32
    %c0_i32_0 = arith.constant 0 : i32
    %c0_i32_1 = arith.constant 0 : i32
    return %c0_i32, %c0_i32_0 : i32, i32
  }
  func.func @transform_13(%arg0: i32) -> (i32, i32) {
    %c0_i32 = arith.constant 0 : i32
    %c0_i32_0 = arith.constant 0 : i32
    %c0_i32_1 = arith.constant 0 : i32
    return %c0_i32, %c0_i32_0 : i32, i32
  }
  func.func @transform_14(%arg0: i32) -> (i32, i32) {
    %c0_i32 = arith.constant 0 : i32
    %c0_i32_0 = arith.constant 0 : i32
    %c0_i32_1 = arith.constant 0 : i32
    return %c0_i32, %c0_i32_0 : i32, i32
  }
  func.func @transform_15(%arg0: i32) -> (i32, i32) {
    %c0_i32 = arith.constant 0 : i32
    %c0_i32_0 = arith.constant 0 : i32
    %c0_i32_1 = arith.constant 0 : i32
    return %c0_i32, %c0_i32_0 : i32, i32
  }
  func.func @transform_16(%arg0: i32) -> (i32, i32) {
    %c0_i32 = arith.constant 0 : i32
    %c0_i32_0 = arith.constant 0 : i32
    %c0_i32_1 = arith.constant 0 : i32
    return %c0_i32, %c0_i32_0 : i32, i32
  }
  func.func @transform_17(%arg0: i32) -> (i32, i32) {
    %c0_i32 = arith.constant 0 : i32
    %c0_i32_0 = arith.constant 0 : i32
    return %arg0, %c0_i32 : i32, i32
  }
}

</mosaic_0001>

<llo_original>
// kernel: tpu_custom_call.1
$region0: #{tpu_custom_call.1}
  #allocation0 [shape = 'u32[]', space=smem, size = 0x4, offset = 0x4, fixed_abs, tag = 'smem constant byte address 0x4 - core index']
  #allocation1 [shape = 'u32[72,128]{1,0:T(1,128)}', space=vmem, size = 0x9000, scoped, tag = 'internal scratch']
  %s0 = inlined_call_operand.hbm [shape: f32[8,32], index: 0, kind: input, shape index: {}]
  %s1 = inlined_call_operand.hbm [shape: bf16[32,256], index: 1, kind: input, shape index: {}]
  %s2 = inlined_call_operand.hbm [shape: f32[1,256], index: 2, kind: input, shape index: {}]
  %s3 = inlined_call_operand.hbm [shape: bf16[256,512], index: 3, kind: input, shape index: {}]
  %s4 = inlined_call_operand.hbm [shape: f32[1,512], index: 4, kind: input, shape index: {}]
  %s5 = inlined_call_operand.hbm [shape: bf16[512,1024], index: 5, kind: input, shape index: {}]
  %s6 = inlined_call_operand.hbm [shape: f32[1,1024], index: 6, kind: input, shape index: {}]
  %s7 = inlined_call_operand.hbm [shape: bf16[1024,512], index: 7, kind: input, shape index: {}]
  %s8 = inlined_call_operand.vmem [shape: f32[1,512], index: 8, kind: input, shape index: {}]
  %s9 = inlined_call_operand.hbm [shape: bf16[512,256], index: 9, kind: input, shape index: {}]
  %s10 = inlined_call_operand.vmem [shape: f32[1,256], index: 10, kind: input, shape index: {}]
  %s11 = inlined_call_operand.hbm [shape: bf16[256,128], index: 11, kind: input, shape index: {}]
  %s12 = inlined_call_operand.vmem [shape: f32[1,128], index: 12, kind: input, shape index: {}]
  %s13 = inlined_call_operand.hbm [shape: bf16[128,128], index: 13, kind: input, shape index: {}]
  %s14 = inlined_call_operand.vmem [shape: f32[1,128], index: 14, kind: input, shape index: {}]
  %s15 = inlined_call_operand.hbm [shape: bf16[128,128], index: 15, kind: input, shape index: {}]
  %s16 = inlined_call_operand.vmem [shape: f32[1,128], index: 16, kind: input, shape index: {}]
  %s17 = inlined_call_operand.hbm [shape: f32[8,128], index: 17, kind: output, shape index: {}]
  %s18 = sld [smem:[#allocation0]]
  $region126: #{tpu_custom_call.1} parent=0
    _
  %s20 = ssub.s32 1, %s18
  %s21 = scalar_select 0, %s20, %s18
  $region1: #{tpu_custom_call.1} parent=0
    #allocation2 [shape = 'u8[4096]{0}', space=vmem, size = 0x1000, scoped, tag = 'input window, operand 0, single buffered']
    #allocation3 [shape = 's32[1]{0}', space=sflag, size = 0x4, scoped, tag = 'scoped memory for tpu_custom_call.1']
    #allocation4 [shape = 's32[1]{0}', space=sflag, size = 0x4, scoped, tag = 'scoped memory for tpu_custom_call.1']
    #allocation5 [shape = 'u8[16384]{0}', space=vmem, size = 0x4000, scoped, tag = 'input window, operand 1, single buffered']
    #allocation6 [shape = 's32[1]{0}', space=sflag, size = 0x4, scoped, tag = 'scoped memory for tpu_custom_call.1']
    #allocation7 [shape = 'u8[1024]{0}', space=vmem, size = 0x400, scoped, tag = 'input window, operand 2, single buffered']
    #allocation8 [shape = 'u8[262144]{0}', space=vmem, size = 0x40000, scoped, tag = 'input window, operand 3, single buffered']
    #allocation9 [shape = 's32[1]{0}', space=sflag, size = 0x4, scoped, tag = 'scoped memory for tpu_custom_call.1']
    #allocation10 [shape = 'u8[2048]{0}', space=vmem, size = 0x800, scoped, tag = 'input window, operand 4, single buffered']
    #allocation11 [shape = 'u8[1048576]{0}', space=vmem, size = 0x100000, scoped, tag = 'input window, operand 5, single buffered']
    #allocation12 [shape = 's32[1]{0}', space=sflag, size = 0x4, scoped, tag = 'scoped memory for tpu_custom_call.1']
    #allocation13 [shape = 'u8[4096]{0}', space=vmem, size = 0x1000, scoped, tag = 'input window, operand 6, single buffered']
    #allocation14 [shape = 'u8[1048576]{0}', space=vmem, size = 0x100000, scoped, tag = 'input window, operand 7, single buffered']
    #allocation15 [shape = 's32[1]{0}', space=sflag, size = 0x4, scoped, tag = 'scoped memory for tpu_custom_call.1']
    #allocation16 [shape = 'u8[262144]{0}', space=vmem, size = 0x40000, scoped, tag = 'input window, operand 9, single buffered']
    #allocation17 [shape = 'u8[65536]{0}', space=vmem, size = 0x10000, scoped, tag = 'input window, operand 11, single buffered']
    #allocation18 [shape = 's32[1]{0}', space=sflag, size = 0x4, scoped, tag = 'scoped memory for tpu_custom_call.1']
    #allocation19 [shape = 'u8[32768]{0}', space=vmem, size = 0x8000, scoped, tag = 'input window, operand 13, single buffered']
    #allocation20 [shape = 'u8[32768]{0}', space=vmem, size = 0x8000, scoped, tag = 'input window, operand 15, single buffered']
    #allocation21 [shape = 's32[1]{0}', space=sflag, size = 0x4, scoped, tag = 'scoped memory for tpu_custom_call.1']
    #allocation22 [shape = 'u8[4096]{0}', space=vmem, size = 0x1000, scoped, tag = 'output window, operand 0, single buffered']
    %22 = vsyncpa [#allocation3], 0
    %23 = vsyncpa [#allocation6], 0
    %24 = vsyncpa [#allocation9], 0
    %25 = vsyncpa [#allocation12], 0
    %26 = vsyncpa [#allocation15], 0
    %27 = vsyncpa [#allocation18], 0
    %28 = vsyncpa [#allocation21], 0
    %29 = vsyncpa [#allocation4], 0
    // Predicated region
    $region2: #{tpu_custom_call.1} parent=1 // pred_check
      _
    $region3: #{tpu_custom_call.1} parent=1 // pred_check_branch
      %31 = sbr.rel (0) target = $region5
    $region4: #{tpu_custom_call.1} parent=1 // pred_region
      %33 = vsyncadd [#allocation3], 0
      %s35 = sshll.u32 %s0, 4
      %s36 = int_to_ptr.hbm [resolvable:$true] %s35
      %s37 = sshll.u32 [#allocation2], 4
      %s38 = int_to_ptr.vmem [resolvable:$true] %s37
      %40 = dma.hbm_to_vmem [thread:$0]  %s36, 128, %s38, [#allocation3]
    $region5: #{tpu_custom_call.1} parent=1 // pred_fallthru
      _
    // Predicated region
    $region6: #{tpu_custom_call.1} parent=1 // pred_check
      _
    $region7: #{tpu_custom_call.1} parent=1 // pred_check_branch
      %42 = sbr.rel (0) target = $region9
    $region8: #{tpu_custom_call.1} parent=1 // pred_region
      %44 = vsyncadd [#allocation6], 0
      %s45 = sshll.u32 %s1, 4
      %s46 = int_to_ptr.hbm [resolvable:$true] %s45
      %s47 = sshll.u32 [#allocation5], 4
      %s48 = int_to_ptr.vmem [resolvable:$true] %s47
      %53 = dma.hbm_to_vmem [thread:$0]  %s46, 512, %s48, [#allocation6], 128, 128, 8
    $region9: #{tpu_custom_call.1} parent=1 // pred_fallthru
      _
    // Predicated region
    $region10: #{tpu_custom_call.1} parent=1 // pred_check
      _
    $region11: #{tpu_custom_call.1} parent=1 // pred_check_branch
      %55 = sbr.rel (0) target = $region13
    $region12: #{tpu_custom_call.1} parent=1 // pred_region
      %57 = vsyncadd [#allocation6], 0
      %s59 = sshll.u32 %s2, 4
      %s60 = int_to_ptr.hbm [resolvable:$true] %s59
      %s61 = sshll.u32 [#allocation7], 4
      %s62 = int_to_ptr.vmem [resolvable:$true] %s61
      %64 = dma.hbm_to_vmem [thread:$0]  %s60, 32, %s62, [#allocation6]
    $region13: #{tpu_custom_call.1} parent=1 // pred_fallthru
      _
    // Predicated region
    $region14: #{tpu_custom_call.1} parent=1 // pred_check
      _
    $region15: #{tpu_custom_call.1} parent=1 // pred_check_branch
      %66 = sbr.rel (0) target = $region17
    $region16: #{tpu_custom_call.1} parent=1 // pred_region
      %68 = vsyncadd [#allocation9], 0
      %s69 = sshll.u32 %s3, 4
      %s70 = int_to_ptr.hbm [resolvable:$true] %s69
      %s71 = sshll.u32 [#allocation8], 4
      %s72 = int_to_ptr.vmem [resolvable:$true] %s71
      %77 = dma.hbm_to_vmem [thread:$0]  %s70, 8192, %s72, [#allocation9], 256, 256, 16
    $region17: #{tpu_custom_call.1} parent=1 // pred_fallthru
      _
    // Predicated region
    $region18: #{tpu_custom_call.1} parent=1 // pred_check
      _
    $region19: #{tpu_custom_call.1} parent=1 // pred_check_branch
      %79 = sbr.rel (0) target = $region21
    $region20: #{tpu_custom_call.1} parent=1 // pred_region
      %81 = vsyncadd [#allocation9], 0
      %s83 = sshll.u32 %s4, 4
      %s84 = int_to_ptr.hbm [resolvable:$true] %s83
      %s85 = sshll.u32 [#allocation10], 4
      %s86 = int_to_ptr.vmem [resolvable:$true] %s85
      %88 = dma.hbm_to_vmem [thread:$0]  %s84, 64, %s86, [#allocation9]
    $region21: #{tpu_custom_call.1} parent=1 // pred_fallthru
      _
    // Predicated region
    $region22: #{tpu_custom_call.1} parent=1 // pred_check
      _
    $region23: #{tpu_custom_call.1} parent=1 // pred_check_branch
      %90 = sbr.rel (0) target = $region25
    $region24: #{tpu_custom_call.1} parent=1 // pred_region
      %92 = vsyncadd [#allocation12], 0
      %s93 = sshll.u32 %s5, 4
      %s94 = int_to_ptr.hbm [resolvable:$true] %s93
      %s95 = sshll.u32 [#allocation11], 4
      %s96 = int_to_ptr.vmem [resolvable:$true] %s95
      %101 = dma.hbm_to_vmem [thread:$0]  %s94, 32768, %s96, [#allocation12], 512, 512, 32
    $region25: #{tpu_custom_call.1} parent=1 // pred_fallthru
      _
    // Predicated region
    $region26: #{tpu_custom_call.1} parent=1 // pred_check
      _
    $region27: #{tpu_custom_call.1} parent=1 // pred_check_branch
      %103 = sbr.rel (0) target = $region29
    $region28: #{tpu_custom_call.1} parent=1 // pred_region
      %105 = vsyncadd [#allocation12], 0
      %s107 = sshll.u32 %s6, 4
      %s108 = int_to_ptr.hbm [resolvable:$true] %s107
      %s109 = sshll.u32 [#allocation13], 4
      %s110 = int_to_ptr.vmem [resolvable:$true] %s109
      %112 = dma.hbm_to_vmem [thread:$0]  %s108, 128, %s110, [#allocation12]
    $region29: #{tpu_custom_call.1} parent=1 // pred_fallthru
      _
    // Predicated region
    $region30: #{tpu_custom_call.1} parent=1 // pred_check
      _
    $region31: #{tpu_custom_call.1} parent=1 // pred_check_branch
      %114 = sbr.rel (0) target = $region33
    $region32: #{tpu_custom_call.1} parent=1 // pred_region
      %116 = vsyncadd [#allocation15], 0
      %s117 = sshll.u32 %s7, 4
      %s118 = int_to_ptr.hbm [resolvable:$true] %s117
      %s119 = sshll.u32 [#allocation14], 4
      %s120 = int_to_ptr.vmem [resolvable:$true] %s119
      %125 = dma.hbm_to_vmem [thread:$0]  %s118, 32768, %s120, [#allocation15], 256, 256, 16
    $region33: #{tpu_custom_call.1} parent=1 // pred_fallthru
      _
    // Predicated region
    $region34: #{tpu_custom_call.1} parent=1 // pred_check
      _
    $region35: #{tpu_custom_call.1} parent=1 // pred_check_branch
      %127 = sbr.rel (0) target = $region37
    $region36: #{tpu_custom_call.1} parent=1 // pred_region
      _
    $region37: #{tpu_custom_call.1} parent=1 // pred_fallthru
      _
    // Predicated region
    $region38: #{tpu_custom_call.1} parent=1 // pred_check
      _
    $region39: #{tpu_custom_call.1} parent=1 // pred_check_branch
      %129 = sbr.rel (0) target = $region41
    $region40: #{tpu_custom_call.1} parent=1 // pred_region
      %131 = vsyncadd [#allocation15], 0
      %s132 = sshll.u32 %s9, 4
      %s133 = int_to_ptr.hbm [resolvable:$true] %s132
      %s134 = sshll.u32 [#allocation16], 4
      %s135 = int_to_ptr.vmem [resolvable:$true] %s134
      %140 = dma.hbm_to_vmem [thread:$0]  %s133, 8192, %s135, [#allocation15], 128, 128, 8
    $region41: #{tpu_custom_call.1} parent=1 // pred_fallthru
      _
    // Predicated region
    $region42: #{tpu_custom_call.1} parent=1 // pred_check
      _
    $region43: #{tpu_custom_call.1} parent=1 // pred_check_branch
      %142 = sbr.rel (0) target = $region45
    $region44: #{tpu_custom_call.1} parent=1 // pred_region
      _
    $region45: #{tpu_custom_call.1} parent=1 // pred_fallthru
      _
    // Predicated region
    $region46: #{tpu_custom_call.1} parent=1 // pred_check
      _
    $region47: #{tpu_custom_call.1} parent=1 // pred_check_branch
      %144 = sbr.rel (0) target = $region49
    $region48: #{tpu_custom_call.1} parent=1 // pred_region
      %146 = vsyncadd [#allocation18], 0
      %s147 = sshll.u32 %s11, 4
      %s148 = int_to_ptr.hbm [resolvable:$true] %s147
      %s149 = sshll.u32 [#allocation17], 4
      %s150 = int_to_ptr.vmem [resolvable:$true] %s149
      %155 = dma.hbm_to_vmem [thread:$0]  %s148, 2048, %s150, [#allocation18], 64, 64, 4
    $region49: #{tpu_custom_call.1} parent=1 // pred_fallthru
      _
    // Predicated region
    $region50: #{tpu_custom_call.1} parent=1 // pred_check
      _
    $region51: #{tpu_custom_call.1} parent=1 // pred_check_branch
      %157 = sbr.rel (0) target = $region53
    $region52: #{tpu_custom_call.1} parent=1 // pred_region
      _
    $region53: #{tpu_custom_call.1} parent=1 // pred_fallthru
      _
    // Predicated region
    $region54: #{tpu_custom_call.1} parent=1 // pred_check
      _
    $region55: #{tpu_custom_call.1} parent=1 // pred_check_branch
      %159 = sbr.rel (0) target = $region57
    $region56: #{tpu_custom_call.1} parent=1 // pred_region
      %161 = vsyncadd [#allocation18], 0
      %s162 = sshll.u32 %s13, 4
      %s163 = int_to_ptr.hbm [resolvable:$true] %s162
      %s164 = sshll.u32 [#allocation19], 4
      %s165 = int_to_ptr.vmem [resolvable:$true] %s164
      %170 = dma.hbm_to_vmem [thread:$0]  %s163, 1024, %s165, [#allocation18], 64, 64, 4
    $region57: #{tpu_custom_call.1} parent=1 // pred_fallthru
      _
    // Predicated region
    $region58: #{tpu_custom_call.1} parent=1 // pred_check
      _
    $region59: #{tpu_custom_call.1} parent=1 // pred_check_branch
      %172 = sbr.rel (0) target = $region61
    $region60: #{tpu_custom_call.1} parent=1 // pred_region
      _
    $region61: #{tpu_custom_call.1} parent=1 // pred_fallthru
      _
    // Predicated region
    $region62: #{tpu_custom_call.1} parent=1 // pred_check
      _
    $region63: #{tpu_custom_call.1} parent=1 // pred_check_branch
      %174 = sbr.rel (0) target = $region65
    $region64: #{tpu_custom_call.1} parent=1 // pred_region
      %176 = vsyncadd [#allocation21], 0
      %s177 = sshll.u32 %s15, 4
      %s178 = int_to_ptr.hbm [resolvable:$true] %s177
      %s179 = sshll.u32 [#allocation20], 4
      %s180 = int_to_ptr.vmem [resolvable:$true] %s179
      %185 = dma.hbm_to_vmem [thread:$0]  %s178, 1024, %s180, [#allocation21], 64, 64, 4
    $region65: #{tpu_custom_call.1} parent=1 // pred_fallthru
      _
    // Predicated region
    $region66: #{tpu_custom_call.1} parent=1 // pred_check
      _
    $region67: #{tpu_custom_call.1} parent=1 // pred_check_branch
      %187 = sbr.rel (0) target = $region69
    $region68: #{tpu_custom_call.1} parent=1 // pred_region
      _
    $region69: #{tpu_custom_call.1} parent=1 // pred_fallthru
      _
    // Predicated region
    $region70: #{tpu_custom_call.1} parent=1 // pred_check
      _
    $region71: #{tpu_custom_call.1} parent=1 // pred_check_branch
      %189 = sbr.rel (0) target = $region73
    $region72: #{tpu_custom_call.1} parent=1 // pred_region
      %191 = dma.done [#allocation3], 128
    $region73: #{tpu_custom_call.1} parent=1 // pred_fallthru
      _
    // Predicated region
    $region74: #{tpu_custom_call.1} parent=1 // pred_check
      _
    $region75: #{tpu_custom_call.1} parent=1 // pred_check_branch
      %193 = sbr.rel (0) target = $region77
    $region76: #{tpu_custom_call.1} parent=1 // pred_region
      %195 = dma.done [#allocation6], 512
    $region77: #{tpu_custom_call.1} parent=1 // pred_fallthru
      _
    // Predicated region
    $region78: #{tpu_custom_call.1} parent=1 // pred_check
      _
    $region79: #{tpu_custom_call.1} parent=1 // pred_check_branch
      %197 = sbr.rel (0) target = $region81
    $region80: #{tpu_custom_call.1} parent=1 // pred_region
      %199 = dma.done [#allocation6], 32
    $region81: #{tpu_custom_call.1} parent=1 // pred_fallthru
      _
    // Predicated region
    $region82: #{tpu_custom_call.1} parent=1 // pred_check
      _
    $region83: #{tpu_custom_call.1} parent=1 // pred_check_branch
      %201 = sbr.rel (0) target = $region85
    $region84: #{tpu_custom_call.1} parent=1 // pred_region
      %203 = dma.done [#allocation9], 8192
    $region85: #{tpu_custom_call.1} parent=1 // pred_fallthru
      _
    // Predicated region
    $region86: #{tpu_custom_call.1} parent=1 // pred_check
      _
    $region87: #{tpu_custom_call.1} parent=1 // pred_check_branch
      %205 = sbr.rel (0) target = $region89
    $region88: #{tpu_custom_call.1} parent=1 // pred_region
      %207 = dma.done [#allocation9], 64
    $region89: #{tpu_custom_call.1} parent=1 // pred_fallthru
      _
    // Predicated region
    $region90: #{tpu_custom_call.1} parent=1 // pred_check
      _
    $region91: #{tpu_custom_call.1} parent=1 // pred_check_branch
      %209 = sbr.rel (0) target = $region93
    $region92: #{tpu_custom_call.1} parent=1 // pred_region
      %211 = dma.done [#allocation12], 32768
    $region93: #{tpu_custom_call.1} parent=1 // pred_fallthru
      _
    // Predicated region
    $region94: #{tpu_custom_call.1} parent=1 // pred_check
      _
    $region95: #{tpu_custom_call.1} parent=1 // pred_check_branch
      %213 = sbr.rel (0) target = $region97
    $region96: #{tpu_custom_call.1} parent=1 // pred_region
      %215 = dma.done [#allocation12], 128
    $region97: #{tpu_custom_call.1} parent=1 // pred_fallthru
      _
    // Predicated region
    $region98: #{tpu_custom_call.1} parent=1 // pred_check
      _
    $region99: #{tpu_custom_call.1} parent=1 // pred_check_branch
      %217 = sbr.rel (0) target = $region101
    $region100: #{tpu_custom_call.1} parent=1 // pred_region
      %219 = dma.done [#allocation15], 32768
    $region101: #{tpu_custom_call.1} parent=1 // pred_fallthru
      _
    // Predicated region
    $region102: #{tpu_custom_call.1} parent=1 // pred_check
      _
    $region103: #{tpu_custom_call.1} parent=1 // pred_check_branch
      %221 = sbr.rel (0) target = $region105
    $region104: #{tpu_custom_call.1} parent=1 // pred_region
      %223 = dma.done [#allocation15], 8192
    $region105: #{tpu_custom_call.1} parent=1 // pred_fallthru
      _
    // Predicated region
    $region106: #{tpu_custom_call.1} parent=1 // pred_check
      _
    $region107: #{tpu_custom_call.1} parent=1 // pred_check_branch
      %225 = sbr.rel (0) target = $region109
    $region108: #{tpu_custom_call.1} parent=1 // pred_region
      %227 = dma.done [#allocation18], 2048
    $region109: #{tpu_custom_call.1} parent=1 // pred_fallthru
      _
    // Predicated region
    $region110: #{tpu_custom_call.1} parent=1 // pred_check
      _
    $region111: #{tpu_custom_call.1} parent=1 // pred_check_branch
      %229 = sbr.rel (0) target = $region113
    $region112: #{tpu_custom_call.1} parent=1 // pred_region
      %231 = dma.done [#allocation18], 1024
    $region113: #{tpu_custom_call.1} parent=1 // pred_fallthru
      _
    // Predicated region
    $region114: #{tpu_custom_call.1} parent=1 // pred_check
      _
    $region115: #{tpu_custom_call.1} parent=1 // pred_check_branch
      %233 = sbr.rel (0) target = $region117
    $region116: #{tpu_custom_call.1} parent=1 // pred_region
      %235 = dma.done [#allocation21], 1024
    $region117: #{tpu_custom_call.1} parent=1 // pred_fallthru
      _
    %v237 = vld [vmem:[#allocation2] sm:$0xff]
    %v238 = vld [vmem:[#allocation5] sm:$0xff]
    %v239 = vld [vmem:[#allocation5 + $0x8] sm:$0xff]
    %v240 = vld [vmem:[#allocation5 + $0x10] sm:$0xff]
    %v241 = vld [vmem:[#allocation5 + $0x18] sm:$0xff]
    %v242 = vld [vmem:[#allocation7] sm:$0x3]
    %v243 = vpack.c.bf16 %v237, %v237
    %v245 = vperm.slane %v242, 0
    %v246 = vperm.slane %v242, 1
    %v253 = vunpack.c.l.b16 %v238
    %v254 = vunpack.c.h.b16 %v238
    %v255 = vunpack.c.l.b16 %v239
    %v256 = vunpack.c.h.b16 %v239
    %v257 = vunpack.c.l.b16 %v240
    %v258 = vunpack.c.h.b16 %v240
    %v259 = vunpack.c.l.b16 %v241
    %v260 = vunpack.c.h.b16 %v241
    %v261 = vpack.c.b16 %v255, %v253
    %v262 = vpack.c.b16 %v256, %v254
    %v263 = vpack.c.b16 %v259, %v257
    %v264 = vpack.c.b16 %v260, %v258
    %vm269 = vcmask 261120
    %v271 = vsel %vm269, %v243, 0
    %273 = vmatpush.bf16.msra.mxu0 0
    %274 = vmatpush.bf16.msra.mxu0 0
    %275 = vmatpush.bf16.msra.mxu0 0
    %276 = vmatpush.bf16.msra.mxu0 0
    %277 = vmatpush.bf16.msra.mxu0 0
    %278 = vmatpush.bf16.msra.mxu0 0
    %279 = vmatpush.bf16.msra.mxu0 %v263
    %280 = vmatpush.bf16.msra.mxu0 %v261
    %281 = vmatmul.bf16.gmra.mxu0 %v271
    %v282 = vpop.f32.mrf.mxu0
    %v283 = vadd.f32 %v245, %v282
    %v284 = vpop.f32.mrf.mxu0
    %285 = vdwg.mxu0
    %286 = vmatpush.bf16.msra.mxu0 0
    %287 = vmatpush.bf16.msra.mxu0 0
    %288 = vmatpush.bf16.msra.mxu0 0
    %289 = vmatpush.bf16.msra.mxu0 0
    %290 = vmatpush.bf16.msra.mxu0 0
    %291 = vmatpush.bf16.msra.mxu0 0
    %292 = vmatpush.bf16.msra.mxu0 %v264
    %293 = vmatpush.bf16.msra.mxu0 %v262
    %294 = vmatmul.bf16.gmra.mxu0 %v271
    %v295 = vpop.f32.mrf.mxu0
    %v296 = vadd.f32 %v246, %v295
    %v297 = vpop.f32.mrf.mxu0
    %298 = vdwg.mxu0
    %v299 = vmul.f32 %v283, 0.01
    %v300 = vmul.f32 %v296, 0.01
    %v301 = vmax.f32 %v283, %v299
    %v302 = vmax.f32 %v296, %v300
    %v303 = vld [vmem:[#allocation8] sm:$0xff]
    %v304 = vld [vmem:[#allocation8 + $0x8] sm:$0xff]
    %v305 = vld [vmem:[#allocation8 + $0x10] sm:$0xff]
    %v306 = vld [vmem:[#allocation8 + $0x18] sm:$0xff]
    %v307 = vld [vmem:[#allocation8 + $0x20] sm:$0xff]
    %v308 = vld [vmem:[#allocation8 + $0x28] sm:$0xff]
    %v309 = vld [vmem:[#allocation8 + $0x30] sm:$0xff]
    %v310 = vld [vmem:[#allocation8 + $0x38] sm:$0xff]
    %v311 = vld [vmem:[#allocation8 + $0x40] sm:$0xff]
    %v312 = vld [vmem:[#allocation8 + $0x48] sm:$0xff]
    %v313 = vld [vmem:[#allocation8 + $0x50] sm:$0xff]
    %v314 = vld [vmem:[#allocation8 + $0x58] sm:$0xff]
    %v315 = vld [vmem:[#allocation8 + $0x60] sm:$0xff]
    %v316 = vld [vmem:[#allocation8 + $0x68] sm:$0xff]
    %v317 = vld [vmem:[#allocation8 + $0x70] sm:$0xff]
    %v318 = vld [vmem:[#allocation8 + $0x78] sm:$0xff]
    %v319 = vld [vmem:[#allocation8 + $0x80] sm:$0xff]
    %v320 = vld [vmem:[#allocation8 + $0x88] sm:$0xff]
    %v321 = vld [vmem:[#allocation8 + $0x90] sm:$0xff]
    %v322 = vld [vmem:[#allocation8 + $0x98] sm:$0xff]
    %v323 = vld [vmem:[#allocation8 + $0xa0] sm:$0xff]
    %v324 = vld [vmem:[#allocation8 + $0xa8] sm:$0xff]
    %v325 = vld [vmem:[#allocation8 + $0xb0] sm:$0xff]
    %v326 = vld [vmem:[#allocation8 + $0xb8] sm:$0xff]
    %v327 = vld [vmem:[#allocation8 + $0xc0] sm:$0xff]
    %v328 = vld [vmem:[#allocation8 + $0xc8] sm:$0xff]
    %v329 = vld [vmem:[#allocation8 + $0xd0] sm:$0xff]
    %v330 = vld [vmem:[#allocation8 + $0xd8] sm:$0xff]
    %v331 = vld [vmem:[#allocation8 + $0xe0] sm:$0xff]
    %v332 = vld [vmem:[#allocation8 + $0xe8] sm:$0xff]
    %v333 = vld [vmem:[#allocation8 + $0xf0] sm:$0xff]
    %v334 = vld [vmem:[#allocation8 + $0xf8] sm:$0xff]
    %v335 = vld [vmem:[#allocation8 + $0x100] sm:$0xff]
    %v336 = vld [vmem:[#allocation8 + $0x108] sm:$0xff]
    %v337 = vld [vmem:[#allocation8 + $0x110] sm:$0xff]
    %v338 = vld [vmem:[#allocation8 + $0x118] sm:$0xff]
    %v339 = vld [vmem:[#allocation8 + $0x120] sm:$0xff]
    %v340 = vld [vmem:[#allocation8 + $0x128] sm:$0xff]
    %v341 = vld [vmem:[#allocation8 + $0x130] sm:$0xff]
    %v342 = vld [vmem:[#allocation8 + $0x138] sm:$0xff]
    %v343 = vld [vmem:[#allocation8 + $0x140] sm:$0xff]
    %v344 = vld [vmem:[#allocation8 + $0x148] sm:$0xff]
    %v345 = vld [vmem:[#allocation8 + $0x150] sm:$0xff]
    %v346 = vld [vmem:[#allocation8 + $0x158] sm:$0xff]
    %v347 = vld [vmem:[#allocation8 + $0x160] sm:$0xff]
    %v348 = vld [vmem:[#allocation8 + $0x168] sm:$0xff]
    %v349 = vld [vmem:[#allocation8 + $0x170] sm:$0xff]
    %v350 = vld [vmem:[#allocation8 + $0x178] sm:$0xff]
    %v351 = vld [vmem:[#allocation8 + $0x180] sm:$0xff]
    %v352 = vld [vmem:[#allocation8 + $0x188] sm:$0xff]
    %v353 = vld [vmem:[#allocation8 + $0x190] sm:$0xff]
    %v354 = vld [vmem:[#allocation8 + $0x198] sm:$0xff]
    %v355 = vld [vmem:[#allocation8 + $0x1a0] sm:$0xff]
    %v356 = vld [vmem:[#allocation8 + $0x1a8] sm:$0xff]
    %v357 = vld [vmem:[#allocation8 + $0x1b0] sm:$0xff]
    %v358 = vld [vmem:[#allocation8 + $0x1b8] sm:$0xff]
    %v359 = vld [vmem:[#allocation8 + $0x1c0] sm:$0xff]
    %v360 = vld [vmem:[#allocation8 + $0x1c8] sm:$0xff]
    %v361 = vld [vmem:[#allocation8 + $0x1d0] sm:$0xff]
    %v362 = vld [vmem:[#allocation8 + $0x1d8] sm:$0xff]
    %v363 = vld [vmem:[#allocation8 + $0x1e0] sm:$0xff]
    %v364 = vld [vmem:[#allocation8 + $0x1e8] sm:$0xff]
    %v365 = vld [vmem:[#allocation8 + $0x1f0] sm:$0xff]
    %v366 = vld [vmem:[#allocation8 + $0x1f8] sm:$0xff]
    %v367 = vld [vmem:[#allocation10] sm:$0xf]
    %v368 = vpack.c.bf16 %v301, %v301
    %v369 = vpack.c.bf16 %v302, %v302
    %v371 = vperm.slane %v367, 0
    %v372 = vperm.slane %v367, 1
    %v373 = vperm.slane %v367, 2
    %v374 = vperm.slane %v367, 3
    %v443 = vunpack.c.l.b16 %v303
    %v444 = vunpack.c.h.b16 %v303
    %v445 = vunpack.c.l.b16 %v304
    %v446 = vunpack.c.h.b16 %v304
    %v447 = vunpack.c.l.b16 %v305
    %v448 = vunpack.c.h.b16 %v305
    %v449 = vunpack.c.l.b16 %v306
    %v450 = vunpack.c.h.b16 %v306
    %v451 = vunpack.c.l.b16 %v307
    %v452 = vunpack.c.h.b16 %v307
    %v453 = vunpack.c.l.b16 %v308
    %v454 = vunpack.c.h.b16 %v308
    %v455 = vunpack.c.l.b16 %v309
    %v456 = vunpack.c.h.b16 %v309
    %v457 = vunpack.c.l.b16 %v310
    %v458 = vunpack.c.h.b16 %v310
    %v459 = vunpack.c.l.b16 %v311
    %v460 = vunpack.c.h.b16 %v311
    %v461 = vunpack.c.l.b16 %v312
    %v462 = vunpack.c.h.b16 %v312
    %v463 = vunpack.c.l.b16 %v313
    %v464 = vunpack.c.h.b16 %v313
    %v465 = vunpack.c.l.b16 %v314
    %v466 = vunpack.c.h.b16 %v314
    %v467 = vunpack.c.l.b16 %v315
    %v468 = vunpack.c.h.b16 %v315
    %v469 = vunpack.c.l.b16 %v316
    %v470 = vunpack.c.h.b16 %v316
    %v471 = vunpack.c.l.b16 %v317
    %v472 = vunpack.c.h.b16 %v317
    %v473 = vunpack.c.l.b16 %v318
    %v474 = vunpack.c.h.b16 %v318
    %v475 = vunpack.c.l.b16 %v319
    %v476 = vunpack.c.h.b16 %v319
    %v477 = vunpack.c.l.b16 %v320
    %v478 = vunpack.c.h.b16 %v320
    %v479 = vunpack.c.l.b16 %v321
    %v480 = vunpack.c.h.b16 %v321
    %v481 = vunpack.c.l.b16 %v322
    %v482 = vunpack.c.h.b16 %v322
    %v483 = vunpack.c.l.b16 %v323
    %v484 = vunpack.c.h.b16 %v323
    %v485 = vunpack.c.l.b16 %v324
    %v486 = vunpack.c.h.b16 %v324
    %v487 = vunpack.c.l.b16 %v325
    %v488 = vunpack.c.h.b16 %v325
    %v489 = vunpack.c.l.b16 %v326
    %v490 = vunpack.c.h.b16 %v326
    %v491 = vunpack.c.l.b16 %v327
    %v492 = vunpack.c.h.b16 %v327
    %v493 = vunpack.c.l.b16 %v328
    %v494 = vunpack.c.h.b16 %v328
    %v495 = vunpack.c.l.b16 %v329
    %v496 = vunpack.c.h.b16 %v329
    %v497 = vunpack.c.l.b16 %v330
    %v498 = vunpack.c.h.b16 %v330
    %v499 = vunpack.c.l.b16 %v331
    %v500 = vunpack.c.h.b16 %v331
    %v501 = vunpack.c.l.b16 %v332
    %v502 = vunpack.c.h.b16 %v332
    %v503 = vunpack.c.l.b16 %v333
    %v504 = vunpack.c.h.b16 %v333
    %v505 = vunpack.c.l.b16 %v334
    %v506 = vunpack.c.h.b16 %v334
    %v507 = vunpack.c.l.b16 %v335
    %v508 = vunpack.c.h.b16 %v335
    %v509 = vunpack.c.l.b16 %v336
    %v510 = vunpack.c.h.b16 %v336
    %v511 = vunpack.c.l.b16 %v337
    %v512 = vunpack.c.h.b16 %v337
    %v513 = vunpack.c.l.b16 %v338
    %v514 = vunpack.c.h.b16 %v338
    %v515 = vunpack.c.l.b16 %v339
    %v516 = vunpack.c.h.b16 %v339
    %v517 = vunpack.c.l.b16 %v340
    %v518 = vunpack.c.h.b16 %v340
    %v519 = vunpack.c.l.b16 %v341
    %v520 = vunpack.c.h.b16 %v341
    %v521 = vunpack.c.l.b16 %v342
    %v522 = vunpack.c.h.b16 %v342
    %v523 = vunpack.c.l.b16 %v343
    %v524 = vunpack.c.h.b16 %v343
    %v525 = vunpack.c.l.b16 %v344
    %v526 = vunpack.c.h.b16 %v344
    %v527 = vunpack.c.l.b16 %v345
    %v528 = vunpack.c.h.b16 %v345
    %v529 = vunpack.c.l.b16 %v346
    %v530 = vunpack.c.h.b16 %v346
    %v531 = vunpack.c.l.b16 %v347
    %v532 = vunpack.c.h.b16 %v347
    %v533 = vunpack.c.l.b16 %v348
    %v534 = vunpack.c.h.b16 %v348
    %v535 = vunpack.c.l.b16 %v349
    %v536 = vunpack.c.h.b16 %v349
    %v537 = vunpack.c.l.b16 %v350
    %v538 = vunpack.c.h.b16 %v350
    %v539 = vunpack.c.l.b16 %v351
    %v540 = vunpack.c.h.b16 %v351
    %v541 = vunpack.c.l.b16 %v352
    %v542 = vunpack.c.h.b16 %v352
    %v543 = vunpack.c.l.b16 %v353
    %v544 = vunpack.c.h.b16 %v353
    %v545 = vunpack.c.l.b16 %v354
    %v546 = vunpack.c.h.b16 %v354
    %v547 = vunpack.c.l.b16 %v355
    %v548 = vunpack.c.h.b16 %v355
    %v549 = vunpack.c.l.b16 %v356
    %v550 = vunpack.c.h.b16 %v356
    %v551 = vunpack.c.l.b16 %v357
    %v552 = vunpack.c.h.b16 %v357
    %v553 = vunpack.c.l.b16 %v358
    %v554 = vunpack.c.h.b16 %v358
    %v555 = vunpack.c.l.b16 %v359
    %v556 = vunpack.c.h.b16 %v359
    %v557 = vunpack.c.l.b16 %v360
    %v558 = vunpack.c.h.b16 %v360
    %v559 = vunpack.c.l.b16 %v361
    %v560 = vunpack.c.h.b16 %v361
    %v561 = vunpack.c.l.b16 %v362
    %v562 = vunpack.c.h.b16 %v362
    %v563 = vunpack.c.l.b16 %v363
    %v564 = vunpack.c.h.b16 %v363
    %v565 = vunpack.c.l.b16 %v364
    %v566 = vunpack.c.h.b16 %v364
    %v567 = vunpack.c.l.b16 %v365
    %v568 = vunpack.c.h.b16 %v365
    %v569 = vunpack.c.l.b16 %v366
    %v570 = vunpack.c.h.b16 %v366
    %v571 = vpack.c.b16 %v447, %v443
    %v572 = vpack.c.b16 %v448, %v444
    %v573 = vpack.c.b16 %v449, %v445
    %v574 = vpack.c.b16 %v450, %v446
    %v575 = vpack.c.b16 %v455, %v451
    %v576 = vpack.c.b16 %v456, %v452
    %v577 = vpack.c.b16 %v457, %v453
    %v578 = vpack.c.b16 %v458, %v454
    %v579 = vpack.c.b16 %v463, %v459
    %v580 = vpack.c.b16 %v464, %v460
    %v581 = vpack.c.b16 %v465, %v461
    %v582 = vpack.c.b16 %v466, %v462
    %v583 = vpack.c.b16 %v471, %v467
    %v584 = vpack.c.b16 %v472, %v468
    %v585 = vpack.c.b16 %v473, %v469
    %v586 = vpack.c.b16 %v474, %v470
    %v587 = vpack.c.b16 %v479, %v475
    %v588 = vpack.c.b16 %v480, %v476
    %v589 = vpack.c.b16 %v481, %v477
    %v590 = vpack.c.b16 %v482, %v478
    %v591 = vpack.c.b16 %v487, %v483
    %v592 = vpack.c.b16 %v488, %v484
    %v593 = vpack.c.b16 %v489, %v485
    %v594 = vpack.c.b16 %v490, %v486
    %v595 = vpack.c.b16 %v495, %v491
    %v596 = vpack.c.b16 %v496, %v492
    %v597 = vpack.c.b16 %v497, %v493
    %v598 = vpack.c.b16 %v498, %v494
    %v599 = vpack.c.b16 %v503, %v499
    %v600 = vpack.c.b16 %v504, %v500
    %v601 = vpack.c.b16 %v505, %v501
    %v602 = vpack.c.b16 %v506, %v502
    %v603 = vpack.c.b16 %v511, %v507
    %v604 = vpack.c.b16 %v512, %v508
    %v605 = vpack.c.b16 %v513, %v509
    %v606 = vpack.c.b16 %v514, %v510
    %v607 = vpack.c.b16 %v519, %v515
    %v608 = vpack.c.b16 %v520, %v516
    %v609 = vpack.c.b16 %v521, %v517
    %v610 = vpack.c.b16 %v522, %v518
    %v611 = vpack.c.b16 %v527, %v523
    %v612 = vpack.c.b16 %v528, %v524
    %v613 = vpack.c.b16 %v529, %v525
    %v614 = vpack.c.b16 %v530, %v526
    %v615 = vpack.c.b16 %v535, %v531
    %v616 = vpack.c.b16 %v536, %v532
    %v617 = vpack.c.b16 %v537, %v533
    %v618 = vpack.c.b16 %v538, %v534
    %v619 = vpack.c.b16 %v543, %v539
    %v620 = vpack.c.b16 %v544, %v540
    %v621 = vpack.c.b16 %v545, %v541
    %v622 = vpack.c.b16 %v546, %v542
    %v623 = vpack.c.b16 %v551, %v547
    %v624 = vpack.c.b16 %v552, %v548
    %v625 = vpack.c.b16 %v553, %v549
    %v626 = vpack.c.b16 %v554, %v550
    %v627 = vpack.c.b16 %v559, %v555
    %v628 = vpack.c.b16 %v560, %v556
    %v629 = vpack.c.b16 %v561, %v557
    %v630 = vpack.c.b16 %v562, %v558
    %v631 = vpack.c.b16 %v567, %v563
    %v632 = vpack.c.b16 %v568, %v564
    %v633 = vpack.c.b16 %v569, %v565
    %v634 = vpack.c.b16 %v570, %v566
    %699 = vmatpush.bf16.msra.mxu0 %v599
    %700 = vmatpush.bf16.msra.mxu0 %v595
    %701 = vmatpush.bf16.msra.mxu0 %v591
    %702 = vmatpush.bf16.msra.mxu0 %v587
    %703 = vmatpush.bf16.msra.mxu0 %v583
    %704 = vmatpush.bf16.msra.mxu0 %v579
    %705 = vmatpush.bf16.msra.mxu0 %v575
    %706 = vmatpush.bf16.msra.mxu0 %v571
    %707 = vmatmul.bf16.gmra.mxu0 %v368
    %v708 = vpop.f32.mrf.mxu0
    %v709 = vadd.f32 %v371, %v708
    %v710 = vpop.f32.mrf.mxu0
    %711 = vdwg.mxu0
    %712 = vmatpush.bf16.msra.mxu0 %v631
    %713 = vmatpush.bf16.msra.mxu0 %v627
    %714 = vmatpush.bf16.msra.mxu0 %v623
    %715 = vmatpush.bf16.msra.mxu0 %v619
    %716 = vmatpush.bf16.msra.mxu0 %v615
    %717 = vmatpush.bf16.msra.mxu0 %v611
    %718 = vmatpush.bf16.msra.mxu0 %v607
    %719 = vmatpush.bf16.msra.mxu0 %v603
    %720 = vmatmul.bf16.gmra.mxu0 %v369
    %v721 = vpop.f32.mrf.mxu0
    %v722 = vadd.f32 %v709, %v721
    %v723 = vpop.f32.mrf.mxu0
    %724 = vdwg.mxu0
    %725 = vmatpush.bf16.msra.mxu0 %v600
    %726 = vmatpush.bf16.msra.mxu0 %v596
    %727 = vmatpush.bf16.msra.mxu0 %v592
    %728 = vmatpush.bf16.msra.mxu0 %v588
    %729 = vmatpush.bf16.msra.mxu0 %v584
    %730 = vmatpush.bf16.msra.mxu0 %v580
    %731 = vmatpush.bf16.msra.mxu0 %v576
    %732 = vmatpush.bf16.msra.mxu0 %v572
    %733 = vmatmul.bf16.gmra.mxu0 %v368
    %v734 = vpop.f32.mrf.mxu0
    %v735 = vadd.f32 %v372, %v734
    %v736 = vpop.f32.mrf.mxu0
    %737 = vdwg.mxu0
    %738 = vmatpush.bf16.msra.mxu0 %v632
    %739 = vmatpush.bf16.msra.mxu0 %v628
    %740 = vmatpush.bf16.msra.mxu0 %v624
    %741 = vmatpush.bf16.msra.mxu0 %v620
    %742 = vmatpush.bf16.msra.mxu0 %v616
    %743 = vmatpush.bf16.msra.mxu0 %v612
    %744 = vmatpush.bf16.msra.mxu0 %v608
    %745 = vmatpush.bf16.msra.mxu0 %v604
    %746 = vmatmul.bf16.gmra.mxu0 %v369
    %v747 = vpop.f32.mrf.mxu0
    %v748 = vadd.f32 %v735, %v747
    %v749 = vpop.f32.mrf.mxu0
    %750 = vdwg.mxu0
    %751 = vmatpush.bf16.msra.mxu0 %v601
    %752 = vmatpush.bf16.msra.mxu0 %v597
    %753 = vmatpush.bf16.msra.mxu0 %v593
    %754 = vmatpush.bf16.msra.mxu0 %v589
    %755 = vmatpush.bf16.msra.mxu0 %v585
    %756 = vmatpush.bf16.msra.mxu0 %v581
    %757 = vmatpush.bf16.msra.mxu0 %v577
    %758 = vmatpush.bf16.msra.mxu0 %v573
    %759 = vmatmul.bf16.gmra.mxu0 %v368
    %v760 = vpop.f32.mrf.mxu0
    %v761 = vadd.f32 %v373, %v760
    %v762 = vpop.f32.mrf.mxu0
    %763 = vdwg.mxu0
    %764 = vmatpush.bf16.msra.mxu0 %v633
    %765 = vmatpush.bf16.msra.mxu0 %v629
    %766 = vmatpush.bf16.msra.mxu0 %v625
    %767 = vmatpush.bf16.msra.mxu0 %v621
    %768 = vmatpush.bf16.msra.mxu0 %v617
    %769 = vmatpush.bf16.msra.mxu0 %v613
    %770 = vmatpush.bf16.msra.mxu0 %v609
    %771 = vmatpush.bf16.msra.mxu0 %v605
    %772 = vmatmul.bf16.gmra.mxu0 %v369
    %v773 = vpop.f32.mrf.mxu0
    %v774 = vadd.f32 %v761, %v773
    %v775 = vpop.f32.mrf.mxu0
    %776 = vdwg.mxu0
    %777 = vmatpush.bf16.msra.mxu0 %v602
    %778 = vmatpush.bf16.msra.mxu0 %v598
    %779 = vmatpush.bf16.msra.mxu0 %v594
    %780 = vmatpush.bf16.msra.mxu0 %v590
    %781 = vmatpush.bf16.msra.mxu0 %v586
    %782 = vmatpush.bf16.msra.mxu0 %v582
    %783 = vmatpush.bf16.msra.mxu0 %v578
    %784 = vmatpush.bf16.msra.mxu0 %v574
    %785 = vmatmul.bf16.gmra.mxu0 %v368
    %v786 = vpop.f32.mrf.mxu0
    %v787 = vadd.f32 %v374, %v786
    %v788 = vpop.f32.mrf.mxu0
    %789 = vdwg.mxu0
    %790 = vmatpush.bf16.msra.mxu0 %v634
    %791 = vmatpush.bf16.msra.mxu0 %v630
    %792 = vmatpush.bf16.msra.mxu0 %v626
    %793 = vmatpush.bf16.msra.mxu0 %v622
    %794 = vmatpush.bf16.msra.mxu0 %v618
    %795 = vmatpush.bf16.msra.mxu0 %v614
    %796 = vmatpush.bf16.msra.mxu0 %v610
    %797 = vmatpush.bf16.msra.mxu0 %v606
    %798 = vmatmul.bf16.gmra.mxu0 %v369
    %v799 = vpop.f32.mrf.mxu0
    %v800 = vadd.f32 %v787, %v799
    %v801 = vpop.f32.mrf.mxu0
    %802 = vdwg.mxu0
    %v803 = vmul.f32 %v722, 0.01
    %v804 = vmul.f32 %v748, 0.01
    %v805 = vmul.f32 %v774, 0.01
    %v806 = vmul.f32 %v800, 0.01
    %v807 = vmax.f32 %v722, %v803
    %v808 = vmax.f32 %v748, %v804
    %v809 = vmax.f32 %v774, %v805
    %v810 = vmax.f32 %v800, %v806
    %v811 = vld [vmem:[#allocation11] sm:$0xff]
    %v812 = vld [vmem:[#allocation11 + $0x8] sm:$0xff]
    %v813 = vld [vmem:[#allocation11 + $0x10] sm:$0xff]
    %v814 = vld [vmem:[#allocation11 + $0x18] sm:$0xff]
    %v815 = vld [vmem:[#allocation11 + $0x20] sm:$0xff]
    %v816 = vld [vmem:[#allocation11 + $0x28] sm:$0xff]
    %v817 = vld [vmem:[#allocation11 + $0x30] sm:$0xff]
    %v818 = vld [vmem:[#allocation11 + $0x38] sm:$0xff]
    %v819 = vld [vmem:[#allocation11 + $0x40] sm:$0xff]
    %v820 = vld [vmem:[#allocation11 + $0x48] sm:$0xff]
    %v821 = vld [vmem:[#allocation11 + $0x50] sm:$0xff]
    %v822 = vld [vmem:[#allocation11 + $0x58] sm:$0xff]
    %v823 = vld [vmem:[#allocation11 + $0x60] sm:$0xff]
    %v824 = vld [vmem:[#allocation11 + $0x68] sm:$0xff]
    %v825 = vld [vmem:[#allocation11 + $0x70] sm:$0xff]
    %v826 = vld [vmem:[#allocation11 + $0x78] sm:$0xff]
    %v827 = vld [vmem:[#allocation11 + $0x80] sm:$0xff]
    %v828 = vld [vmem:[#allocation11 + $0x88] sm:$0xff]
    %v829 = vld [vmem:[#allocation11 + $0x90] sm:$0xff]
    %v830 = vld [vmem:[#allocation11 + $0x98] sm:$0xff]
    %v831 = vld [vmem:[#allocation11 + $0xa0] sm:$0xff]
    %v832 = vld [vmem:[#allocation11 + $0xa8] sm:$0xff]
    %v833 = vld [vmem:[#allocation11 + $0xb0] sm:$0xff]
    %v834 = vld [vmem:[#allocation11 + $0xb8] sm:$0xff]
    %v835 = vld [vmem:[#allocation11 + $0xc0] sm:$0xff]
    %v836 = vld [vmem:[#allocation11 + $0xc8] sm:$0xff]
    %v837 = vld [vmem:[#allocation11 + $0xd0] sm:$0xff]
    %v838 = vld [vmem:[#allocation11 + $0xd8] sm:$0xff]
    %v839 = vld [vmem:[#allocation11 + $0xe0] sm:$0xff]
    %v840 = vld [vmem:[#allocation11 + $0xe8] sm:$0xff]
    %v841 = vld [vmem:[#allocation11 + $0xf0] sm:$0xff]
    %v842 = vld [vmem:[#allocation11 + $0xf8] sm:$0xff]
    %v843 = vld [vmem:[#allocation11 + $0x100] sm:$0xff]
    %v844 = vld [vmem:[#allocation11 + $0x108] sm:$0xff]
    %v845 = vld [vmem:[#allocation11 + $0x110] sm:$0xff]
    %v846 = vld [vmem:[#allocation11 + $0x118] sm:$0xff]
    %v847 = vld [vmem:[#allocation11 + $0x120] sm:$0xff]
    %v848 = vld [vmem:[#allocation11 + $0x128] sm:$0xff]
    %v849 = vld [vmem:[#allocation11 + $0x130] sm:$0xff]
    %v850 = vld [vmem:[#allocation11 + $0x138] sm:$0xff]
    %v851 = vld [vmem:[#allocation11 + $0x140] sm:$0xff]
    %v852 = vld [vmem:[#allocation11 + $0x148] sm:$0xff]
    %v853 = vld [vmem:[#allocation11 + $0x150] sm:$0xff]
    %v854 = vld [vmem:[#allocation11 + $0x158] sm:$0xff]
    %v855 = vld [vmem:[#allocation11 + $0x160] sm:$0xff]
    %v856 = vld [vmem:[#allocation11 + $0x168] sm:$0xff]
    %v857 = vld [vmem:[#allocation11 + $0x170] sm:$0xff]
    %v858 = vld [vmem:[#allocation11 + $0x178] sm:$0xff]
    %v859 = vld [vmem:[#allocation11 + $0x180] sm:$0xff]
    %v860 = vld [vmem:[#allocation11 + $0x188] sm:$0xff]
    %v861 = vld [vmem:[#allocation11 + $0x190] sm:$0xff]
    %v862 = vld [vmem:[#allocation11 + $0x198] sm:$0xff]
    %v863 = vld [vmem:[#allocation11 + $0x1a0] sm:$0xff]
    %v864 = vld [vmem:[#allocation11 + $0x1a8] sm:$0xff]
    %v865 = vld [vmem:[#allocation11 + $0x1b0] sm:$0xff]
    %v866 = vld [vmem:[#allocation11 + $0x1b8] sm:$0xff]
    %v867 = vld [vmem:[#allocation11 + $0x1c0] sm:$0xff]
    %v868 = vld [vmem:[#allocation11 + $0x1c8] sm:$0xff]
    %v869 = vld [vmem:[#allocation11 + $0x1d0] sm:$0xff]
    %v870 = vld [vmem:[#allocation11 + $0x1d8] sm:$0xff]
    %v871 = vld [vmem:[#allocation11 + $0x1e0] sm:$0xff]
    %v872 = vld [vmem:[#allocation11 + $0x1e8] sm:$0xff]
    %v873 = vld [vmem:[#allocation11 + $0x1f0] sm:$0xff]
    %v874 = vld [vmem:[#allocation11 + $0x1f8] sm:$0xff]
    %v875 = vld [vmem:[#allocation11 + $0x200] sm:$0xff]
    %v876 = vld [vmem:[#allocation11 + $0x208] sm:$0xff]
    %v877 = vld [vmem:[#allocation11 + $0x210] sm:$0xff]
    %v878 = vld [vmem:[#allocation11 + $0x218] sm:$0xff]
    %v879 = vld [vmem:[#allocation11 + $0x220] sm:$0xff]
    %v880 = vld [vmem:[#allocation11 + $0x228] sm:$0xff]
    %v881 = vld [vmem:[#allocation11 + $0x230] sm:$0xff]
    %v882 = vld [vmem:[#allocation11 + $0x238] sm:$0xff]
    %v883 = vld [vmem:[#allocation11 + $0x240] sm:$0xff]
    %v884 = vld [vmem:[#allocation11 + $0x248] sm:$0xff]
    %v885 = vld [vmem:[#allocation11 + $0x250] sm:$0xff]
    %v886 = vld [vmem:[#allocation11 + $0x258] sm:$0xff]
    %v887 = vld [vmem:[#allocation11 + $0x260] sm:$0xff]
    %v888 = vld [vmem:[#allocation11 + $0x268] sm:$0xff]
    %v889 = vld [vmem:[#allocation11 + $0x270] sm:$0xff]
    %v890 = vld [vmem:[#allocation11 + $0x278] sm:$0xff]
    %v891 = vld [vmem:[#allocation11 + $0x280] sm:$0xff]
    %v892 = vld [vmem:[#allocation11 + $0x288] sm:$0xff]
    %v893 = vld [vmem:[#allocation11 + $0x290] sm:$0xff]
    %v894 = vld [vmem:[#allocation11 + $0x298] sm:$0xff]
    %v895 = vld [vmem:[#allocation11 + $0x2a0] sm:$0xff]
    %v896 = vld [vmem:[#allocation11 + $0x2a8] sm:$0xff]
    %v897 = vld [vmem:[#allocation11 + $0x2b0] sm:$0xff]
    %v898 = vld [vmem:[#allocation11 + $0x2b8] sm:$0xff]
    %v899 = vld [vmem:[#allocation11 + $0x2c0] sm:$0xff]
    %v900 = vld [vmem:[#allocation11 + $0x2c8] sm:$0xff]
    %v901 = vld [vmem:[#allocation11 + $0x2d0] sm:$0xff]
    %v902 = vld [vmem:[#allocation11 + $0x2d8] sm:$0xff]
    %v903 = vld [vmem:[#allocation11 + $0x2e0] sm:$0xff]
    %v904 = vld [vmem:[#allocation11 + $0x2e8] sm:$0xff]
    %v905 = vld [vmem:[#allocation11 + $0x2f0] sm:$0xff]
    %v906 = vld [vmem:[#allocation11 + $0x2f8] sm:$0xff]
    %v907 = vld [vmem:[#allocation11 + $0x300] sm:$0xff]
    %v908 = vld [vmem:[#allocation11 + $0x308] sm:$0xff]
    %v909 = vld [vmem:[#allocation11 + $0x310] sm:$0xff]
    %v910 = vld [vmem:[#allocation11 + $0x318] sm:$0xff]
    %v911 = vld [vmem:[#allocation11 + $0x320] sm:$0xff]
    %v912 = vld [vmem:[#allocation11 + $0x328] sm:$0xff]
    %v913 = vld [vmem:[#allocation11 + $0x330] sm:$0xff]
    %v914 = vld [vmem:[#allocation11 + $0x338] sm:$0xff]
    %v915 = vld [vmem:[#allocation11 + $0x340] sm:$0xff]
    %v916 = vld [vmem:[#allocation11 + $0x348] sm:$0xff]
    %v917 = vld [vmem:[#allocation11 + $0x350] sm:$0xff]
    %v918 = vld [vmem:[#allocation11 + $0x358] sm:$0xff]
    %v919 = vld [vmem:[#allocation11 + $0x360] sm:$0xff]
    %v920 = vld [vmem:[#allocation11 + $0x368] sm:$0xff]
    %v921 = vld [vmem:[#allocation11 + $0x370] sm:$0xff]
    %v922 = vld [vmem:[#allocation11 + $0x378] sm:$0xff]
    %v923 = vld [vmem:[#allocation11 + $0x380] sm:$0xff]
    %v924 = vld [vmem:[#allocation11 + $0x388] sm:$0xff]
    %v925 = vld [vmem:[#allocation11 + $0x390] sm:$0xff]
    %v926 = vld [vmem:[#allocation11 + $0x398] sm:$0xff]
    %v927 = vld [vmem:[#allocation11 + $0x3a0] sm:$0xff]
    %v928 = vld [vmem:[#allocation11 + $0x3a8] sm:$0xff]
    %v929 = vld [vmem:[#allocation11 + $0x3b0] sm:$0xff]
    %v930 = vld [vmem:[#allocation11 + $0x3b8] sm:$0xff]
    %v931 = vld [vmem:[#allocation11 + $0x3c0] sm:$0xff]
    %v932 = vld [vmem:[#allocation11 + $0x3c8] sm:$0xff]
    %v933 = vld [vmem:[#allocation11 + $0x3d0] sm:$0xff]
    %v934 = vld [vmem:[#allocation11 + $0x3d8] sm:$0xff]
    %v935 = vld [vmem:[#allocation11 + $0x3e0] sm:$0xff]
    %v936 = vld [vmem:[#allocation11 + $0x3e8] sm:$0xff]
    %v937 = vld [vmem:[#allocation11 + $0x3f0] sm:$0xff]
    %v938 = vld [vmem:[#allocation11 + $0x3f8] sm:$0xff]
    %v939 = vld [vmem:[#allocation11 + $0x400] sm:$0xff]
    %v940 = vld [vmem:[#allocation11 + $0x408] sm:$0xff]
    %v941 = vld [vmem:[#allocation11 + $0x410] sm:$0xff]
    %v942 = vld [vmem:[#allocation11 + $0x418] sm:$0xff]
    %v943 = vld [vmem:[#allocation11 + $0x420] sm:$0xff]
    %v944 = vld [vmem:[#allocation11 + $0x428] sm:$0xff]
    %v945 = vld [vmem:[#allocation11 + $0x430] sm:$0xff]
    %v946 = vld [vmem:[#allocation11 + $0x438] sm:$0xff]
    %v947 = vld [vmem:[#allocation11 + $0x440] sm:$0xff]
    %v948 = vld [vmem:[#allocation11 + $0x448] sm:$0xff]
    %v949 = vld [vmem:[#allocation11 + $0x450] sm:$0xff]
    %v950 = vld [vmem:[#allocation11 + $0x458] sm:$0xff]
    %v951 = vld [vmem:[#allocation11 + $0x460] sm:$0xff]
    %v952 = vld [vmem:[#allocation11 + $0x468] sm:$0xff]
    %v953 = vld [vmem:[#allocation11 + $0x470] sm:$0xff]
    %v954 = vld [vmem:[#allocation11 + $0x478] sm:$0xff]
    %v955 = vld [vmem:[#allocation11 + $0x480] sm:$0xff]
    %v956 = vld [vmem:[#allocation11 + $0x488] sm:$0xff]
    %v957 = vld [vmem:[#allocation11 + $0x490] sm:$0xff]
    %v958 = vld [vmem:[#allocation11 + $0x498] sm:$0xff]
    %v959 = vld [vmem:[#allocation11 + $0x4a0] sm:$0xff]
    %v960 = vld [vmem:[#allocation11 + $0x4a8] sm:$0xff]
    %v961 = vld [vmem:[#allocation11 + $0x4b0] sm:$0xff]
    %v962 = vld [vmem:[#allocation11 + $0x4b8] sm:$0xff]
    %v963 = vld [vmem:[#allocation11 + $0x4c0] sm:$0xff]
    %v964 = vld [vmem:[#allocation11 + $0x4c8] sm:$0xff]
    %v965 = vld [vmem:[#allocation11 + $0x4d0] sm:$0xff]
    %v966 = vld [vmem:[#allocation11 + $0x4d8] sm:$0xff]
    %v967 = vld [vmem:[#allocation11 + $0x4e0] sm:$0xff]
    %v968 = vld [vmem:[#allocation11 + $0x4e8] sm:$0xff]
    %v969 = vld [vmem:[#allocation11 + $0x4f0] sm:$0xff]
    %v970 = vld [vmem:[#allocation11 + $0x4f8] sm:$0xff]
    %v971 = vld [vmem:[#allocation11 + $0x500] sm:$0xff]
    %v972 = vld [vmem:[#allocation11 + $0x508] sm:$0xff]
    %v973 = vld [vmem:[#allocation11 + $0x510] sm:$0xff]
    %v974 = vld [vmem:[#allocation11 + $0x518] sm:$0xff]
    %v975 = vld [vmem:[#allocation11 + $0x520] sm:$0xff]
    %v976 = vld [vmem:[#allocation11 + $0x528] sm:$0xff]
    %v977 = vld [vmem:[#allocation11 + $0x530] sm:$0xff]
    %v978 = vld [vmem:[#allocation11 + $0x538] sm:$0xff]
    %v979 = vld [vmem:[#allocation11 + $0x540] sm:$0xff]
    %v980 = vld [vmem:[#allocation11 + $0x548] sm:$0xff]
    %v981 = vld [vmem:[#allocation11 + $0x550] sm:$0xff]
    %v982 = vld [vmem:[#allocation11 + $0x558] sm:$0xff]
    %v983 = vld [vmem:[#allocation11 + $0x560] sm:$0xff]
    %v984 = vld [vmem:[#allocation11 + $0x568] sm:$0xff]
    %v985 = vld [vmem:[#allocation11 + $0x570] sm:$0xff]
    %v986 = vld [vmem:[#allocation11 + $0x578] sm:$0xff]
    %v987 = vld [vmem:[#allocation11 + $0x580] sm:$0xff]
    %v988 = vld [vmem:[#allocation11 + $0x588] sm:$0xff]
    %v989 = vld [vmem:[#allocation11 + $0x590] sm:$0xff]
    %v990 = vld [vmem:[#allocation11 + $0x598] sm:$0xff]
    %v991 = vld [vmem:[#allocation11 + $0x5a0] sm:$0xff]
    %v992 = vld [vmem:[#allocation11 + $0x5a8] sm:$0xff]
    %v993 = vld [vmem:[#allocation11 + $0x5b0] sm:$0xff]
    %v994 = vld [vmem:[#allocation11 + $0x5b8] sm:$0xff]
    %v995 = vld [vmem:[#allocation11 + $0x5c0] sm:$0xff]
    %v996 = vld [vmem:[#allocation11 + $0x5c8] sm:$0xff]
    %v997 = vld [vmem:[#allocation11 + $0x5d0] sm:$0xff]
    %v998 = vld [vmem:[#allocation11 + $0x5d8] sm:$0xff]
    %v999 = vld [vmem:[#allocation11 + $0x5e0] sm:$0xff]
    %v1000 = vld [vmem:[#allocation11 + $0x5e8] sm:$0xff]
    %v1001 = vld [vmem:[#allocation11 + $0x5f0] sm:$0xff]
    %v1002 = vld [vmem:[#allocation11 + $0x5f8] sm:$0xff]
    %v1003 = vld [vmem:[#allocation11 + $0x600] sm:$0xff]
    %v1004 = vld [vmem:[#allocation11 + $0x608] sm:$0xff]
    %v1005 = vld [vmem:[#allocation11 + $0x610] sm:$0xff]
    %v1006 = vld [vmem:[#allocation11 + $0x618] sm:$0xff]
    %v1007 = vld [vmem:[#allocation11 + $0x620] sm:$0xff]
    %v1008 = vld [vmem:[#allocation11 + $0x628] sm:$0xff]
    %v1009 = vld [vmem:[#allocation11 + $0x630] sm:$0xff]
    %v1010 = vld [vmem:[#allocation11 + $0x638] sm:$0xff]
    %v1011 = vld [vmem:[#allocation11 + $0x640] sm:$0xff]
    %v1012 = vld [vmem:[#allocation11 + $0x648] sm:$0xff]
    %v1013 = vld [vmem:[#allocation11 + $0x650] sm:$0xff]
    %v1014 = vld [vmem:[#allocation11 + $0x658] sm:$0xff]
    %v1015 = vld [vmem:[#allocation11 + $0x660] sm:$0xff]
    %v1016 = vld [vmem:[#allocation11 + $0x668] sm:$0xff]
    %v1017 = vld [vmem:[#allocation11 + $0x670] sm:$0xff]
    %v1018 = vld [vmem:[#allocation11 + $0x678] sm:$0xff]
    %v1019 = vld [vmem:[#allocation11 + $0x680] sm:$0xff]
    %v1020 = vld [vmem:[#allocation11 + $0x688] sm:$0xff]
    %v1021 = vld [vmem:[#allocation11 + $0x690] sm:$0xff]
    %v1022 = vld [vmem:[#allocation11 + $0x698] sm:$0xff]
    %v1023 = vld [vmem:[#allocation11 + $0x6a0] sm:$0xff]
    %v1024 = vld [vmem:[#allocation11 + $0x6a8] sm:$0xff]
    %v1025 = vld [vmem:[#allocation11 + $0x6b0] sm:$0xff]
    %v1026 = vld [vmem:[#allocation11 + $0x6b8] sm:$0xff]
    %v1027 = vld [vmem:[#allocation11 + $0x6c0] sm:$0xff]
    %v1028 = vld [vmem:[#allocation11 + $0x6c8] sm:$0xff]
    %v1029 = vld [vmem:[#allocation11 + $0x6d0] sm:$0xff]
    %v1030 = vld [vmem:[#allocation11 + $0x6d8] sm:$0xff]
    %v1031 = vld [vmem:[#allocation11 + $0x6e0] sm:$0xff]
    %v1032 = vld [vmem:[#allocation11 + $0x6e8] sm:$0xff]
    %v1033 = vld [vmem:[#allocation11 + $0x6f0] sm:$0xff]
    %v1034 = vld [vmem:[#allocation11 + $0x6f8] sm:$0xff]
    %v1035 = vld [vmem:[#allocation11 + $0x700] sm:$0xff]
    %v1036 = vld [vmem:[#allocation11 + $0x708] sm:$0xff]
    %v1037 = vld [vmem:[#allocation11 + $0x710] sm:$0xff]
    %v1038 = vld [vmem:[#allocation11 + $0x718] sm:$0xff]
    %v1039 = vld [vmem:[#allocation11 + $0x720] sm:$0xff]
    %v1040 = vld [vmem:[#allocation11 + $0x728] sm:$0xff]
    %v1041 = vld [vmem:[#allocation11 + $0x730] sm:$0xff]
    %v1042 = vld [vmem:[#allocation11 + $0x738] sm:$0xff]
    %v1043 = vld [vmem:[#allocation11 + $0x740] sm:$0xff]
    %v1044 = vld [vmem:[#allocation11 + $0x748] sm:$0xff]
    %v1045 = vld [vmem:[#allocation11 + $0x750] sm:$0xff]
    %v1046 = vld [vmem:[#allocation11 + $0x758] sm:$0xff]
    %v1047 = vld [vmem:[#allocation11 + $0x760] sm:$0xff]
    %v1048 = vld [vmem:[#allocation11 + $0x768] sm:$0xff]
    %v1049 = vld [vmem:[#allocation11 + $0x770] sm:$0xff]
    %v1050 = vld [vmem:[#allocation11 + $0x778] sm:$0xff]
    %v1051 = vld [vmem:[#allocation11 + $0x780] sm:$0xff]
    %v1052 = vld [vmem:[#allocation11 + $0x788] sm:$0xff]
    %v1053 = vld [vmem:[#allocation11 + $0x790] sm:$0xff]
    %v1054 = vld [vmem:[#allocation11 + $0x798] sm:$0xff]
    %v1055 = vld [vmem:[#allocation11 + $0x7a0] sm:$0xff]
    %v1056 = vld [vmem:[#allocation11 + $0x7a8] sm:$0xff]
    %v1057 = vld [vmem:[#allocation11 + $0x7b0] sm:$0xff]
    %v1058 = vld [vmem:[#allocation11 + $0x7b8] sm:$0xff]
    %v1059 = vld [vmem:[#allocation11 + $0x7c0] sm:$0xff]
    %v1060 = vld [vmem:[#allocation11 + $0x7c8] sm:$0xff]
    %v1061 = vld [vmem:[#allocation11 + $0x7d0] sm:$0xff]
    %v1062 = vld [vmem:[#allocation11 + $0x7d8] sm:$0xff]
    %v1063 = vld [vmem:[#allocation11 + $0x7e0] sm:$0xff]
    %v1064 = vld [vmem:[#allocation11 + $0x7e8] sm:$0xff]
    %v1065 = vld [vmem:[#allocation11 + $0x7f0] sm:$0xff]
    %v1066 = vld [vmem:[#allocation11 + $0x7f8] sm:$0xff]
    %v1067 = vld [vmem:[#allocation13] sm:$0xff]
    %v1068 = vpack.c.bf16 %v807, %v807
    %v1069 = vpack.c.bf16 %v808, %v808
    %v1070 = vpack.c.bf16 %v809, %v809
    %v1071 = vpack.c.bf16 %v810, %v810
    %v1073 = vperm.slane %v1067, 0
    %v1074 = vperm.slane %v1067, 1
    %v1075 = vperm.slane %v1067, 2
    %v1076 = vperm.slane %v1067, 3
    %v1077 = vperm.slane %v1067, 4
    %v1078 = vperm.slane %v1067, 5
    %v1079 = vperm.slane %v1067, 6
    %v1080 = vperm.slane %v1067, 7
    %v1345 = vunpack.c.l.b16 %v811
    %v1346 = vunpack.c.h.b16 %v811
    %v1347 = vunpack.c.l.b16 %v812
    %v1348 = vunpack.c.h.b16 %v812
    %v1349 = vunpack.c.l.b16 %v813
    %v1350 = vunpack.c.h.b16 %v813
    %v1351 = vunpack.c.l.b16 %v814
    %v1352 = vunpack.c.h.b16 %v814
    %v1353 = vunpack.c.l.b16 %v815
    %v1354 = vunpack.c.h.b16 %v815
    %v1355 = vunpack.c.l.b16 %v816
    %v1356 = vunpack.c.h.b16 %v816
    %v1357 = vunpack.c.l.b16 %v817
    %v1358 = vunpack.c.h.b16 %v817
    %v1359 = vunpack.c.l.b16 %v818
    %v1360 = vunpack.c.h.b16 %v818
    %v1361 = vunpack.c.l.b16 %v819
    %v1362 = vunpack.c.h.b16 %v819
    %v1363 = vunpack.c.l.b16 %v820
    %v1364 = vunpack.c.h.b16 %v820
    %v1365 = vunpack.c.l.b16 %v821
    %v1366 = vunpack.c.h.b16 %v821
    %v1367 = vunpack.c.l.b16 %v822
    %v1368 = vunpack.c.h.b16 %v822
    %v1369 = vunpack.c.l.b16 %v823
    %v1370 = vunpack.c.h.b16 %v823
    %v1371 = vunpack.c.l.b16 %v824
    %v1372 = vunpack.c.h.b16 %v824
    %v1373 = vunpack.c.l.b16 %v825
    %v1374 = vunpack.c.h.b16 %v825
    %v1375 = vunpack.c.l.b16 %v826
    %v1376 = vunpack.c.h.b16 %v826
    %v1377 = vunpack.c.l.b16 %v827
    %v1378 = vunpack.c.h.b16 %v827
    %v1379 = vunpack.c.l.b16 %v828
    %v1380 = vunpack.c.h.b16 %v828
    %v1381 = vunpack.c.l.b16 %v829
    %v1382 = vunpack.c.h.b16 %v829
    %v1383 = vunpack.c.l.b16 %v830
    %v1384 = vunpack.c.h.b16 %v830
    %v1385 = vunpack.c.l.b16 %v831
    %v1386 = vunpack.c.h.b16 %v831
    %v1387 = vunpack.c.l.b16 %v832
    %v1388 = vunpack.c.h.b16 %v832
    %v1389 = vunpack.c.l.b16 %v833
    %v1390 = vunpack.c.h.b16 %v833
    %v1391 = vunpack.c.l.b16 %v834
    %v1392 = vunpack.c.h.b16 %v834
    %v1393 = vunpack.c.l.b16 %v835
    %v1394 = vunpack.c.h.b16 %v835
    %v1395 = vunpack.c.l.b16 %v836
    %v1396 = vunpack.c.h.b16 %v836
    %v1397 = vunpack.c.l.b16 %v837
    %v1398 = vunpack.c.h.b16 %v837
    %v1399 = vunpack.c.l.b16 %v838
    %v1400 = vunpack.c.h.b16 %v838
    %v1401 = vunpack.c.l.b16 %v839
    %v1402 = vunpack.c.h.b16 %v839
    %v1403 = vunpack.c.l.b16 %v840
    %v1404 = vunpack.c.h.b16 %v840
    %v1405 = vunpack.c.l.b16 %v841
    %v1406 = vunpack.c.h.b16 %v841
    %v1407 = vunpack.c.l.b16 %v842
    %v1408 = vunpack.c.h.b16 %v842
    %v1409 = vunpack.c.l.b16 %v843
    %v1410 = vunpack.c.h.b16 %v843
    %v1411 = vunpack.c.l.b16 %v844
    %v1412 = vunpack.c.h.b16 %v844
    %v1413 = vunpack.c.l.b16 %v845
    %v1414 = vunpack.c.h.b16 %v845
    %v1415 = vunpack.c.l.b16 %v846
    %v1416 = vunpack.c.h.b16 %v846
    %v1417 = vunpack.c.l.b16 %v847
    %v1418 = vunpack.c.h.b16 %v847
    %v1419 = vunpack.c.l.b16 %v848
    %v1420 = vunpack.c.h.b16 %v848
    %v1421 = vunpack.c.l.b16 %v849
    %v1422 = vunpack.c.h.b16 %v849
    %v1423 = vunpack.c.l.b16 %v850
    %v1424 = vunpack.c.h.b16 %v850
    %v1425 = vunpack.c.l.b16 %v851
    %v1426 = vunpack.c.h.b16 %v851
    %v1427 = vunpack.c.l.b16 %v852
    %v1428 = vunpack.c.h.b16 %v852
    %v1429 = vunpack.c.l.b16 %v853
    %v1430 = vunpack.c.h.b16 %v853
    %v1431 = vunpack.c.l.b16 %v854
    %v1432 = vunpack.c.h.b16 %v854
    %v1433 = vunpack.c.l.b16 %v855
    %v1434 = vunpack.c.h.b16 %v855
    %v1435 = vunpack.c.l.b16 %v856
    %v1436 = vunpack.c.h.b16 %v856
    %v1437 = vunpack.c.l.b16 %v857
    %v1438 = vunpack.c.h.b16 %v857
    %v1439 = vunpack.c.l.b16 %v858
    %v1440 = vunpack.c.h.b16 %v858
    %v1441 = vunpack.c.l.b16 %v859
    %v1442 = vunpack.c.h.b16 %v859
    %v1443 = vunpack.c.l.b16 %v860
    %v1444 = vunpack.c.h.b16 %v860
    %v1445 = vunpack.c.l.b16 %v861
    %v1446 = vunpack.c.h.b16 %v861
    %v1447 = vunpack.c.l.b16 %v862
    %v1448 = vunpack.c.h.b16 %v862
    %v1449 = vunpack.c.l.b16 %v863
    %v1450 = vunpack.c.h.b16 %v863
    %v1451 = vunpack.c.l.b16 %v864
    %v1452 = vunpack.c.h.b16 %v864
    %v1453 = vunpack.c.l.b16 %v865
    %v1454 = vunpack.c.h.b16 %v865
    %v1455 = vunpack.c.l.b16 %v866
    %v1456 = vunpack.c.h.b16 %v866
    %v1457 = vunpack.c.l.b16 %v867
    %v1458 = vunpack.c.h.b16 %v867
    %v1459 = vunpack.c.l.b16 %v868
    %v1460 = vunpack.c.h.b16 %v868
    %v1461 = vunpack.c.l.b16 %v869
    %v1462 = vunpack.c.h.b16 %v869
    %v1463 = vunpack.c.l.b16 %v870
    %v1464 = vunpack.c.h.b16 %v870
    %v1465 = vunpack.c.l.b16 %v871
    %v1466 = vunpack.c.h.b16 %v871
    %v1467 = vunpack.c.l.b16 %v872
    %v1468 = vunpack.c.h.b16 %v872
    %v1469 = vunpack.c.l.b16 %v873
    %v1470 = vunpack.c.h.b16 %v873
    %v1471 = vunpack.c.l.b16 %v874
    %v1472 = vunpack.c.h.b16 %v874
    %v1473 = vunpack.c.l.b16 %v875
    %v1474 = vunpack.c.h.b16 %v875
    %v1475 = vunpack.c.l.b16 %v876
    %v1476 = vunpack.c.h.b16 %v876
    %v1477 = vunpack.c.l.b16 %v877
    %v1478 = vunpack.c.h.b16 %v877
    %v1479 = vunpack.c.l.b16 %v878
    %v1480 = vunpack.c.h.b16 %v878
    %v1481 = vunpack.c.l.b16 %v879
    %v1482 = vunpack.c.h.b16 %v879
    %v1483 = vunpack.c.l.b16 %v880
    %v1484 = vunpack.c.h.b16 %v880
    %v1485 = vunpack.c.l.b16 %v881
    %v1486 = vunpack.c.h.b16 %v881
    %v1487 = vunpack.c.l.b16 %v882
    %v1488 = vunpack.c.h.b16 %v882
    %v1489 = vunpack.c.l.b16 %v883
    %v1490 = vunpack.c.h.b16 %v883
    %v1491 = vunpack.c.l.b16 %v884
    %v1492 = vunpack.c.h.b16 %v884
    %v1493 = vunpack.c.l.b16 %v885
    %v1494 = vunpack.c.h.b16 %v885
    %v1495 = vunpack.c.l.b16 %v886
    %v1496 = vunpack.c.h.b16 %v886
    %v1497 = vunpack.c.l.b16 %v887
    %v1498 = vunpack.c.h.b16 %v887
    %v1499 = vunpack.c.l.b16 %v888
    %v1500 = vunpack.c.h.b16 %v888
    %v1501 = vunpack.c.l.b16 %v889
    %v1502 = vunpack.c.h.b16 %v889
    %v1503 = vunpack.c.l.b16 %v890
    %v1504 = vunpack.c.h.b16 %v890
    %v1505 = vunpack.c.l.b16 %v891
    %v1506 = vunpack.c.h.b16 %v891
    %v1507 = vunpack.c.l.b16 %v892
    %v1508 = vunpack.c.h.b16 %v892
    %v1509 = vunpack.c.l.b16 %v893
    %v1510 = vunpack.c.h.b16 %v893
    %v1511 = vunpack.c.l.b16 %v894
    %v1512 = vunpack.c.h.b16 %v894
    %v1513 = vunpack.c.l.b16 %v895
    %v1514 = vunpack.c.h.b16 %v895
    %v1515 = vunpack.c.l.b16 %v896
    %v1516 = vunpack.c.h.b16 %v896
    %v1517 = vunpack.c.l.b16 %v897
    %v1518 = vunpack.c.h.b16 %v897
    %v1519 = vunpack.c.l.b16 %v898
    %v1520 = vunpack.c.h.b16 %v898
    %v1521 = vunpack.c.l.b16 %v899
    %v1522 = vunpack.c.h.b16 %v899
    %v1523 = vunpack.c.l.b16 %v900
    %v1524 = vunpack.c.h.b16 %v900
    %v1525 = vunpack.c.l.b16 %v901
    %v1526 = vunpack.c.h.b16 %v901
    %v1527 = vunpack.c.l.b16 %v902
    %v1528 = vunpack.c.h.b16 %v902
    %v1529 = vunpack.c.l.b16 %v903
    %v1530 = vunpack.c.h.b16 %v903
    %v1531 = vunpack.c.l.b16 %v904
    %v1532 = vunpack.c.h.b16 %v904
    %v1533 = vunpack.c.l.b16 %v905
    %v1534 = vunpack.c.h.b16 %v905
    %v1535 = vunpack.c.l.b16 %v906
    %v1536 = vunpack.c.h.b16 %v906
    %v1537 = vunpack.c.l.b16 %v907
    %v1538 = vunpack.c.h.b16 %v907
    %v1539 = vunpack.c.l.b16 %v908
    %v1540 = vunpack.c.h.b16 %v908
    %v1541 = vunpack.c.l.b16 %v909
    %v1542 = vunpack.c.h.b16 %v909
    %v1543 = vunpack.c.l.b16 %v910
    %v1544 = vunpack.c.h.b16 %v910
    %v1545 = vunpack.c.l.b16 %v911
    %v1546 = vunpack.c.h.b16 %v911
    %v1547 = vunpack.c.l.b16 %v912
    %v1548 = vunpack.c.h.b16 %v912
    %v1549 = vunpack.c.l.b16 %v913
    %v1550 = vunpack.c.h.b16 %v913
    %v1551 = vunpack.c.l.b16 %v914
    %v1552 = vunpack.c.h.b16 %v914
    %v1553 = vunpack.c.l.b16 %v915
    %v1554 = vunpack.c.h.b16 %v915
    %v1555 = vunpack.c.l.b16 %v916
    %v1556 = vunpack.c.h.b16 %v916
    %v1557 = vunpack.c.l.b16 %v917
    %v1558 = vunpack.c.h.b16 %v917
    %v1559 = vunpack.c.l.b16 %v918
    %v1560 = vunpack.c.h.b16 %v918
    %v1561 = vunpack.c.l.b16 %v919
    %v1562 = vunpack.c.h.b16 %v919
    %v1563 = vunpack.c.l.b16 %v920
    %v1564 = vunpack.c.h.b16 %v920
    %v1565 = vunpack.c.l.b16 %v921
    %v1566 = vunpack.c.h.b16 %v921
    %v1567 = vunpack.c.l.b16 %v922
    %v1568 = vunpack.c.h.b16 %v922
    %v1569 = vunpack.c.l.b16 %v923
    %v1570 = vunpack.c.h.b16 %v923
    %v1571 = vunpack.c.l.b16 %v924
    %v1572 = vunpack.c.h.b16 %v924
    %v1573 = vunpack.c.l.b16 %v925
    %v1574 = vunpack.c.h.b16 %v925
    %v1575 = vunpack.c.l.b16 %v926
    %v1576 = vunpack.c.h.b16 %v926
    %v1577 = vunpack.c.l.b16 %v927
    %v1578 = vunpack.c.h.b16 %v927
    %v1579 = vunpack.c.l.b16 %v928
    %v1580 = vunpack.c.h.b16 %v928
    %v1581 = vunpack.c.l.b16 %v929
    %v1582 = vunpack.c.h.b16 %v929
    %v1583 = vunpack.c.l.b16 %v930
    %v1584 = vunpack.c.h.b16 %v930
    %v1585 = vunpack.c.l.b16 %v931
    %v1586 = vunpack.c.h.b16 %v931
    %v1587 = vunpack.c.l.b16 %v932
    %v1588 = vunpack.c.h.b16 %v932
    %v1589 = vunpack.c.l.b16 %v933
    %v1590 = vunpack.c.h.b16 %v933
    %v1591 = vunpack.c.l.b16 %v934
    %v1592 = vunpack.c.h.b16 %v934
    %v1593 = vunpack.c.l.b16 %v935
    %v1594 = vunpack.c.h.b16 %v935
    %v1595 = vunpack.c.l.b16 %v936
    %v1596 = vunpack.c.h.b16 %v936
    %v1597 = vunpack.c.l.b16 %v937
    %v1598 = vunpack.c.h.b16 %v937
    %v1599 = vunpack.c.l.b16 %v938
    %v1600 = vunpack.c.h.b16 %v938
    %v1601 = vunpack.c.l.b16 %v939
    %v1602 = vunpack.c.h.b16 %v939
    %v1603 = vunpack.c.l.b16 %v940
    %v1604 = vunpack.c.h.b16 %v940
    %v1605 = vunpack.c.l.b16 %v941
    %v1606 = vunpack.c.h.b16 %v941
    %v1607 = vunpack.c.l.b16 %v942
    %v1608 = vunpack.c.h.b16 %v942
    %v1609 = vunpack.c.l.b16 %v943
    %v1610 = vunpack.c.h.b16 %v943
    %v1611 = vunpack.c.l.b16 %v944
    %v1612 = vunpack.c.h.b16 %v944
    %v1613 = vunpack.c.l.b16 %v945
    %v1614 = vunpack.c.h.b16 %v945
    %v1615 = vunpack.c.l.b16 %v946
    %v1616 = vunpack.c.h.b16 %v946
    %v1617 = vunpack.c.l.b16 %v947
    %v1618 = vunpack.c.h.b16 %v947
    %v1619 = vunpack.c.l.b16 %v948
    %v1620 = vunpack.c.h.b16 %v948
    %v1621 = vunpack.c.l.b16 %v949
    %v1622 = vunpack.c.h.b16 %v949
    %v1623 = vunpack.c.l.b16 %v950
    %v1624 = vunpack.c.h.b16 %v950
    %v1625 = vunpack.c.l.b16 %v951
    %v1626 = vunpack.c.h.b16 %v951
    %v1627 = vunpack.c.l.b16 %v952
    %v1628 = vunpack.c.h.b16 %v952
    %v1629 = vunpack.c.l.b16 %v953
    %v1630 = vunpack.c.h.b16 %v953
    %v1631 = vunpack.c.l.b16 %v954
    %v1632 = vunpack.c.h.b16 %v954
    %v1633 = vunpack.c.l.b16 %v955
    %v1634 = vunpack.c.h.b16 %v955
    %v1635 = vunpack.c.l.b16 %v956
    %v1636 = vunpack.c.h.b16 %v956
    %v1637 = vunpack.c.l.b16 %v957
    %v1638 = vunpack.c.h.b16 %v957
    %v1639 = vunpack.c.l.b16 %v958
    %v1640 = vunpack.c.h.b16 %v958
    %v1641 = vunpack.c.l.b16 %v959
    %v1642 = vunpack.c.h.b16 %v959
    %v1643 = vunpack.c.l.b16 %v960
    %v1644 = vunpack.c.h.b16 %v960
    %v1645 = vunpack.c.l.b16 %v961
    %v1646 = vunpack.c.h.b16 %v961
    %v1647 = vunpack.c.l.b16 %v962
    %v1648 = vunpack.c.h.b16 %v962
    %v1649 = vunpack.c.l.b16 %v963
    %v1650 = vunpack.c.h.b16 %v963
    %v1651 = vunpack.c.l.b16 %v964
    %v1652 = vunpack.c.h.b16 %v964
    %v1653 = vunpack.c.l.b16 %v965
    %v1654 = vunpack.c.h.b16 %v965
    %v1655 = vunpack.c.l.b16 %v966
    %v1656 = vunpack.c.h.b16 %v966
    %v1657 = vunpack.c.l.b16 %v967
    %v1658 = vunpack.c.h.b16 %v967
    %v1659 = vunpack.c.l.b16 %v968
    %v1660 = vunpack.c.h.b16 %v968
    %v1661 = vunpack.c.l.b16 %v969
    %v1662 = vunpack.c.h.b16 %v969
    %v1663 = vunpack.c.l.b16 %v970
    %v1664 = vunpack.c.h.b16 %v970
    %v1665 = vunpack.c.l.b16 %v971
    %v1666 = vunpack.c.h.b16 %v971
    %v1667 = vunpack.c.l.b16 %v972
    %v1668 = vunpack.c.h.b16 %v972
    %v1669 = vunpack.c.l.b16 %v973
    %v1670 = vunpack.c.h.b16 %v973
    %v1671 = vunpack.c.l.b16 %v974
    %v1672 = vunpack.c.h.b16 %v974
    %v1673 = vunpack.c.l.b16 %v975
    %v1674 = vunpack.c.h.b16 %v975
    %v1675 = vunpack.c.l.b16 %v976
    %v1676 = vunpack.c.h.b16 %v976
    %v1677 = vunpack.c.l.b16 %v977
    %v1678 = vunpack.c.h.b16 %v977
    %v1679 = vunpack.c.l.b16 %v978
    %v1680 = vunpack.c.h.b16 %v978
    %v1681 = vunpack.c.l.b16 %v979
    %v1682 = vunpack.c.h.b16 %v979
    %v1683 = vunpack.c.l.b16 %v980
    %v1684 = vunpack.c.h.b16 %v980
    %v1685 = vunpack.c.l.b16 %v981
    %v1686 = vunpack.c.h.b16 %v981
    %v1687 = vunpack.c.l.b16 %v982
    %v1688 = vunpack.c.h.b16 %v982
    %v1689 = vunpack.c.l.b16 %v983
    %v1690 = vunpack.c.h.b16 %v983
    %v1691 = vunpack.c.l.b16 %v984
    %v1692 = vunpack.c.h.b16 %v984
    %v1693 = vunpack.c.l.b16 %v985
    %v1694 = vunpack.c.h.b16 %v985
    %v1695 = vunpack.c.l.b16 %v986
    %v1696 = vunpack.c.h.b16 %v986
    %v1697 = vunpack.c.l.b16 %v987
    %v1698 = vunpack.c.h.b16 %v987
    %v1699 = vunpack.c.l.b16 %v988
    %v1700 = vunpack.c.h.b16 %v988
    %v1701 = vunpack.c.l.b16 %v989
    %v1702 = vunpack.c.h.b16 %v989
    %v1703 = vunpack.c.l.b16 %v990
    %v1704 = vunpack.c.h.b16 %v990
    %v1705 = vunpack.c.l.b16 %v991
    %v1706 = vunpack.c.h.b16 %v991
    %v1707 = vunpack.c.l.b16 %v992
    %v1708 = vunpack.c.h.b16 %v992
    %v1709 = vunpack.c.l.b16 %v993
    %v1710 = vunpack.c.h.b16 %v993
    %v1711 = vunpack.c.l.b16 %v994
    %v1712 = vunpack.c.h.b16 %v994
    %v1713 = vunpack.c.l.b16 %v995
    %v1714 = vunpack.c.h.b16 %v995
    %v1715 = vunpack.c.l.b16 %v996
    %v1716 = vunpack.c.h.b16 %v996
    %v1717 = vunpack.c.l.b16 %v997
    %v1718 = vunpack.c.h.b16 %v997
    %v1719 = vunpack.c.l.b16 %v998
    %v1720 = vunpack.c.h.b16 %v998
    %v1721 = vunpack.c.l.b16 %v999
    %v1722 = vunpack.c.h.b16 %v999
    %v1723 = vunpack.c.l.b16 %v1000
    %v1724 = vunpack.c.h.b16 %v1000
    %v1725 = vunpack.c.l.b16 %v1001
    %v1726 = vunpack.c.h.b16 %v1001
    %v1727 = vunpack.c.l.b16 %v1002
    %v1728 = vunpack.c.h.b16 %v1002
    %v1729 = vunpack.c.l.b16 %v1003
    %v1730 = vunpack.c.h.b16 %v1003
    %v1731 = vunpack.c.l.b16 %v1004
    %v1732 = vunpack.c.h.b16 %v1004
    %v1733 = vunpack.c.l.b16 %v1005
    %v1734 = vunpack.c.h.b16 %v1005
    %v1735 = vunpack.c.l.b16 %v1006
    %v1736 = vunpack.c.h.b16 %v1006
    %v1737 = vunpack.c.l.b16 %v1007
    %v1738 = vunpack.c.h.b16 %v1007
    %v1739 = vunpack.c.l.b16 %v1008
    %v1740 = vunpack.c.h.b16 %v1008
    %v1741 = vunpack.c.l.b16 %v1009
    %v1742 = vunpack.c.h.b16 %v1009
    %v1743 = vunpack.c.l.b16 %v1010
    %v1744 = vunpack.c.h.b16 %v1010
    %v1745 = vunpack.c.l.b16 %v1011
    %v1746 = vunpack.c.h.b16 %v1011
    %v1747 = vunpack.c.l.b16 %v1012
    %v1748 = vunpack.c.h.b16 %v1012
    %v1749 = vunpack.c.l.b16 %v1013
    %v1750 = vunpack.c.h.b16 %v1013
    %v1751 = vunpack.c.l.b16 %v1014
    %v1752 = vunpack.c.h.b16 %v1014
    %v1753 = vunpack.c.l.b16 %v1015
    %v1754 = vunpack.c.h.b16 %v1015
    %v1755 = vunpack.c.l.b16 %v1016
    %v1756 = vunpack.c.h.b16 %v1016
    %v1757 = vunpack.c.l.b16 %v1017
    %v1758 = vunpack.c.h.b16 %v1017
    %v1759 = vunpack.c.l.b16 %v1018
    %v1760 = vunpack.c.h.b16 %v1018
    %v1761 = vunpack.c.l.b16 %v1019
    %v1762 = vunpack.c.h.b16 %v1019
    %v1763 = vunpack.c.l.b16 %v1020
    %v1764 = vunpack.c.h.b16 %v1020
    %v1765 = vunpack.c.l.b16 %v1021
    %v1766 = vunpack.c.h.b16 %v1021
    %v1767 = vunpack.c.l.b16 %v1022
    %v1768 = vunpack.c.h.b16 %v1022
    %v1769 = vunpack.c.l.b16 %v1023
    %v1770 = vunpack.c.h.b16 %v1023
    %v1771 = vunpack.c.l.b16 %v1024
    %v1772 = vunpack.c.h.b16 %v1024
    %v1773 = vunpack.c.l.b16 %v1025
    %v1774 = vunpack.c.h.b16 %v1025
    %v1775 = vunpack.c.l.b16 %v1026
    %v1776 = vunpack.c.h.b16 %v1026
    %v1777 = vunpack.c.l.b16 %v1027
    %v1778 = vunpack.c.h.b16 %v1027
    %v1779 = vunpack.c.l.b16 %v1028
    %v1780 = vunpack.c.h.b16 %v1028
    %v1781 = vunpack.c.l.b16 %v1029
    %v1782 = vunpack.c.h.b16 %v1029
    %v1783 = vunpack.c.l.b16 %v1030
    %v1784 = vunpack.c.h.b16 %v1030
    %v1785 = vunpack.c.l.b16 %v1031
    %v1786 = vunpack.c.h.b16 %v1031
    %v1787 = vunpack.c.l.b16 %v1032
    %v1788 = vunpack.c.h.b16 %v1032
    %v1789 = vunpack.c.l.b16 %v1033
    %v1790 = vunpack.c.h.b16 %v1033
    %v1791 = vunpack.c.l.b16 %v1034
    %v1792 = vunpack.c.h.b16 %v1034
    %v1793 = vunpack.c.l.b16 %v1035
    %v1794 = vunpack.c.h.b16 %v1035
    %v1795 = vunpack.c.l.b16 %v1036
    %v1796 = vunpack.c.h.b16 %v1036
    %v1797 = vunpack.c.l.b16 %v1037
    %v1798 = vunpack.c.h.b16 %v1037
    %v1799 = vunpack.c.l.b16 %v1038
    %v1800 = vunpack.c.h.b16 %v1038
    %v1801 = vunpack.c.l.b16 %v1039
    %v1802 = vunpack.c.h.b16 %v1039
    %v1803 = vunpack.c.l.b16 %v1040
    %v1804 = vunpack.c.h.b16 %v1040
    %v1805 = vunpack.c.l.b16 %v1041
    %v1806 = vunpack.c.h.b16 %v1041
    %v1807 = vunpack.c.l.b16 %v1042
    %v1808 = vunpack.c.h.b16 %v1042
    %v1809 = vunpack.c.l.b16 %v1043
    %v1810 = vunpack.c.h.b16 %v1043
    %v1811 = vunpack.c.l.b16 %v1044
    %v1812 = vunpack.c.h.b16 %v1044
    %v1813 = vunpack.c.l.b16 %v1045
    %v1814 = vunpack.c.h.b16 %v1045
    %v1815 = vunpack.c.l.b16 %v1046
    %v1816 = vunpack.c.h.b16 %v1046
    %v1817 = vunpack.c.l.b16 %v1047
    %v1818 = vunpack.c.h.b16 %v1047
    %v1819 = vunpack.c.l.b16 %v1048
    %v1820 = vunpack.c.h.b16 %v1048
    %v1821 = vunpack.c.l.b16 %v1049
    %v1822 = vunpack.c.h.b16 %v1049
    %v1823 = vunpack.c.l.b16 %v1050
    %v1824 = vunpack.c.h.b16 %v1050
    %v1825 = vunpack.c.l.b16 %v1051
    %v1826 = vunpack.c.h.b16 %v1051
    %v1827 = vunpack.c.l.b16 %v1052
    %v1828 = vunpack.c.h.b16 %v1052
    %v1829 = vunpack.c.l.b16 %v1053
    %v1830 = vunpack.c.h.b16 %v1053
    %v1831 = vunpack.c.l.b16 %v1054
    %v1832 = vunpack.c.h.b16 %v1054
    %v1833 = vunpack.c.l.b16 %v1055
    %v1834 = vunpack.c.h.b16 %v1055
    %v1835 = vunpack.c.l.b16 %v1056
    %v1836 = vunpack.c.h.b16 %v1056
    %v1837 = vunpack.c.l.b16 %v1057
    %v1838 = vunpack.c.h.b16 %v1057
    %v1839 = vunpack.c.l.b16 %v1058
    %v1840 = vunpack.c.h.b16 %v1058
    %v1841 = vunpack.c.l.b16 %v1059
    %v1842 = vunpack.c.h.b16 %v1059
    %v1843 = vunpack.c.l.b16 %v1060
    %v1844 = vunpack.c.h.b16 %v1060
    %v1845 = vunpack.c.l.b16 %v1061
    %v1846 = vunpack.c.h.b16 %v1061
    %v1847 = vunpack.c.l.b16 %v1062
    %v1848 = vunpack.c.h.b16 %v1062
    %v1849 = vunpack.c.l.b16 %v1063
    %v1850 = vunpack.c.h.b16 %v1063
    %v1851 = vunpack.c.l.b16 %v1064
    %v1852 = vunpack.c.h.b16 %v1064
    %v1853 = vunpack.c.l.b16 %v1065
    %v1854 = vunpack.c.h.b16 %v1065
    %v1855 = vunpack.c.l.b16 %v1066
    %v1856 = vunpack.c.h.b16 %v1066
    %v1857 = vpack.c.b16 %v1353, %v1345
    %v1858 = vpack.c.b16 %v1354, %v1346
    %v1859 = vpack.c.b16 %v1355, %v1347
    %v1860 = vpack.c.b16 %v1356, %v1348
    %v1861 = vpack.c.b16 %v1357, %v1349
    %v1862 = vpack.c.b16 %v1358, %v1350
    %v1863 = vpack.c.b16 %v1359, %v1351
    %v1864 = vpack.c.b16 %v1360, %v1352
    %v1865 = vpack.c.b16 %v1369, %v1361
    %v1866 = vpack.c.b16 %v1370, %v1362
    %v1867 = vpack.c.b16 %v1371, %v1363
    %v1868 = vpack.c.b16 %v1372, %v1364
    %v1869 = vpack.c.b16 %v1373, %v1365
    %v1870 = vpack.c.b16 %v1374, %v1366
    %v1871 = vpack.c.b16 %v1375, %v1367
    %v1872 = vpack.c.b16 %v1376, %v1368
    %v1873 = vpack.c.b16 %v1385, %v1377
    %v1874 = vpack.c.b16 %v1386, %v1378
    %v1875 = vpack.c.b16 %v1387, %v1379
    %v1876 = vpack.c.b16 %v1388, %v1380
    %v1877 = vpack.c.b16 %v1389, %v1381
    %v1878 = vpack.c.b16 %v1390, %v1382
    %v1879 = vpack.c.b16 %v1391, %v1383
    %v1880 = vpack.c.b16 %v1392, %v1384
    %v1881 = vpack.c.b16 %v1401, %v1393
    %v1882 = vpack.c.b16 %v1402, %v1394
    %v1883 = vpack.c.b16 %v1403, %v1395
    %v1884 = vpack.c.b16 %v1404, %v1396
    %v1885 = vpack.c.b16 %v1405, %v1397
    %v1886 = vpack.c.b16 %v1406, %v1398
    %v1887 = vpack.c.b16 %v1407, %v1399
    %v1888 = vpack.c.b16 %v1408, %v1400
    %v1889 = vpack.c.b16 %v1417, %v1409
    %v1890 = vpack.c.b16 %v1418, %v1410
    %v1891 = vpack.c.b16 %v1419, %v1411
    %v1892 = vpack.c.b16 %v1420, %v1412
    %v1893 = vpack.c.b16 %v1421, %v1413
    %v1894 = vpack.c.b16 %v1422, %v1414
    %v1895 = vpack.c.b16 %v1423, %v1415
    %v1896 = vpack.c.b16 %v1424, %v1416
    %v1897 = vpack.c.b16 %v1433, %v1425
    %v1898 = vpack.c.b16 %v1434, %v1426
    %v1899 = vpack.c.b16 %v1435, %v1427
    %v1900 = vpack.c.b16 %v1436, %v1428
    %v1901 = vpack.c.b16 %v1437, %v1429
    %v1902 = vpack.c.b16 %v1438, %v1430
    %v1903 = vpack.c.b16 %v1439, %v1431
    %v1904 = vpack.c.b16 %v1440, %v1432
    %v1905 = vpack.c.b16 %v1449, %v1441
    %v1906 = vpack.c.b16 %v1450, %v1442
    %v1907 = vpack.c.b16 %v1451, %v1443
    %v1908 = vpack.c.b16 %v1452, %v1444
    %v1909 = vpack.c.b16 %v1453, %v1445
    %v1910 = vpack.c.b16 %v1454, %v1446
    %v1911 = vpack.c.b16 %v1455, %v1447
    %v1912 = vpack.c.b16 %v1456, %v1448
    %v1913 = vpack.c.b16 %v1465, %v1457
    %v1914 = vpack.c.b16 %v1466, %v1458
    %v1915 = vpack.c.b16 %v1467, %v1459
    %v1916 = vpack.c.b16 %v1468, %v1460
    %v1917 = vpack.c.b16 %v1469, %v1461
    %v1918 = vpack.c.b16 %v1470, %v1462
    %v1919 = vpack.c.b16 %v1471, %v1463
    %v1920 = vpack.c.b16 %v1472, %v1464
    %v1921 = vpack.c.b16 %v1481, %v1473
    %v1922 = vpack.c.b16 %v1482, %v1474
    %v1923 = vpack.c.b16 %v1483, %v1475
    %v1924 = vpack.c.b16 %v1484, %v1476
    %v1925 = vpack.c.b16 %v1485, %v1477
    %v1926 = vpack.c.b16 %v1486, %v1478
    %v1927 = vpack.c.b16 %v1487, %v1479
    %v1928 = vpack.c.b16 %v1488, %v1480
    %v1929 = vpack.c.b16 %v1497, %v1489
    %v1930 = vpack.c.b16 %v1498, %v1490
    %v1931 = vpack.c.b16 %v1499, %v1491
    %v1932 = vpack.c.b16 %v1500, %v1492
    %v1933 = vpack.c.b16 %v1501, %v1493
    %v1934 = vpack.c.b16 %v1502, %v1494
    %v1935 = vpack.c.b16 %v1503, %v1495
    %v1936 = vpack.c.b16 %v1504, %v1496
    %v1937 = vpack.c.b16 %v1513, %v1505
    %v1938 = vpack.c.b16 %v1514, %v1506
    %v1939 = vpack.c.b16 %v1515, %v1507
    %v1940 = vpack.c.b16 %v1516, %v1508
    %v1941 = vpack.c.b16 %v1517, %v1509
    %v1942 = vpack.c.b16 %v1518, %v1510
    %v1943 = vpack.c.b16 %v1519, %v1511
    %v1944 = vpack.c.b16 %v1520, %v1512
    %v1945 = vpack.c.b16 %v1529, %v1521
    %v1946 = vpack.c.b16 %v1530, %v1522
    %v1947 = vpack.c.b16 %v1531, %v1523
    %v1948 = vpack.c.b16 %v1532, %v1524
    %v1949 = vpack.c.b16 %v1533, %v1525
    %v1950 = vpack.c.b16 %v1534, %v1526
    %v1951 = vpack.c.b16 %v1535, %v1527
    %v1952 = vpack.c.b16 %v1536, %v1528
    %v1953 = vpack.c.b16 %v1545, %v1537
    %v1954 = vpack.c.b16 %v1546, %v1538
    %v1955 = vpack.c.b16 %v1547, %v1539
    %v1956 = vpack.c.b16 %v1548, %v1540
    %v1957 = vpack.c.b16 %v1549, %v1541
    %v1958 = vpack.c.b16 %v1550, %v1542
    %v1959 = vpack.c.b16 %v1551, %v1543
    %v1960 = vpack.c.b16 %v1552, %v1544
    %v1961 = vpack.c.b16 %v1561, %v1553
    %v1962 = vpack.c.b16 %v1562, %v1554
    %v1963 = vpack.c.b16 %v1563, %v1555
    %v1964 = vpack.c.b16 %v1564, %v1556
    %v1965 = vpack.c.b16 %v1565, %v1557
    %v1966 = vpack.c.b16 %v1566, %v1558
    %v1967 = vpack.c.b16 %v1567, %v1559
    %v1968 = vpack.c.b16 %v1568, %v1560
    %v1969 = vpack.c.b16 %v1577, %v1569
    %v1970 = vpack.c.b16 %v1578, %v1570
    %v1971 = vpack.c.b16 %v1579, %v1571
    %v1972 = vpack.c.b16 %v1580, %v1572
    %v1973 = vpack.c.b16 %v1581, %v1573
    %v1974 = vpack.c.b16 %v1582, %v1574
    %v1975 = vpack.c.b16 %v1583, %v1575
    %v1976 = vpack.c.b16 %v1584, %v1576
    %v1977 = vpack.c.b16 %v1593, %v1585
    %v1978 = vpack.c.b16 %v1594, %v1586
    %v1979 = vpack.c.b16 %v1595, %v1587
    %v1980 = vpack.c.b16 %v1596, %v1588
    %v1981 = vpack.c.b16 %v1597, %v1589
    %v1982 = vpack.c.b16 %v1598, %v1590
    %v1983 = vpack.c.b16 %v1599, %v1591
    %v1984 = vpack.c.b16 %v1600, %v1592
    %v1985 = vpack.c.b16 %v1609, %v1601
    %v1986 = vpack.c.b16 %v1610, %v1602
    %v1987 = vpack.c.b16 %v1611, %v1603
    %v1988 = vpack.c.b16 %v1612, %v1604
    %v1989 = vpack.c.b16 %v1613, %v1605
    %v1990 = vpack.c.b16 %v1614, %v1606
    %v1991 = vpack.c.b16 %v1615, %v1607
    %v1992 = vpack.c.b16 %v1616, %v1608
    %v1993 = vpack.c.b16 %v1625, %v1617
    %v1994 = vpack.c.b16 %v1626, %v1618
    %v1995 = vpack.c.b16 %v1627, %v1619
    %v1996 = vpack.c.b16 %v1628, %v1620
    %v1997 = vpack.c.b16 %v1629, %v1621
    %v1998 = vpack.c.b16 %v1630, %v1622
    %v1999 = vpack.c.b16 %v1631, %v1623
    %v2000 = vpack.c.b16 %v1632, %v1624
    %v2001 = vpack.c.b16 %v1641, %v1633
    %v2002 = vpack.c.b16 %v1642, %v1634
    %v2003 = vpack.c.b16 %v1643, %v1635
    %v2004 = vpack.c.b16 %v1644, %v1636
    %v2005 = vpack.c.b16 %v1645, %v1637
    %v2006 = vpack.c.b16 %v1646, %v1638
    %v2007 = vpack.c.b16 %v1647, %v1639
    %v2008 = vpack.c.b16 %v1648, %v1640
    %v2009 = vpack.c.b16 %v1657, %v1649
    %v2010 = vpack.c.b16 %v1658, %v1650
    %v2011 = vpack.c.b16 %v1659, %v1651
    %v2012 = vpack.c.b16 %v1660, %v1652
    %v2013 = vpack.c.b16 %v1661, %v1653
    %v2014 = vpack.c.b16 %v1662, %v1654
    %v2015 = vpack.c.b16 %v1663, %v1655
    %v2016 = vpack.c.b16 %v1664, %v1656
    %v2017 = vpack.c.b16 %v1673, %v1665
    %v2018 = vpack.c.b16 %v1674, %v1666
    %v2019 = vpack.c.b16 %v1675, %v1667
    %v2020 = vpack.c.b16 %v1676, %v1668
    %v2021 = vpack.c.b16 %v1677, %v1669
    %v2022 = vpack.c.b16 %v1678, %v1670
    %v2023 = vpack.c.b16 %v1679, %v1671
    %v2024 = vpack.c.b16 %v1680, %v1672
    %v2025 = vpack.c.b16 %v1689, %v1681
    %v2026 = vpack.c.b16 %v1690, %v1682
    %v2027 = vpack.c.b16 %v1691, %v1683
    %v2028 = vpack.c.b16 %v1692, %v1684
    %v2029 = vpack.c.b16 %v1693, %v1685
    %v2030 = vpack.c.b16 %v1694, %v1686
    %v2031 = vpack.c.b16 %v1695, %v1687
    %v2032 = vpack.c.b16 %v1696, %v1688
    %v2033 = vpack.c.b16 %v1705, %v1697
    %v2034 = vpack.c.b16 %v1706, %v1698
    %v2035 = vpack.c.b16 %v1707, %v1699
    %v2036 = vpack.c.b16 %v1708, %v1700
    %v2037 = vpack.c.b16 %v1709, %v1701
    %v2038 = vpack.c.b16 %v1710, %v1702
    %v2039 = vpack.c.b16 %v1711, %v1703
    %v2040 = vpack.c.b16 %v1712, %v1704
    %v2041 = vpack.c.b16 %v1721, %v1713
    %v2042 = vpack.c.b16 %v1722, %v1714
    %v2043 = vpack.c.b16 %v1723, %v1715
    %v2044 = vpack.c.b16 %v1724, %v1716
    %v2045 = vpack.c.b16 %v1725, %v1717
    %v2046 = vpack.c.b16 %v1726, %v1718
    %v2047 = vpack.c.b16 %v1727, %v1719
    %v2048 = vpack.c.b16 %v1728, %v1720
    %v2049 = vpack.c.b16 %v1737, %v1729
    %v2050 = vpack.c.b16 %v1738, %v1730
    %v2051 = vpack.c.b16 %v1739, %v1731
    %v2052 = vpack.c.b16 %v1740, %v1732
    %v2053 = vpack.c.b16 %v1741, %v1733
    %v2054 = vpack.c.b16 %v1742, %v1734
    %v2055 = vpack.c.b16 %v1743, %v1735
    %v2056 = vpack.c.b16 %v1744, %v1736
    %v2057 = vpack.c.b16 %v1753, %v1745
    %v2058 = vpack.c.b16 %v1754, %v1746
    %v2059 = vpack.c.b16 %v1755, %v1747
    %v2060 = vpack.c.b16 %v1756, %v1748
    %v2061 = vpack.c.b16 %v1757, %v1749
    %v2062 = vpack.c.b16 %v1758, %v1750
    %v2063 = vpack.c.b16 %v1759, %v1751
    %v2064 = vpack.c.b16 %v1760, %v1752
    %v2065 = vpack.c.b16 %v1769, %v1761
    %v2066 = vpack.c.b16 %v1770, %v1762
    %v2067 = vpack.c.b16 %v1771, %v1763
    %v2068 = vpack.c.b16 %v1772, %v1764
    %v2069 = vpack.c.b16 %v1773, %v1765
    %v2070 = vpack.c.b16 %v1774, %v1766
    %v2071 = vpack.c.b16 %v1775, %v1767
    %v2072 = vpack.c.b16 %v1776, %v1768
    %v2073 = vpack.c.b16 %v1785, %v1777
    %v2074 = vpack.c.b16 %v1786, %v1778
    %v2075 = vpack.c.b16 %v1787, %v1779
    %v2076 = vpack.c.b16 %v1788, %v1780
    %v2077 = vpack.c.b16 %v1789, %v1781
    %v2078 = vpack.c.b16 %v1790, %v1782
    %v2079 = vpack.c.b16 %v1791, %v1783
    %v2080 = vpack.c.b16 %v1792, %v1784
    %v2081 = vpack.c.b16 %v1801, %v1793
    %v2082 = vpack.c.b16 %v1802, %v1794
    %v2083 = vpack.c.b16 %v1803, %v1795
    %v2084 = vpack.c.b16 %v1804, %v1796
    %v2085 = vpack.c.b16 %v1805, %v1797
    %v2086 = vpack.c.b16 %v1806, %v1798
    %v2087 = vpack.c.b16 %v1807, %v1799
    %v2088 = vpack.c.b16 %v1808, %v1800
    %v2089 = vpack.c.b16 %v1817, %v1809
    %v2090 = vpack.c.b16 %v1818, %v1810
    %v2091 = vpack.c.b16 %v1819, %v1811
    %v2092 = vpack.c.b16 %v1820, %v1812
    %v2093 = vpack.c.b16 %v1821, %v1813
    %v2094 = vpack.c.b16 %v1822, %v1814
    %v2095 = vpack.c.b16 %v1823, %v1815
    %v2096 = vpack.c.b16 %v1824, %v1816
    %v2097 = vpack.c.b16 %v1833, %v1825
    %v2098 = vpack.c.b16 %v1834, %v1826
    %v2099 = vpack.c.b16 %v1835, %v1827
    %v2100 = vpack.c.b16 %v1836, %v1828
    %v2101 = vpack.c.b16 %v1837, %v1829
    %v2102 = vpack.c.b16 %v1838, %v1830
    %v2103 = vpack.c.b16 %v1839, %v1831
    %v2104 = vpack.c.b16 %v1840, %v1832
    %v2105 = vpack.c.b16 %v1849, %v1841
    %v2106 = vpack.c.b16 %v1850, %v1842
    %v2107 = vpack.c.b16 %v1851, %v1843
    %v2108 = vpack.c.b16 %v1852, %v1844
    %v2109 = vpack.c.b16 %v1853, %v1845
    %v2110 = vpack.c.b16 %v1854, %v1846
    %v2111 = vpack.c.b16 %v1855, %v1847
    %v2112 = vpack.c.b16 %v1856, %v1848
    %2369 = vmatpush.bf16.msra.mxu0 %v1913
    %2370 = vmatpush.bf16.msra.mxu0 %v1905
    %2371 = vmatpush.bf16.msra.mxu0 %v1897
    %2372 = vmatpush.bf16.msra.mxu0 %v1889
    %2373 = vmatpush.bf16.msra.mxu0 %v1881
    %2374 = vmatpush.bf16.msra.mxu0 %v1873
    %2375 = vmatpush.bf16.msra.mxu0 %v1865
    %2376 = vmatpush.bf16.msra.mxu0 %v1857
    %2377 = vmatmul.bf16.gmra.mxu0 %v1068
    %v2378 = vpop.f32.mrf.mxu0
    %v2379 = vadd.f32 %v1073, %v2378
    %v2380 = vpop.f32.mrf.mxu0
    %2381 = vdwg.mxu0
    %2382 = vmatpush.bf16.msra.mxu0 %v1977
    %2383 = vmatpush.bf16.msra.mxu0 %v1969
    %2384 = vmatpush.bf16.msra.mxu0 %v1961
    %2385 = vmatpush.bf16.msra.mxu0 %v1953
    %2386 = vmatpush.bf16.msra.mxu0 %v1945
    %2387 = vmatpush.bf16.msra.mxu0 %v1937
    %2388 = vmatpush.bf16.msra.mxu0 %v1929
    %2389 = vmatpush.bf16.msra.mxu0 %v1921
    %2390 = vmatmul.bf16.gmra.mxu0 %v1069
    %v2391 = vpop.f32.mrf.mxu0
    %v2392 = vadd.f32 %v2379, %v2391
    %v2393 = vpop.f32.mrf.mxu0
    %2394 = vdwg.mxu0
    %2395 = vmatpush.bf16.msra.mxu0 %v2041
    %2396 = vmatpush.bf16.msra.mxu0 %v2033
    %2397 = vmatpush.bf16.msra.mxu0 %v2025
    %2398 = vmatpush.bf16.msra.mxu0 %v2017
    %2399 = vmatpush.bf16.msra.mxu0 %v2009
    %2400 = vmatpush.bf16.msra.mxu0 %v2001
    %2401 = vmatpush.bf16.msra.mxu0 %v1993
    %2402 = vmatpush.bf16.msra.mxu0 %v1985
    %2403 = vmatmul.bf16.gmra.mxu0 %v1070
    %v2404 = vpop.f32.mrf.mxu0
    %v2405 = vadd.f32 %v2392, %v2404
    %v2406 = vpop.f32.mrf.mxu0
    %2407 = vdwg.mxu0
    %2408 = vmatpush.bf16.msra.mxu0 %v2105
    %2409 = vmatpush.bf16.msra.mxu0 %v2097
    %2410 = vmatpush.bf16.msra.mxu0 %v2089
    %2411 = vmatpush.bf16.msra.mxu0 %v2081
    %2412 = vmatpush.bf16.msra.mxu0 %v2073
    %2413 = vmatpush.bf16.msra.mxu0 %v2065
    %2414 = vmatpush.bf16.msra.mxu0 %v2057
    %2415 = vmatpush.bf16.msra.mxu0 %v2049
    %2416 = vmatmul.bf16.gmra.mxu0 %v1071
    %v2417 = vpop.f32.mrf.mxu0
    %v2418 = vadd.f32 %v2405, %v2417
    %v2419 = vpop.f32.mrf.mxu0
    %2420 = vdwg.mxu0
    %2421 = vmatpush.bf16.msra.mxu0 %v1914
    %2422 = vmatpush.bf16.msra.mxu0 %v1906
    %2423 = vmatpush.bf16.msra.mxu0 %v1898
    %2424 = vmatpush.bf16.msra.mxu0 %v1890
    %2425 = vmatpush.bf16.msra.mxu0 %v1882
    %2426 = vmatpush.bf16.msra.mxu0 %v1874
    %2427 = vmatpush.bf16.msra.mxu0 %v1866
    %2428 = vmatpush.bf16.msra.mxu0 %v1858
    %2429 = vmatmul.bf16.gmra.mxu0 %v1068
    %v2430 = vpop.f32.mrf.mxu0
    %v2431 = vadd.f32 %v1074, %v2430
    %v2432 = vpop.f32.mrf.mxu0
    %2433 = vdwg.mxu0
    %2434 = vmatpush.bf16.msra.mxu0 %v1978
    %2435 = vmatpush.bf16.msra.mxu0 %v1970
    %2436 = vmatpush.bf16.msra.mxu0 %v1962
    %2437 = vmatpush.bf16.msra.mxu0 %v1954
    %2438 = vmatpush.bf16.msra.mxu0 %v1946
    %2439 = vmatpush.bf16.msra.mxu0 %v1938
    %2440 = vmatpush.bf16.msra.mxu0 %v1930
    %2441 = vmatpush.bf16.msra.mxu0 %v1922
    %2442 = vmatmul.bf16.gmra.mxu0 %v1069
    %v2443 = vpop.f32.mrf.mxu0
    %v2444 = vadd.f32 %v2431, %v2443
    %v2445 = vpop.f32.mrf.mxu0
    %2446 = vdwg.mxu0
    %2447 = vmatpush.bf16.msra.mxu0 %v2042
    %2448 = vmatpush.bf16.msra.mxu0 %v2034
    %2449 = vmatpush.bf16.msra.mxu0 %v2026
    %2450 = vmatpush.bf16.msra.mxu0 %v2018
    %2451 = vmatpush.bf16.msra.mxu0 %v2010
    %2452 = vmatpush.bf16.msra.mxu0 %v2002
    %2453 = vmatpush.bf16.msra.mxu0 %v1994
    %2454 = vmatpush.bf16.msra.mxu0 %v1986
    %2455 = vmatmul.bf16.gmra.mxu0 %v1070
    %v2456 = vpop.f32.mrf.mxu0
    %v2457 = vadd.f32 %v2444, %v2456
    %v2458 = vpop.f32.mrf.mxu0
    %2459 = vdwg.mxu0
    %2460 = vmatpush.bf16.msra.mxu0 %v2106
    %2461 = vmatpush.bf16.msra.mxu0 %v2098
    %2462 = vmatpush.bf16.msra.mxu0 %v2090
    %2463 = vmatpush.bf16.msra.mxu0 %v2082
    %2464 = vmatpush.bf16.msra.mxu0 %v2074
    %2465 = vmatpush.bf16.msra.mxu0 %v2066
    %2466 = vmatpush.bf16.msra.mxu0 %v2058
    %2467 = vmatpush.bf16.msra.mxu0 %v2050
    %2468 = vmatmul.bf16.gmra.mxu0 %v1071
    %v2469 = vpop.f32.mrf.mxu0
    %v2470 = vadd.f32 %v2457, %v2469
    %v2471 = vpop.f32.mrf.mxu0
    %2472 = vdwg.mxu0
    %2473 = vmatpush.bf16.msra.mxu0 %v1915
    %2474 = vmatpush.bf16.msra.mxu0 %v1907
    %2475 = vmatpush.bf16.msra.mxu0 %v1899
    %2476 = vmatpush.bf16.msra.mxu0 %v1891
    %2477 = vmatpush.bf16.msra.mxu0 %v1883
    %2478 = vmatpush.bf16.msra.mxu0 %v1875
    %2479 = vmatpush.bf16.msra.mxu0 %v1867
    %2480 = vmatpush.bf16.msra.mxu0 %v1859
    %2481 = vmatmul.bf16.gmra.mxu0 %v1068
    %v2482 = vpop.f32.mrf.mxu0
    %v2483 = vadd.f32 %v1075, %v2482
    %v2484 = vpop.f32.mrf.mxu0
    %2485 = vdwg.mxu0
    %2486 = vmatpush.bf16.msra.mxu0 %v1979
    %2487 = vmatpush.bf16.msra.mxu0 %v1971
    %2488 = vmatpush.bf16.msra.mxu0 %v1963
    %2489 = vmatpush.bf16.msra.mxu0 %v1955
    %2490 = vmatpush.bf16.msra.mxu0 %v1947
    %2491 = vmatpush.bf16.msra.mxu0 %v1939
    %2492 = vmatpush.bf16.msra.mxu0 %v1931
    %2493 = vmatpush.bf16.msra.mxu0 %v1923
    %2494 = vmatmul.bf16.gmra.mxu0 %v1069
    %v2495 = vpop.f32.mrf.mxu0
    %v2496 = vadd.f32 %v2483, %v2495
    %v2497 = vpop.f32.mrf.mxu0
    %2498 = vdwg.mxu0
    %2499 = vmatpush.bf16.msra.mxu0 %v2043
    %2500 = vmatpush.bf16.msra.mxu0 %v2035
    %2501 = vmatpush.bf16.msra.mxu0 %v2027
    %2502 = vmatpush.bf16.msra.mxu0 %v2019
    %2503 = vmatpush.bf16.msra.mxu0 %v2011
    %2504 = vmatpush.bf16.msra.mxu0 %v2003
    %2505 = vmatpush.bf16.msra.mxu0 %v1995
    %2506 = vmatpush.bf16.msra.mxu0 %v1987
    %2507 = vmatmul.bf16.gmra.mxu0 %v1070
    %v2508 = vpop.f32.mrf.mxu0
    %v2509 = vadd.f32 %v2496, %v2508
    %v2510 = vpop.f32.mrf.mxu0
    %2511 = vdwg.mxu0
    %2512 = vmatpush.bf16.msra.mxu0 %v2107
    %2513 = vmatpush.bf16.msra.mxu0 %v2099
    %2514 = vmatpush.bf16.msra.mxu0 %v2091
    %2515 = vmatpush.bf16.msra.mxu0 %v2083
    %2516 = vmatpush.bf16.msra.mxu0 %v2075
    %2517 = vmatpush.bf16.msra.mxu0 %v2067
    %2518 = vmatpush.bf16.msra.mxu0 %v2059
    %2519 = vmatpush.bf16.msra.mxu0 %v2051
    %2520 = vmatmul.bf16.gmra.mxu0 %v1071
    %v2521 = vpop.f32.mrf.mxu0
    %v2522 = vadd.f32 %v2509, %v2521
    %v2523 = vpop.f32.mrf.mxu0
    %2524 = vdwg.mxu0
    %2525 = vmatpush.bf16.msra.mxu0 %v1916
    %2526 = vmatpush.bf16.msra.mxu0 %v1908
    %2527 = vmatpush.bf16.msra.mxu0 %v1900
    %2528 = vmatpush.bf16.msra.mxu0 %v1892
    %2529 = vmatpush.bf16.msra.mxu0 %v1884
    %2530 = vmatpush.bf16.msra.mxu0 %v1876
    %2531 = vmatpush.bf16.msra.mxu0 %v1868
    %2532 = vmatpush.bf16.msra.mxu0 %v1860
    %2533 = vmatmul.bf16.gmra.mxu0 %v1068
    %v2534 = vpop.f32.mrf.mxu0
    %v2535 = vadd.f32 %v1076, %v2534
    %v2536 = vpop.f32.mrf.mxu0
    %2537 = vdwg.mxu0
    %2538 = vmatpush.bf16.msra.mxu0 %v1980
    %2539 = vmatpush.bf16.msra.mxu0 %v1972
    %2540 = vmatpush.bf16.msra.mxu0 %v1964
    %2541 = vmatpush.bf16.msra.mxu0 %v1956
    %2542 = vmatpush.bf16.msra.mxu0 %v1948
    %2543 = vmatpush.bf16.msra.mxu0 %v1940
    %2544 = vmatpush.bf16.msra.mxu0 %v1932
    %2545 = vmatpush.bf16.msra.mxu0 %v1924
    %2546 = vmatmul.bf16.gmra.mxu0 %v1069
    %v2547 = vpop.f32.mrf.mxu0
    %v2548 = vadd.f32 %v2535, %v2547
    %v2549 = vpop.f32.mrf.mxu0
    %2550 = vdwg.mxu0
    %2551 = vmatpush.bf16.msra.mxu0 %v2044
    %2552 = vmatpush.bf16.msra.mxu0 %v2036
    %2553 = vmatpush.bf16.msra.mxu0 %v2028
    %2554 = vmatpush.bf16.msra.mxu0 %v2020
    %2555 = vmatpush.bf16.msra.mxu0 %v2012
    %2556 = vmatpush.bf16.msra.mxu0 %v2004
    %2557 = vmatpush.bf16.msra.mxu0 %v1996
    %2558 = vmatpush.bf16.msra.mxu0 %v1988
    %2559 = vmatmul.bf16.gmra.mxu0 %v1070
    %v2560 = vpop.f32.mrf.mxu0
    %v2561 = vadd.f32 %v2548, %v2560
    %v2562 = vpop.f32.mrf.mxu0
    %2563 = vdwg.mxu0
    %2564 = vmatpush.bf16.msra.mxu0 %v2108
    %2565 = vmatpush.bf16.msra.mxu0 %v2100
    %2566 = vmatpush.bf16.msra.mxu0 %v2092
    %2567 = vmatpush.bf16.msra.mxu0 %v2084
    %2568 = vmatpush.bf16.msra.mxu0 %v2076
    %2569 = vmatpush.bf16.msra.mxu0 %v2068
    %2570 = vmatpush.bf16.msra.mxu0 %v2060
    %2571 = vmatpush.bf16.msra.mxu0 %v2052
    %2572 = vmatmul.bf16.gmra.mxu0 %v1071
    %v2573 = vpop.f32.mrf.mxu0
    %v2574 = vadd.f32 %v2561, %v2573
    %v2575 = vpop.f32.mrf.mxu0
    %2576 = vdwg.mxu0
    %2577 = vmatpush.bf16.msra.mxu0 %v1917
    %2578 = vmatpush.bf16.msra.mxu0 %v1909
    %2579 = vmatpush.bf16.msra.mxu0 %v1901
    %2580 = vmatpush.bf16.msra.mxu0 %v1893
    %2581 = vmatpush.bf16.msra.mxu0 %v1885
    %2582 = vmatpush.bf16.msra.mxu0 %v1877
    %2583 = vmatpush.bf16.msra.mxu0 %v1869
    %2584 = vmatpush.bf16.msra.mxu0 %v1861
    %2585 = vmatmul.bf16.gmra.mxu0 %v1068
    %v2586 = vpop.f32.mrf.mxu0
    %v2587 = vadd.f32 %v1077, %v2586
    %v2588 = vpop.f32.mrf.mxu0
    %2589 = vdwg.mxu0
    %2590 = vmatpush.bf16.msra.mxu0 %v1981
    %2591 = vmatpush.bf16.msra.mxu0 %v1973
    %2592 = vmatpush.bf16.msra.mxu0 %v1965
    %2593 = vmatpush.bf16.msra.mxu0 %v1957
    %2594 = vmatpush.bf16.msra.mxu0 %v1949
    %2595 = vmatpush.bf16.msra.mxu0 %v1941
    %2596 = vmatpush.bf16.msra.mxu0 %v1933
    %2597 = vmatpush.bf16.msra.mxu0 %v1925
    %2598 = vmatmul.bf16.gmra.mxu0 %v1069
    %v2599 = vpop.f32.mrf.mxu0
    %v2600 = vadd.f32 %v2587, %v2599
    %v2601 = vpop.f32.mrf.mxu0
    %2602 = vdwg.mxu0
    %2603 = vmatpush.bf16.msra.mxu0 %v2045
    %2604 = vmatpush.bf16.msra.mxu0 %v2037
    %2605 = vmatpush.bf16.msra.mxu0 %v2029
    %2606 = vmatpush.bf16.msra.mxu0 %v2021
    %2607 = vmatpush.bf16.msra.mxu0 %v2013
    %2608 = vmatpush.bf16.msra.mxu0 %v2005
    %2609 = vmatpush.bf16.msra.mxu0 %v1997
    %2610 = vmatpush.bf16.msra.mxu0 %v1989
    %2611 = vmatmul.bf16.gmra.mxu0 %v1070
    %v2612 = vpop.f32.mrf.mxu0
    %v2613 = vadd.f32 %v2600, %v2612
    %v2614 = vpop.f32.mrf.mxu0
    %2615 = vdwg.mxu0
    %2616 = vmatpush.bf16.msra.mxu0 %v2109
    %2617 = vmatpush.bf16.msra.mxu0 %v2101
    %2618 = vmatpush.bf16.msra.mxu0 %v2093
    %2619 = vmatpush.bf16.msra.mxu0 %v2085
    %2620 = vmatpush.bf16.msra.mxu0 %v2077
    %2621 = vmatpush.bf16.msra.mxu0 %v2069
    %2622 = vmatpush.bf16.msra.mxu0 %v2061
    %2623 = vmatpush.bf16.msra.mxu0 %v2053
    %2624 = vmatmul.bf16.gmra.mxu0 %v1071
    %v2625 = vpop.f32.mrf.mxu0
    %v2626 = vadd.f32 %v2613, %v2625
    %v2627 = vpop.f32.mrf.mxu0
    %2628 = vdwg.mxu0
    %2629 = vmatpush.bf16.msra.mxu0 %v1918
    %2630 = vmatpush.bf16.msra.mxu0 %v1910
    %2631 = vmatpush.bf16.msra.mxu0 %v1902
    %2632 = vmatpush.bf16.msra.mxu0 %v1894
    %2633 = vmatpush.bf16.msra.mxu0 %v1886
    %2634 = vmatpush.bf16.msra.mxu0 %v1878
    %2635 = vmatpush.bf16.msra.mxu0 %v1870
    %2636 = vmatpush.bf16.msra.mxu0 %v1862
    %2637 = vmatmul.bf16.gmra.mxu0 %v1068
    %v2638 = vpop.f32.mrf.mxu0
    %v2639 = vadd.f32 %v1078, %v2638
    %v2640 = vpop.f32.mrf.mxu0
    %2641 = vdwg.mxu0
    %2642 = vmatpush.bf16.msra.mxu0 %v1982
    %2643 = vmatpush.bf16.msra.mxu0 %v1974
    %2644 = vmatpush.bf16.msra.mxu0 %v1966
    %2645 = vmatpush.bf16.msra.mxu0 %v1958
    %2646 = vmatpush.bf16.msra.mxu0 %v1950
    %2647 = vmatpush.bf16.msra.mxu0 %v1942
    %2648 = vmatpush.bf16.msra.mxu0 %v1934
    %2649 = vmatpush.bf16.msra.mxu0 %v1926
    %2650 = vmatmul.bf16.gmra.mxu0 %v1069
    %v2651 = vpop.f32.mrf.mxu0
    %v2652 = vadd.f32 %v2639, %v2651
    %v2653 = vpop.f32.mrf.mxu0
    %2654 = vdwg.mxu0
    %2655 = vmatpush.bf16.msra.mxu0 %v2046
    %2656 = vmatpush.bf16.msra.mxu0 %v2038
    %2657 = vmatpush.bf16.msra.mxu0 %v2030
    %2658 = vmatpush.bf16.msra.mxu0 %v2022
    %2659 = vmatpush.bf16.msra.mxu0 %v2014
    %2660 = vmatpush.bf16.msra.mxu0 %v2006
    %2661 = vmatpush.bf16.msra.mxu0 %v1998
    %2662 = vmatpush.bf16.msra.mxu0 %v1990
    %2663 = vmatmul.bf16.gmra.mxu0 %v1070
    %v2664 = vpop.f32.mrf.mxu0
    %v2665 = vadd.f32 %v2652, %v2664
    %v2666 = vpop.f32.mrf.mxu0
    %2667 = vdwg.mxu0
    %2668 = vmatpush.bf16.msra.mxu0 %v2110
    %2669 = vmatpush.bf16.msra.mxu0 %v2102
    %2670 = vmatpush.bf16.msra.mxu0 %v2094
    %2671 = vmatpush.bf16.msra.mxu0 %v2086
    %2672 = vmatpush.bf16.msra.mxu0 %v2078
    %2673 = vmatpush.bf16.msra.mxu0 %v2070
    %2674 = vmatpush.bf16.msra.mxu0 %v2062
    %2675 = vmatpush.bf16.msra.mxu0 %v2054
    %2676 = vmatmul.bf16.gmra.mxu0 %v1071
    %v2677 = vpop.f32.mrf.mxu0
    %v2678 = vadd.f32 %v2665, %v2677
    %v2679 = vpop.f32.mrf.mxu0
    %2680 = vdwg.mxu0
    %2681 = vmatpush.bf16.msra.mxu0 %v1919
    %2682 = vmatpush.bf16.msra.mxu0 %v1911
    %2683 = vmatpush.bf16.msra.mxu0 %v1903
    %2684 = vmatpush.bf16.msra.mxu0 %v1895
    %2685 = vmatpush.bf16.msra.mxu0 %v1887
    %2686 = vmatpush.bf16.msra.mxu0 %v1879
    %2687 = vmatpush.bf16.msra.mxu0 %v1871
    %2688 = vmatpush.bf16.msra.mxu0 %v1863
    %2689 = vmatmul.bf16.gmra.mxu0 %v1068
    %v2690 = vpop.f32.mrf.mxu0
    %v2691 = vadd.f32 %v1079, %v2690
    %v2692 = vpop.f32.mrf.mxu0
    %2693 = vdwg.mxu0
    %2694 = vmatpush.bf16.msra.mxu0 %v1983
    %2695 = vmatpush.bf16.msra.mxu0 %v1975
    %2696 = vmatpush.bf16.msra.mxu0 %v1967
    %2697 = vmatpush.bf16.msra.mxu0 %v1959
    %2698 = vmatpush.bf16.msra.mxu0 %v1951
    %2699 = vmatpush.bf16.msra.mxu0 %v1943
    %2700 = vmatpush.bf16.msra.mxu0 %v1935
    %2701 = vmatpush.bf16.msra.mxu0 %v1927
    %2702 = vmatmul.bf16.gmra.mxu0 %v1069
    %v2703 = vpop.f32.mrf.mxu0
    %v2704 = vadd.f32 %v2691, %v2703
    %v2705 = vpop.f32.mrf.mxu0
    %2706 = vdwg.mxu0
    %2707 = vmatpush.bf16.msra.mxu0 %v2047
    %2708 = vmatpush.bf16.msra.mxu0 %v2039
    %2709 = vmatpush.bf16.msra.mxu0 %v2031
    %2710 = vmatpush.bf16.msra.mxu0 %v2023
    %2711 = vmatpush.bf16.msra.mxu0 %v2015
    %2712 = vmatpush.bf16.msra.mxu0 %v2007
    %2713 = vmatpush.bf16.msra.mxu0 %v1999
    %2714 = vmatpush.bf16.msra.mxu0 %v1991
    %2715 = vmatmul.bf16.gmra.mxu0 %v1070
    %v2716 = vpop.f32.mrf.mxu0
    %v2717 = vadd.f32 %v2704, %v2716
    %v2718 = vpop.f32.mrf.mxu0
    %2719 = vdwg.mxu0
    %2720 = vmatpush.bf16.msra.mxu0 %v2111
    %2721 = vmatpush.bf16.msra.mxu0 %v2103
    %2722 = vmatpush.bf16.msra.mxu0 %v2095
    %2723 = vmatpush.bf16.msra.mxu0 %v2087
    %2724 = vmatpush.bf16.msra.mxu0 %v2079
    %2725 = vmatpush.bf16.msra.mxu0 %v2071
    %2726 = vmatpush.bf16.msra.mxu0 %v2063
    %2727 = vmatpush.bf16.msra.mxu0 %v2055
    %2728 = vmatmul.bf16.gmra.mxu0 %v1071
    %v2729 = vpop.f32.mrf.mxu0
    %v2730 = vadd.f32 %v2717, %v2729
    %v2731 = vpop.f32.mrf.mxu0
    %2732 = vdwg.mxu0
    %2733 = vmatpush.bf16.msra.mxu0 %v1920
    %2734 = vmatpush.bf16.msra.mxu0 %v1912
    %2735 = vmatpush.bf16.msra.mxu0 %v1904
    %2736 = vmatpush.bf16.msra.mxu0 %v1896
    %2737 = vmatpush.bf16.msra.mxu0 %v1888
    %2738 = vmatpush.bf16.msra.mxu0 %v1880
    %2739 = vmatpush.bf16.msra.mxu0 %v1872
    %2740 = vmatpush.bf16.msra.mxu0 %v1864
    %2741 = vmatmul.bf16.gmra.mxu0 %v1068
    %v2742 = vpop.f32.mrf.mxu0
    %v2743 = vadd.f32 %v1080, %v2742
    %v2744 = vpop.f32.mrf.mxu0
    %2745 = vdwg.mxu0
    %2746 = vmatpush.bf16.msra.mxu0 %v1984
    %2747 = vmatpush.bf16.msra.mxu0 %v1976
    %2748 = vmatpush.bf16.msra.mxu0 %v1968
    %2749 = vmatpush.bf16.msra.mxu0 %v1960
    %2750 = vmatpush.bf16.msra.mxu0 %v1952
    %2751 = vmatpush.bf16.msra.mxu0 %v1944
    %2752 = vmatpush.bf16.msra.mxu0 %v1936
    %2753 = vmatpush.bf16.msra.mxu0 %v1928
    %2754 = vmatmul.bf16.gmra.mxu0 %v1069
    %v2755 = vpop.f32.mrf.mxu0
    %v2756 = vadd.f32 %v2743, %v2755
    %v2757 = vpop.f32.mrf.mxu0
    %2758 = vdwg.mxu0
    %2759 = vmatpush.bf16.msra.mxu0 %v2048
    %2760 = vmatpush.bf16.msra.mxu0 %v2040
    %2761 = vmatpush.bf16.msra.mxu0 %v2032
    %2762 = vmatpush.bf16.msra.mxu0 %v2024
    %2763 = vmatpush.bf16.msra.mxu0 %v2016
    %2764 = vmatpush.bf16.msra.mxu0 %v2008
    %2765 = vmatpush.bf16.msra.mxu0 %v2000
    %2766 = vmatpush.bf16.msra.mxu0 %v1992
    %2767 = vmatmul.bf16.gmra.mxu0 %v1070
    %v2768 = vpop.f32.mrf.mxu0
    %v2769 = vadd.f32 %v2756, %v2768
    %v2770 = vpop.f32.mrf.mxu0
    %2771 = vdwg.mxu0
    %2772 = vmatpush.bf16.msra.mxu0 %v2112
    %2773 = vmatpush.bf16.msra.mxu0 %v2104
    %2774 = vmatpush.bf16.msra.mxu0 %v2096
    %2775 = vmatpush.bf16.msra.mxu0 %v2088
    %2776 = vmatpush.bf16.msra.mxu0 %v2080
    %2777 = vmatpush.bf16.msra.mxu0 %v2072
    %2778 = vmatpush.bf16.msra.mxu0 %v2064
    %2779 = vmatpush.bf16.msra.mxu0 %v2056
    %2780 = vmatmul.bf16.gmra.mxu0 %v1071
    %v2781 = vpop.f32.mrf.mxu0
    %v2782 = vadd.f32 %v2769, %v2781
    %v2783 = vpop.f32.mrf.mxu0
    %2784 = vdwg.mxu0
    %v2785 = vmul.f32 %v2418, 0.01
    %v2786 = vmul.f32 %v2470, 0.01
    %v2787 = vmul.f32 %v2522, 0.01
    %v2788 = vmul.f32 %v2574, 0.01
    %v2789 = vmul.f32 %v2626, 0.01
    %v2790 = vmul.f32 %v2678, 0.01
    %v2791 = vmul.f32 %v2730, 0.01
    %v2792 = vmul.f32 %v2782, 0.01
    %v2793 = vmax.f32 %v2418, %v2785
    %v2794 = vmax.f32 %v2470, %v2786
    %v2795 = vmax.f32 %v2522, %v2787
    %v2796 = vmax.f32 %v2574, %v2788
    %v2797 = vmax.f32 %v2626, %v2789
    %v2798 = vmax.f32 %v2678, %v2790
    %v2799 = vmax.f32 %v2730, %v2791
    %v2800 = vmax.f32 %v2782, %v2792
    %v2801 = vld [vmem:[#allocation14] sm:$0xff]
    %v2802 = vld [vmem:[#allocation14 + $0x8] sm:$0xff]
    %v2803 = vld [vmem:[#allocation14 + $0x10] sm:$0xff]
    %v2804 = vld [vmem:[#allocation14 + $0x18] sm:$0xff]
    %v2805 = vld [vmem:[#allocation14 + $0x20] sm:$0xff]
    %v2806 = vld [vmem:[#allocation14 + $0x28] sm:$0xff]
    %v2807 = vld [vmem:[#allocation14 + $0x30] sm:$0xff]
    %v2808 = vld [vmem:[#allocation14 + $0x38] sm:$0xff]
    %v2809 = vld [vmem:[#allocation14 + $0x40] sm:$0xff]
    %v2810 = vld [vmem:[#allocation14 + $0x48] sm:$0xff]
    %v2811 = vld [vmem:[#allocation14 + $0x50] sm:$0xff]
    %v2812 = vld [vmem:[#allocation14 + $0x58] sm:$0xff]
    %v2813 = vld [vmem:[#allocation14 + $0x60] sm:$0xff]
    %v2814 = vld [vmem:[#allocation14 + $0x68] sm:$0xff]
    %v2815 = vld [vmem:[#allocation14 + $0x70] sm:$0xff]
    %v2816 = vld [vmem:[#allocation14 + $0x78] sm:$0xff]
    %v2817 = vld [vmem:[#allocation14 + $0x80] sm:$0xff]
    %v2818 = vld [vmem:[#allocation14 + $0x88] sm:$0xff]
    %v2819 = vld [vmem:[#allocation14 + $0x90] sm:$0xff]
    %v2820 = vld [vmem:[#allocation14 + $0x98] sm:$0xff]
    %v2821 = vld [vmem:[#allocation14 + $0xa0] sm:$0xff]
    %v2822 = vld [vmem:[#allocation14 + $0xa8] sm:$0xff]
    %v2823 = vld [vmem:[#allocation14 + $0xb0] sm:$0xff]
    %v2824 = vld [vmem:[#allocation14 + $0xb8] sm:$0xff]
    %v2825 = vld [vmem:[#allocation14 + $0xc0] sm:$0xff]
    %v2826 = vld [vmem:[#allocation14 + $0xc8] sm:$0xff]
    %v2827 = vld [vmem:[#allocation14 + $0xd0] sm:$0xff]
    %v2828 = vld [vmem:[#allocation14 + $0xd8] sm:$0xff]
    %v2829 = vld [vmem:[#allocation14 + $0xe0] sm:$0xff]
    %v2830 = vld [vmem:[#allocation14 + $0xe8] sm:$0xff]
    %v2831 = vld [vmem:[#allocation14 + $0xf0] sm:$0xff]
    %v2832 = vld [vmem:[#allocation14 + $0xf8] sm:$0xff]
    %v2833 = vld [vmem:[#allocation14 + $0x100] sm:$0xff]
    %v2834 = vld [vmem:[#allocation14 + $0x108] sm:$0xff]
    %v2835 = vld [vmem:[#allocation14 + $0x110] sm:$0xff]
    %v2836 = vld [vmem:[#allocation14 + $0x118] sm:$0xff]
    %v2837 = vld [vmem:[#allocation14 + $0x120] sm:$0xff]
    %v2838 = vld [vmem:[#allocation14 + $0x128] sm:$0xff]
    %v2839 = vld [vmem:[#allocation14 + $0x130] sm:$0xff]
    %v2840 = vld [vmem:[#allocation14 + $0x138] sm:$0xff]
    %v2841 = vld [vmem:[#allocation14 + $0x140] sm:$0xff]
    %v2842 = vld [vmem:[#allocation14 + $0x148] sm:$0xff]
    %v2843 = vld [vmem:[#allocation14 + $0x150] sm:$0xff]
    %v2844 = vld [vmem:[#allocation14 + $0x158] sm:$0xff]
    %v2845 = vld [vmem:[#allocation14 + $0x160] sm:$0xff]
    %v2846 = vld [vmem:[#allocation14 + $0x168] sm:$0xff]
    %v2847 = vld [vmem:[#allocation14 + $0x170] sm:$0xff]
    %v2848 = vld [vmem:[#allocation14 + $0x178] sm:$0xff]
    %v2849 = vld [vmem:[#allocation14 + $0x180] sm:$0xff]
    %v2850 = vld [vmem:[#allocation14 + $0x188] sm:$0xff]
    %v2851 = vld [vmem:[#allocation14 + $0x190] sm:$0xff]
    %v2852 = vld [vmem:[#allocation14 + $0x198] sm:$0xff]
    %v2853 = vld [vmem:[#allocation14 + $0x1a0] sm:$0xff]
    %v2854 = vld [vmem:[#allocation14 + $0x1a8] sm:$0xff]
    %v2855 = vld [vmem:[#allocation14 + $0x1b0] sm:$0xff]
    %v2856 = vld [vmem:[#allocation14 + $0x1b8] sm:$0xff]
    %v2857 = vld [vmem:[#allocation14 + $0x1c0] sm:$0xff]
    %v2858 = vld [vmem:[#allocation14 + $0x1c8] sm:$0xff]
    %v2859 = vld [vmem:[#allocation14 + $0x1d0] sm:$0xff]
    %v2860 = vld [vmem:[#allocation14 + $0x1d8] sm:$0xff]
    %v2861 = vld [vmem:[#allocation14 + $0x1e0] sm:$0xff]
    %v2862 = vld [vmem:[#allocation14 + $0x1e8] sm:$0xff]
    %v2863 = vld [vmem:[#allocation14 + $0x1f0] sm:$0xff]
    %v2864 = vld [vmem:[#allocation14 + $0x1f8] sm:$0xff]
    %v2865 = vld [vmem:[#allocation14 + $0x200] sm:$0xff]
    %v2866 = vld [vmem:[#allocation14 + $0x208] sm:$0xff]
    %v2867 = vld [vmem:[#allocation14 + $0x210] sm:$0xff]
    %v2868 = vld [vmem:[#allocation14 + $0x218] sm:$0xff]
    %v2869 = vld [vmem:[#allocation14 + $0x220] sm:$0xff]
    %v2870 = vld [vmem:[#allocation14 + $0x228] sm:$0xff]
    %v2871 = vld [vmem:[#allocation14 + $0x230] sm:$0xff]
    %v2872 = vld [vmem:[#allocation14 + $0x238] sm:$0xff]
    %v2873 = vld [vmem:[#allocation14 + $0x240] sm:$0xff]
    %v2874 = vld [vmem:[#allocation14 + $0x248] sm:$0xff]
    %v2875 = vld [vmem:[#allocation14 + $0x250] sm:$0xff]
    %v2876 = vld [vmem:[#allocation14 + $0x258] sm:$0xff]
    %v2877 = vld [vmem:[#allocation14 + $0x260] sm:$0xff]
    %v2878 = vld [vmem:[#allocation14 + $0x268] sm:$0xff]
    %v2879 = vld [vmem:[#allocation14 + $0x270] sm:$0xff]
    %v2880 = vld [vmem:[#allocation14 + $0x278] sm:$0xff]
    %v2881 = vld [vmem:[#allocation14 + $0x280] sm:$0xff]
    %v2882 = vld [vmem:[#allocation14 + $0x288] sm:$0xff]
    %v2883 = vld [vmem:[#allocation14 + $0x290] sm:$0xff]
    %v2884 = vld [vmem:[#allocation14 + $0x298] sm:$0xff]
    %v2885 = vld [vmem:[#allocation14 + $0x2a0] sm:$0xff]
    %v2886 = vld [vmem:[#allocation14 + $0x2a8] sm:$0xff]
    %v2887 = vld [vmem:[#allocation14 + $0x2b0] sm:$0xff]
    %v2888 = vld [vmem:[#allocation14 + $0x2b8] sm:$0xff]
    %v2889 = vld [vmem:[#allocation14 + $0x2c0] sm:$0xff]
    %v2890 = vld [vmem:[#allocation14 + $0x2c8] sm:$0xff]
    %v2891 = vld [vmem:[#allocation14 + $0x2d0] sm:$0xff]
    %v2892 = vld [vmem:[#allocation14 + $0x2d8] sm:$0xff]
    %v2893 = vld [vmem:[#allocation14 + $0x2e0] sm:$0xff]
    %v2894 = vld [vmem:[#allocation14 + $0x2e8] sm:$0xff]
    %v2895 = vld [vmem:[#allocation14 + $0x2f0] sm:$0xff]
    %v2896 = vld [vmem:[#allocation14 + $0x2f8] sm:$0xff]
    %v2897 = vld [vmem:[#allocation14 + $0x300] sm:$0xff]
    %v2898 = vld [vmem:[#allocation14 + $0x308] sm:$0xff]
    %v2899 = vld [vmem:[#allocation14 + $0x310] sm:$0xff]
    %v2900 = vld [vmem:[#allocation14 + $0x318] sm:$0xff]
    %v2901 = vld [vmem:[#allocation14 + $0x320] sm:$0xff]
    %v2902 = vld [vmem:[#allocation14 + $0x328] sm:$0xff]
    %v2903 = vld [vmem:[#allocation14 + $0x330] sm:$0xff]
    %v2904 = vld [vmem:[#allocation14 + $0x338] sm:$0xff]
    %v2905 = vld [vmem:[#allocation14 + $0x340] sm:$0xff]
    %v2906 = vld [vmem:[#allocation14 + $0x348] sm:$0xff]
    %v2907 = vld [vmem:[#allocation14 + $0x350] sm:$0xff]
    %v2908 = vld [vmem:[#allocation14 + $0x358] sm:$0xff]
    %v2909 = vld [vmem:[#allocation14 + $0x360] sm:$0xff]
    %v2910 = vld [vmem:[#allocation14 + $0x368] sm:$0xff]
    %v2911 = vld [vmem:[#allocation14 + $0x370] sm:$0xff]
    %v2912 = vld [vmem:[#allocation14 + $0x378] sm:$0xff]
    %v2913 = vld [vmem:[#allocation14 + $0x380] sm:$0xff]
    %v2914 = vld [vmem:[#allocation14 + $0x388] sm:$0xff]
    %v2915 = vld [vmem:[#allocation14 + $0x390] sm:$0xff]
    %v2916 = vld [vmem:[#allocation14 + $0x398] sm:$0xff]
    %v2917 = vld [vmem:[#allocation14 + $0x3a0] sm:$0xff]
    %v2918 = vld [vmem:[#allocation14 + $0x3a8] sm:$0xff]
    %v2919 = vld [vmem:[#allocation14 + $0x3b0] sm:$0xff]
    %v2920 = vld [vmem:[#allocation14 + $0x3b8] sm:$0xff]
    %v2921 = vld [vmem:[#allocation14 + $0x3c0] sm:$0xff]
    %v2922 = vld [vmem:[#allocation14 + $0x3c8] sm:$0xff]
    %v2923 = vld [vmem:[#allocation14 + $0x3d0] sm:$0xff]
    %v2924 = vld [vmem:[#allocation14 + $0x3d8] sm:$0xff]
    %v2925 = vld [vmem:[#allocation14 + $0x3e0] sm:$0xff]
    %v2926 = vld [vmem:[#allocation14 + $0x3e8] sm:$0xff]
    %v2927 = vld [vmem:[#allocation14 + $0x3f0] sm:$0xff]
    %v2928 = vld [vmem:[#allocation14 + $0x3f8] sm:$0xff]
    %v2929 = vld [vmem:[#allocation14 + $0x400] sm:$0xff]
    %v2930 = vld [vmem:[#allocation14 + $0x408] sm:$0xff]
    %v2931 = vld [vmem:[#allocation14 + $0x410] sm:$0xff]
    %v2932 = vld [vmem:[#allocation14 + $0x418] sm:$0xff]
    %v2933 = vld [vmem:[#allocation14 + $0x420] sm:$0xff]
    %v2934 = vld [vmem:[#allocation14 + $0x428] sm:$0xff]
    %v2935 = vld [vmem:[#allocation14 + $0x430] sm:$0xff]
    %v2936 = vld [vmem:[#allocation14 + $0x438] sm:$0xff]
    %v2937 = vld [vmem:[#allocation14 + $0x440] sm:$0xff]
    %v2938 = vld [vmem:[#allocation14 + $0x448] sm:$0xff]
    %v2939 = vld [vmem:[#allocation14 + $0x450] sm:$0xff]
    %v2940 = vld [vmem:[#allocation14 + $0x458] sm:$0xff]
    %v2941 = vld [vmem:[#allocation14 + $0x460] sm:$0xff]
    %v2942 = vld [vmem:[#allocation14 + $0x468] sm:$0xff]
    %v2943 = vld [vmem:[#allocation14 + $0x470] sm:$0xff]
    %v2944 = vld [vmem:[#allocation14 + $0x478] sm:$0xff]
    %v2945 = vld [vmem:[#allocation14 + $0x480] sm:$0xff]
    %v2946 = vld [vmem:[#allocation14 + $0x488] sm:$0xff]
    %v2947 = vld [vmem:[#allocation14 + $0x490] sm:$0xff]
    %v2948 = vld [vmem:[#allocation14 + $0x498] sm:$0xff]
    %v2949 = vld [vmem:[#allocation14 + $0x4a0] sm:$0xff]
    %v2950 = vld [vmem:[#allocation14 + $0x4a8] sm:$0xff]
    %v2951 = vld [vmem:[#allocation14 + $0x4b0] sm:$0xff]
    %v2952 = vld [vmem:[#allocation14 + $0x4b8] sm:$0xff]
    %v2953 = vld [vmem:[#allocation14 + $0x4c0] sm:$0xff]
    %v2954 = vld [vmem:[#allocation14 + $0x4c8] sm:$0xff]
    %v2955 = vld [vmem:[#allocation14 + $0x4d0] sm:$0xff]
    %v2956 = vld [vmem:[#allocation14 + $0x4d8] sm:$0xff]
    %v2957 = vld [vmem:[#allocation14 + $0x4e0] sm:$0xff]
    %v2958 = vld [vmem:[#allocation14 + $0x4e8] sm:$0xff]
    %v2959 = vld [vmem:[#allocation14 + $0x4f0] sm:$0xff]
    %v2960 = vld [vmem:[#allocation14 + $0x4f8] sm:$0xff]
    %v2961 = vld [vmem:[#allocation14 + $0x500] sm:$0xff]
    %v2962 = vld [vmem:[#allocation14 + $0x508] sm:$0xff]
    %v2963 = vld [vmem:[#allocation14 + $0x510] sm:$0xff]
    %v2964 = vld [vmem:[#allocation14 + $0x518] sm:$0xff]
    %v2965 = vld [vmem:[#allocation14 + $0x520] sm:$0xff]
    %v2966 = vld [vmem:[#allocation14 + $0x528] sm:$0xff]
    %v2967 = vld [vmem:[#allocation14 + $0x530] sm:$0xff]
    %v2968 = vld [vmem:[#allocation14 + $0x538] sm:$0xff]
    %v2969 = vld [vmem:[#allocation14 + $0x540] sm:$0xff]
    %v2970 = vld [vmem:[#allocation14 + $0x548] sm:$0xff]
    %v2971 = vld [vmem:[#allocation14 + $0x550] sm:$0xff]
    %v2972 = vld [vmem:[#allocation14 + $0x558] sm:$0xff]
    %v2973 = vld [vmem:[#allocation14 + $0x560] sm:$0xff]
    %v2974 = vld [vmem:[#allocation14 + $0x568] sm:$0xff]
    %v2975 = vld [vmem:[#allocation14 + $0x570] sm:$0xff]
    %v2976 = vld [vmem:[#allocation14 + $0x578] sm:$0xff]
    %v2977 = vld [vmem:[#allocation14 + $0x580] sm:$0xff]
    %v2978 = vld [vmem:[#allocation14 + $0x588] sm:$0xff]
    %v2979 = vld [vmem:[#allocation14 + $0x590] sm:$0xff]
    %v2980 = vld [vmem:[#allocation14 + $0x598] sm:$0xff]
    %v2981 = vld [vmem:[#allocation14 + $0x5a0] sm:$0xff]
    %v2982 = vld [vmem:[#allocation14 + $0x5a8] sm:$0xff]
    %v2983 = vld [vmem:[#allocation14 + $0x5b0] sm:$0xff]
    %v2984 = vld [vmem:[#allocation14 + $0x5b8] sm:$0xff]
    %v2985 = vld [vmem:[#allocation14 + $0x5c0] sm:$0xff]
    %v2986 = vld [vmem:[#allocation14 + $0x5c8] sm:$0xff]
    %v2987 = vld [vmem:[#allocation14 + $0x5d0] sm:$0xff]
    %v2988 = vld [vmem:[#allocation14 + $0x5d8] sm:$0xff]
    %v2989 = vld [vmem:[#allocation14 + $0x5e0] sm:$0xff]
    %v2990 = vld [vmem:[#allocation14 + $0x5e8] sm:$0xff]
    %v2991 = vld [vmem:[#allocation14 + $0x5f0] sm:$0xff]
    %v2992 = vld [vmem:[#allocation14 + $0x5f8] sm:$0xff]
    %v2993 = vld [vmem:[#allocation14 + $0x600] sm:$0xff]
    %v2994 = vld [vmem:[#allocation14 + $0x608] sm:$0xff]
    %v2995 = vld [vmem:[#allocation14 + $0x610] sm:$0xff]
    %v2996 = vld [vmem:[#allocation14 + $0x618] sm:$0xff]
    %v2997 = vld [vmem:[#allocation14 + $0x620] sm:$0xff]
    %v2998 = vld [vmem:[#allocation14 + $0x628] sm:$0xff]
    %v2999 = vld [vmem:[#allocation14 + $0x630] sm:$0xff]
    %v3000 = vld [vmem:[#allocation14 + $0x638] sm:$0xff]
    %v3001 = vld [vmem:[#allocation14 + $0x640] sm:$0xff]
    %v3002 = vld [vmem:[#allocation14 + $0x648] sm:$0xff]
    %v3003 = vld [vmem:[#allocation14 + $0x650] sm:$0xff]
    %v3004 = vld [vmem:[#allocation14 + $0x658] sm:$0xff]
    %v3005 = vld [vmem:[#allocation14 + $0x660] sm:$0xff]
    %v3006 = vld [vmem:[#allocation14 + $0x668] sm:$0xff]
    %v3007 = vld [vmem:[#allocation14 + $0x670] sm:$0xff]
    %v3008 = vld [vmem:[#allocation14 + $0x678] sm:$0xff]
    %v3009 = vld [vmem:[#allocation14 + $0x680] sm:$0xff]
    %v3010 = vld [vmem:[#allocation14 + $0x688] sm:$0xff]
    %v3011 = vld [vmem:[#allocation14 + $0x690] sm:$0xff]
    %v3012 = vld [vmem:[#allocation14 + $0x698] sm:$0xff]
    %v3013 = vld [vmem:[#allocation14 + $0x6a0] sm:$0xff]
    %v3014 = vld [vmem:[#allocation14 + $0x6a8] sm:$0xff]
    %v3015 = vld [vmem:[#allocation14 + $0x6b0] sm:$0xff]
    %v3016 = vld [vmem:[#allocation14 + $0x6b8] sm:$0xff]
    %v3017 = vld [vmem:[#allocation14 + $0x6c0] sm:$0xff]
    %v3018 = vld [vmem:[#allocation14 + $0x6c8] sm:$0xff]
    %v3019 = vld [vmem:[#allocation14 + $0x6d0] sm:$0xff]
    %v3020 = vld [vmem:[#allocation14 + $0x6d8] sm:$0xff]
    %v3021 = vld [vmem:[#allocation14 + $0x6e0] sm:$0xff]
    %v3022 = vld [vmem:[#allocation14 + $0x6e8] sm:$0xff]
    %v3023 = vld [vmem:[#allocation14 + $0x6f0] sm:$0xff]
    %v3024 = vld [vmem:[#allocation14 + $0x6f8] sm:$0xff]
    %v3025 = vld [vmem:[#allocation14 + $0x700] sm:$0xff]
    %v3026 = vld [vmem:[#allocation14 + $0x708] sm:$0xff]
    %v3027 = vld [vmem:[#allocation14 + $0x710] sm:$0xff]
    %v3028 = vld [vmem:[#allocation14 + $0x718] sm:$0xff]
    %v3029 = vld [vmem:[#allocation14 + $0x720] sm:$0xff]
    %v3030 = vld [vmem:[#allocation14 + $0x728] sm:$0xff]
    %v3031 = vld [vmem:[#allocation14 + $0x730] sm:$0xff]
    %v3032 = vld [vmem:[#allocation14 + $0x738] sm:$0xff]
    %v3033 = vld [vmem:[#allocation14 + $0x740] sm:$0xff]
    %v3034 = vld [vmem:[#allocation14 + $0x748] sm:$0xff]
    %v3035 = vld [vmem:[#allocation14 + $0x750] sm:$0xff]
    %v3036 = vld [vmem:[#allocation14 + $0x758] sm:$0xff]
    %v3037 = vld [vmem:[#allocation14 + $0x760] sm:$0xff]
    %v3038 = vld [vmem:[#allocation14 + $0x768] sm:$0xff]
    %v3039 = vld [vmem:[#allocation14 + $0x770] sm:$0xff]
    %v3040 = vld [vmem:[#allocation14 + $0x778] sm:$0xff]
    %v3041 = vld [vmem:[#allocation14 + $0x780] sm:$0xff]
    %v3042 = vld [vmem:[#allocation14 + $0x788] sm:$0xff]
    %v3043 = vld [vmem:[#allocation14 + $0x790] sm:$0xff]
    %v3044 = vld [vmem:[#allocation14 + $0x798] sm:$0xff]
    %v3045 = vld [vmem:[#allocation14 + $0x7a0] sm:$0xff]
    %v3046 = vld [vmem:[#allocation14 + $0x7a8] sm:$0xff]
    %v3047 = vld [vmem:[#allocation14 + $0x7b0] sm:$0xff]
    %v3048 = vld [vmem:[#allocation14 + $0x7b8] sm:$0xff]
    %v3049 = vld [vmem:[#allocation14 + $0x7c0] sm:$0xff]
    %v3050 = vld [vmem:[#allocation14 + $0x7c8] sm:$0xff]
    %v3051 = vld [vmem:[#allocation14 + $0x7d0] sm:$0xff]
    %v3052 = vld [vmem:[#allocation14 + $0x7d8] sm:$0xff]
    %v3053 = vld [vmem:[#allocation14 + $0x7e0] sm:$0xff]
    %v3054 = vld [vmem:[#allocation14 + $0x7e8] sm:$0xff]
    %v3055 = vld [vmem:[#allocation14 + $0x7f0] sm:$0xff]
    %v3056 = vld [vmem:[#allocation14 + $0x7f8] sm:$0xff]
    %v3057 = vld [vmem:[%s8] sm:$0xf]
    %v3058 = vpack.c.bf16 %v2793, %v2793
    %v3059 = vpack.c.bf16 %v2794, %v2794
    %v3060 = vpack.c.bf16 %v2795, %v2795
    %v3061 = vpack.c.bf16 %v2796, %v2796
    %v3062 = vpack.c.bf16 %v2797, %v2797
    %v3063 = vpack.c.bf16 %v2798, %v2798
    %v3064 = vpack.c.bf16 %v2799, %v2799
    %v3065 = vpack.c.bf16 %v2800, %v2800
    %v3067 = vperm.slane %v3057, 0
    %v3068 = vperm.slane %v3057, 1
    %v3069 = vperm.slane %v3057, 2
    %v3070 = vperm.slane %v3057, 3
    %v3331 = vunpack.c.l.b16 %v2801
    %v3332 = vunpack.c.h.b16 %v2801
    %v3333 = vunpack.c.l.b16 %v2802
    %v3334 = vunpack.c.h.b16 %v2802
    %v3335 = vunpack.c.l.b16 %v2803
    %v3336 = vunpack.c.h.b16 %v2803
    %v3337 = vunpack.c.l.b16 %v2804
    %v3338 = vunpack.c.h.b16 %v2804
    %v3339 = vunpack.c.l.b16 %v2805
    %v3340 = vunpack.c.h.b16 %v2805
    %v3341 = vunpack.c.l.b16 %v2806
    %v3342 = vunpack.c.h.b16 %v2806
    %v3343 = vunpack.c.l.b16 %v2807
    %v3344 = vunpack.c.h.b16 %v2807
    %v3345 = vunpack.c.l.b16 %v2808
    %v3346 = vunpack.c.h.b16 %v2808
    %v3347 = vunpack.c.l.b16 %v2809
    %v3348 = vunpack.c.h.b16 %v2809
    %v3349 = vunpack.c.l.b16 %v2810
    %v3350 = vunpack.c.h.b16 %v2810
    %v3351 = vunpack.c.l.b16 %v2811
    %v3352 = vunpack.c.h.b16 %v2811
    %v3353 = vunpack.c.l.b16 %v2812
    %v3354 = vunpack.c.h.b16 %v2812
    %v3355 = vunpack.c.l.b16 %v2813
    %v3356 = vunpack.c.h.b16 %v2813
    %v3357 = vunpack.c.l.b16 %v2814
    %v3358 = vunpack.c.h.b16 %v2814
    %v3359 = vunpack.c.l.b16 %v2815
    %v3360 = vunpack.c.h.b16 %v2815
    %v3361 = vunpack.c.l.b16 %v2816
    %v3362 = vunpack.c.h.b16 %v2816
    %v3363 = vunpack.c.l.b16 %v2817
    %v3364 = vunpack.c.h.b16 %v2817
    %v3365 = vunpack.c.l.b16 %v2818
    %v3366 = vunpack.c.h.b16 %v2818
    %v3367 = vunpack.c.l.b16 %v2819
    %v3368 = vunpack.c.h.b16 %v2819
    %v3369 = vunpack.c.l.b16 %v2820
    %v3370 = vunpack.c.h.b16 %v2820
    %v3371 = vunpack.c.l.b16 %v2821
    %v3372 = vunpack.c.h.b16 %v2821
    %v3373 = vunpack.c.l.b16 %v2822
    %v3374 = vunpack.c.h.b16 %v2822
    %v3375 = vunpack.c.l.b16 %v2823
    %v3376 = vunpack.c.h.b16 %v2823
    %v3377 = vunpack.c.l.b16 %v2824
    %v3378 = vunpack.c.h.b16 %v2824
    %v3379 = vunpack.c.l.b16 %v2825
    %v3380 = vunpack.c.h.b16 %v2825
    %v3381 = vunpack.c.l.b16 %v2826
    %v3382 = vunpack.c.h.b16 %v2826
    %v3383 = vunpack.c.l.b16 %v2827
    %v3384 = vunpack.c.h.b16 %v2827
    %v3385 = vunpack.c.l.b16 %v2828
    %v3386 = vunpack.c.h.b16 %v2828
    %v3387 = vunpack.c.l.b16 %v2829
    %v3388 = vunpack.c.h.b16 %v2829
    %v3389 = vunpack.c.l.b16 %v2830
    %v3390 = vunpack.c.h.b16 %v2830
    %v3391 = vunpack.c.l.b16 %v2831
    %v3392 = vunpack.c.h.b16 %v2831
    %v3393 = vunpack.c.l.b16 %v2832
    %v3394 = vunpack.c.h.b16 %v2832
    %v3395 = vunpack.c.l.b16 %v2833
    %v3396 = vunpack.c.h.b16 %v2833
    %v3397 = vunpack.c.l.b16 %v2834
    %v3398 = vunpack.c.h.b16 %v2834
    %v3399 = vunpack.c.l.b16 %v2835
    %v3400 = vunpack.c.h.b16 %v2835
    %v3401 = vunpack.c.l.b16 %v2836
    %v3402 = vunpack.c.h.b16 %v2836
    %v3403 = vunpack.c.l.b16 %v2837
    %v3404 = vunpack.c.h.b16 %v2837
    %v3405 = vunpack.c.l.b16 %v2838
    %v3406 = vunpack.c.h.b16 %v2838
    %v3407 = vunpack.c.l.b16 %v2839
    %v3408 = vunpack.c.h.b16 %v2839
    %v3409 = vunpack.c.l.b16 %v2840
    %v3410 = vunpack.c.h.b16 %v2840
    %v3411 = vunpack.c.l.b16 %v2841
    %v3412 = vunpack.c.h.b16 %v2841
    %v3413 = vunpack.c.l.b16 %v2842
    %v3414 = vunpack.c.h.b16 %v2842
    %v3415 = vunpack.c.l.b16 %v2843
    %v3416 = vunpack.c.h.b16 %v2843
    %v3417 = vunpack.c.l.b16 %v2844
    %v3418 = vunpack.c.h.b16 %v2844
    %v3419 = vunpack.c.l.b16 %v2845
    %v3420 = vunpack.c.h.b16 %v2845
    %v3421 = vunpack.c.l.b16 %v2846
    %v3422 = vunpack.c.h.b16 %v2846
    %v3423 = vunpack.c.l.b16 %v2847
    %v3424 = vunpack.c.h.b16 %v2847
    %v3425 = vunpack.c.l.b16 %v2848
    %v3426 = vunpack.c.h.b16 %v2848
    %v3427 = vunpack.c.l.b16 %v2849
    %v3428 = vunpack.c.h.b16 %v2849
    %v3429 = vunpack.c.l.b16 %v2850
    %v3430 = vunpack.c.h.b16 %v2850
    %v3431 = vunpack.c.l.b16 %v2851
    %v3432 = vunpack.c.h.b16 %v2851
    %v3433 = vunpack.c.l.b16 %v2852
    %v3434 = vunpack.c.h.b16 %v2852
    %v3435 = vunpack.c.l.b16 %v2853
    %v3436 = vunpack.c.h.b16 %v2853
    %v3437 = vunpack.c.l.b16 %v2854
    %v3438 = vunpack.c.h.b16 %v2854
    %v3439 = vunpack.c.l.b16 %v2855
    %v3440 = vunpack.c.h.b16 %v2855
    %v3441 = vunpack.c.l.b16 %v2856
    %v3442 = vunpack.c.h.b16 %v2856
    %v3443 = vunpack.c.l.b16 %v2857
    %v3444 = vunpack.c.h.b16 %v2857
    %v3445 = vunpack.c.l.b16 %v2858
    %v3446 = vunpack.c.h.b16 %v2858
    %v3447 = vunpack.c.l.b16 %v2859
    %v3448 = vunpack.c.h.b16 %v2859
    %v3449 = vunpack.c.l.b16 %v2860
    %v3450 = vunpack.c.h.b16 %v2860
    %v3451 = vunpack.c.l.b16 %v2861
    %v3452 = vunpack.c.h.b16 %v2861
    %v3453 = vunpack.c.l.b16 %v2862
    %v3454 = vunpack.c.h.b16 %v2862
    %v3455 = vunpack.c.l.b16 %v2863
    %v3456 = vunpack.c.h.b16 %v2863
    %v3457 = vunpack.c.l.b16 %v2864
    %v3458 = vunpack.c.h.b16 %v2864
    %v3459 = vunpack.c.l.b16 %v2865
    %v3460 = vunpack.c.h.b16 %v2865
    %v3461 = vunpack.c.l.b16 %v2866
    %v3462 = vunpack.c.h.b16 %v2866
    %v3463 = vunpack.c.l.b16 %v2867
    %v3464 = vunpack.c.h.b16 %v2867
    %v3465 = vunpack.c.l.b16 %v2868
    %v3466 = vunpack.c.h.b16 %v2868
    %v3467 = vunpack.c.l.b16 %v2869
    %v3468 = vunpack.c.h.b16 %v2869
    %v3469 = vunpack.c.l.b16 %v2870
    %v3470 = vunpack.c.h.b16 %v2870
    %v3471 = vunpack.c.l.b16 %v2871
    %v3472 = vunpack.c.h.b16 %v2871
    %v3473 = vunpack.c.l.b16 %v2872
    %v3474 = vunpack.c.h.b16 %v2872
    %v3475 = vunpack.c.l.b16 %v2873
    %v3476 = vunpack.c.h.b16 %v2873
    %v3477 = vunpack.c.l.b16 %v2874
    %v3478 = vunpack.c.h.b16 %v2874
    %v3479 = vunpack.c.l.b16 %v2875
    %v3480 = vunpack.c.h.b16 %v2875
    %v3481 = vunpack.c.l.b16 %v2876
    %v3482 = vunpack.c.h.b16 %v2876
    %v3483 = vunpack.c.l.b16 %v2877
    %v3484 = vunpack.c.h.b16 %v2877
    %v3485 = vunpack.c.l.b16 %v2878
    %v3486 = vunpack.c.h.b16 %v2878
    %v3487 = vunpack.c.l.b16 %v2879
    %v3488 = vunpack.c.h.b16 %v2879
    %v3489 = vunpack.c.l.b16 %v2880
    %v3490 = vunpack.c.h.b16 %v2880
    %v3491 = vunpack.c.l.b16 %v2881
    %v3492 = vunpack.c.h.b16 %v2881
    %v3493 = vunpack.c.l.b16 %v2882
    %v3494 = vunpack.c.h.b16 %v2882
    %v3495 = vunpack.c.l.b16 %v2883
    %v3496 = vunpack.c.h.b16 %v2883
    %v3497 = vunpack.c.l.b16 %v2884
    %v3498 = vunpack.c.h.b16 %v2884
    %v3499 = vunpack.c.l.b16 %v2885
    %v3500 = vunpack.c.h.b16 %v2885
    %v3501 = vunpack.c.l.b16 %v2886
    %v3502 = vunpack.c.h.b16 %v2886
    %v3503 = vunpack.c.l.b16 %v2887
    %v3504 = vunpack.c.h.b16 %v2887
    %v3505 = vunpack.c.l.b16 %v2888
    %v3506 = vunpack.c.h.b16 %v2888
    %v3507 = vunpack.c.l.b16 %v2889
    %v3508 = vunpack.c.h.b16 %v2889
    %v3509 = vunpack.c.l.b16 %v2890
    %v3510 = vunpack.c.h.b16 %v2890
    %v3511 = vunpack.c.l.b16 %v2891
    %v3512 = vunpack.c.h.b16 %v2891
    %v3513 = vunpack.c.l.b16 %v2892
    %v3514 = vunpack.c.h.b16 %v2892
    %v3515 = vunpack.c.l.b16 %v2893
    %v3516 = vunpack.c.h.b16 %v2893
    %v3517 = vunpack.c.l.b16 %v2894
    %v3518 = vunpack.c.h.b16 %v2894
    %v3519 = vunpack.c.l.b16 %v2895
    %v3520 = vunpack.c.h.b16 %v2895
    %v3521 = vunpack.c.l.b16 %v2896
    %v3522 = vunpack.c.h.b16 %v2896
    %v3523 = vunpack.c.l.b16 %v2897
    %v3524 = vunpack.c.h.b16 %v2897
    %v3525 = vunpack.c.l.b16 %v2898
    %v3526 = vunpack.c.h.b16 %v2898
    %v3527 = vunpack.c.l.b16 %v2899
    %v3528 = vunpack.c.h.b16 %v2899
    %v3529 = vunpack.c.l.b16 %v2900
    %v3530 = vunpack.c.h.b16 %v2900
    %v3531 = vunpack.c.l.b16 %v2901
    %v3532 = vunpack.c.h.b16 %v2901
    %v3533 = vunpack.c.l.b16 %v2902
    %v3534 = vunpack.c.h.b16 %v2902
    %v3535 = vunpack.c.l.b16 %v2903
    %v3536 = vunpack.c.h.b16 %v2903
    %v3537 = vunpack.c.l.b16 %v2904
    %v3538 = vunpack.c.h.b16 %v2904
    %v3539 = vunpack.c.l.b16 %v2905
    %v3540 = vunpack.c.h.b16 %v2905
    %v3541 = vunpack.c.l.b16 %v2906
    %v3542 = vunpack.c.h.b16 %v2906
    %v3543 = vunpack.c.l.b16 %v2907
    %v3544 = vunpack.c.h.b16 %v2907
    %v3545 = vunpack.c.l.b16 %v2908
    %v3546 = vunpack.c.h.b16 %v2908
    %v3547 = vunpack.c.l.b16 %v2909
    %v3548 = vunpack.c.h.b16 %v2909
    %v3549 = vunpack.c.l.b16 %v2910
    %v3550 = vunpack.c.h.b16 %v2910
    %v3551 = vunpack.c.l.b16 %v2911
    %v3552 = vunpack.c.h.b16 %v2911
    %v3553 = vunpack.c.l.b16 %v2912
    %v3554 = vunpack.c.h.b16 %v2912
    %v3555 = vunpack.c.l.b16 %v2913
    %v3556 = vunpack.c.h.b16 %v2913
    %v3557 = vunpack.c.l.b16 %v2914
    %v3558 = vunpack.c.h.b16 %v2914
    %v3559 = vunpack.c.l.b16 %v2915
    %v3560 = vunpack.c.h.b16 %v2915
    %v3561 = vunpack.c.l.b16 %v2916
    %v3562 = vunpack.c.h.b16 %v2916
    %v3563 = vunpack.c.l.b16 %v2917
    %v3564 = vunpack.c.h.b16 %v2917
    %v3565 = vunpack.c.l.b16 %v2918
    %v3566 = vunpack.c.h.b16 %v2918
    %v3567 = vunpack.c.l.b16 %v2919
    %v3568 = vunpack.c.h.b16 %v2919
    %v3569 = vunpack.c.l.b16 %v2920
    %v3570 = vunpack.c.h.b16 %v2920
    %v3571 = vunpack.c.l.b16 %v2921
    %v3572 = vunpack.c.h.b16 %v2921
    %v3573 = vunpack.c.l.b16 %v2922
    %v3574 = vunpack.c.h.b16 %v2922
    %v3575 = vunpack.c.l.b16 %v2923
    %v3576 = vunpack.c.h.b16 %v2923
    %v3577 = vunpack.c.l.b16 %v2924
    %v3578 = vunpack.c.h.b16 %v2924
    %v3579 = vunpack.c.l.b16 %v2925
    %v3580 = vunpack.c.h.b16 %v2925
    %v3581 = vunpack.c.l.b16 %v2926
    %v3582 = vunpack.c.h.b16 %v2926
    %v3583 = vunpack.c.l.b16 %v2927
    %v3584 = vunpack.c.h.b16 %v2927
    %v3585 = vunpack.c.l.b16 %v2928
    %v3586 = vunpack.c.h.b16 %v2928
    %v3587 = vunpack.c.l.b16 %v2929
    %v3588 = vunpack.c.h.b16 %v2929
    %v3589 = vunpack.c.l.b16 %v2930
    %v3590 = vunpack.c.h.b16 %v2930
    %v3591 = vunpack.c.l.b16 %v2931
    %v3592 = vunpack.c.h.b16 %v2931
    %v3593 = vunpack.c.l.b16 %v2932
    %v3594 = vunpack.c.h.b16 %v2932
    %v3595 = vunpack.c.l.b16 %v2933
    %v3596 = vunpack.c.h.b16 %v2933
    %v3597 = vunpack.c.l.b16 %v2934
    %v3598 = vunpack.c.h.b16 %v2934
    %v3599 = vunpack.c.l.b16 %v2935
    %v3600 = vunpack.c.h.b16 %v2935
    %v3601 = vunpack.c.l.b16 %v2936
    %v3602 = vunpack.c.h.b16 %v2936
    %v3603 = vunpack.c.l.b16 %v2937
    %v3604 = vunpack.c.h.b16 %v2937
    %v3605 = vunpack.c.l.b16 %v2938
    %v3606 = vunpack.c.h.b16 %v2938
    %v3607 = vunpack.c.l.b16 %v2939
    %v3608 = vunpack.c.h.b16 %v2939
    %v3609 = vunpack.c.l.b16 %v2940
    %v3610 = vunpack.c.h.b16 %v2940
    %v3611 = vunpack.c.l.b16 %v2941
    %v3612 = vunpack.c.h.b16 %v2941
    %v3613 = vunpack.c.l.b16 %v2942
    %v3614 = vunpack.c.h.b16 %v2942
    %v3615 = vunpack.c.l.b16 %v2943
    %v3616 = vunpack.c.h.b16 %v2943
    %v3617 = vunpack.c.l.b16 %v2944
    %v3618 = vunpack.c.h.b16 %v2944
    %v3619 = vunpack.c.l.b16 %v2945
    %v3620 = vunpack.c.h.b16 %v2945
    %v3621 = vunpack.c.l.b16 %v2946
    %v3622 = vunpack.c.h.b16 %v2946
    %v3623 = vunpack.c.l.b16 %v2947
    %v3624 = vunpack.c.h.b16 %v2947
    %v3625 = vunpack.c.l.b16 %v2948
    %v3626 = vunpack.c.h.b16 %v2948
    %v3627 = vunpack.c.l.b16 %v2949
    %v3628 = vunpack.c.h.b16 %v2949
    %v3629 = vunpack.c.l.b16 %v2950
    %v3630 = vunpack.c.h.b16 %v2950
    %v3631 = vunpack.c.l.b16 %v2951
    %v3632 = vunpack.c.h.b16 %v2951
    %v3633 = vunpack.c.l.b16 %v2952
    %v3634 = vunpack.c.h.b16 %v2952
    %v3635 = vunpack.c.l.b16 %v2953
    %v3636 = vunpack.c.h.b16 %v2953
    %v3637 = vunpack.c.l.b16 %v2954
    %v3638 = vunpack.c.h.b16 %v2954
    %v3639 = vunpack.c.l.b16 %v2955
    %v3640 = vunpack.c.h.b16 %v2955
    %v3641 = vunpack.c.l.b16 %v2956
    %v3642 = vunpack.c.h.b16 %v2956
    %v3643 = vunpack.c.l.b16 %v2957
    %v3644 = vunpack.c.h.b16 %v2957
    %v3645 = vunpack.c.l.b16 %v2958
    %v3646 = vunpack.c.h.b16 %v2958
    %v3647 = vunpack.c.l.b16 %v2959
    %v3648 = vunpack.c.h.b16 %v2959
    %v3649 = vunpack.c.l.b16 %v2960
    %v3650 = vunpack.c.h.b16 %v2960
    %v3651 = vunpack.c.l.b16 %v2961
    %v3652 = vunpack.c.h.b16 %v2961
    %v3653 = vunpack.c.l.b16 %v2962
    %v3654 = vunpack.c.h.b16 %v2962
    %v3655 = vunpack.c.l.b16 %v2963
    %v3656 = vunpack.c.h.b16 %v2963
    %v3657 = vunpack.c.l.b16 %v2964
    %v3658 = vunpack.c.h.b16 %v2964
    %v3659 = vunpack.c.l.b16 %v2965
    %v3660 = vunpack.c.h.b16 %v2965
    %v3661 = vunpack.c.l.b16 %v2966
    %v3662 = vunpack.c.h.b16 %v2966
    %v3663 = vunpack.c.l.b16 %v2967
    %v3664 = vunpack.c.h.b16 %v2967
    %v3665 = vunpack.c.l.b16 %v2968
    %v3666 = vunpack.c.h.b16 %v2968
    %v3667 = vunpack.c.l.b16 %v2969
    %v3668 = vunpack.c.h.b16 %v2969
    %v3669 = vunpack.c.l.b16 %v2970
    %v3670 = vunpack.c.h.b16 %v2970
    %v3671 = vunpack.c.l.b16 %v2971
    %v3672 = vunpack.c.h.b16 %v2971
    %v3673 = vunpack.c.l.b16 %v2972
    %v3674 = vunpack.c.h.b16 %v2972
    %v3675 = vunpack.c.l.b16 %v2973
    %v3676 = vunpack.c.h.b16 %v2973
    %v3677 = vunpack.c.l.b16 %v2974
    %v3678 = vunpack.c.h.b16 %v2974
    %v3679 = vunpack.c.l.b16 %v2975
    %v3680 = vunpack.c.h.b16 %v2975
    %v3681 = vunpack.c.l.b16 %v2976
    %v3682 = vunpack.c.h.b16 %v2976
    %v3683 = vunpack.c.l.b16 %v2977
    %v3684 = vunpack.c.h.b16 %v2977
    %v3685 = vunpack.c.l.b16 %v2978
    %v3686 = vunpack.c.h.b16 %v2978
    %v3687 = vunpack.c.l.b16 %v2979
    %v3688 = vunpack.c.h.b16 %v2979
    %v3689 = vunpack.c.l.b16 %v2980
    %v3690 = vunpack.c.h.b16 %v2980
    %v3691 = vunpack.c.l.b16 %v2981
    %v3692 = vunpack.c.h.b16 %v2981
    %v3693 = vunpack.c.l.b16 %v2982
    %v3694 = vunpack.c.h.b16 %v2982
    %v3695 = vunpack.c.l.b16 %v2983
    %v3696 = vunpack.c.h.b16 %v2983
    %v3697 = vunpack.c.l.b16 %v2984
    %v3698 = vunpack.c.h.b16 %v2984
    %v3699 = vunpack.c.l.b16 %v2985
    %v3700 = vunpack.c.h.b16 %v2985
    %v3701 = vunpack.c.l.b16 %v2986
    %v3702 = vunpack.c.h.b16 %v2986
    %v3703 = vunpack.c.l.b16 %v2987
    %v3704 = vunpack.c.h.b16 %v2987
    %v3705 = vunpack.c.l.b16 %v2988
    %v3706 = vunpack.c.h.b16 %v2988
    %v3707 = vunpack.c.l.b16 %v2989
    %v3708 = vunpack.c.h.b16 %v2989
    %v3709 = vunpack.c.l.b16 %v2990
    %v3710 = vunpack.c.h.b16 %v2990
    %v3711 = vunpack.c.l.b16 %v2991
    %v3712 = vunpack.c.h.b16 %v2991
    %v3713 = vunpack.c.l.b16 %v2992
    %v3714 = vunpack.c.h.b16 %v2992
    %v3715 = vunpack.c.l.b16 %v2993
    %v3716 = vunpack.c.h.b16 %v2993
    %v3717 = vunpack.c.l.b16 %v2994
    %v3718 = vunpack.c.h.b16 %v2994
    %v3719 = vunpack.c.l.b16 %v2995
    %v3720 = vunpack.c.h.b16 %v2995
    %v3721 = vunpack.c.l.b16 %v2996
    %v3722 = vunpack.c.h.b16 %v2996
    %v3723 = vunpack.c.l.b16 %v2997
    %v3724 = vunpack.c.h.b16 %v2997
    %v3725 = vunpack.c.l.b16 %v2998
    %v3726 = vunpack.c.h.b16 %v2998
    %v3727 = vunpack.c.l.b16 %v2999
    %v3728 = vunpack.c.h.b16 %v2999
    %v3729 = vunpack.c.l.b16 %v3000
    %v3730 = vunpack.c.h.b16 %v3000
    %v3731 = vunpack.c.l.b16 %v3001
    %v3732 = vunpack.c.h.b16 %v3001
    %v3733 = vunpack.c.l.b16 %v3002
    %v3734 = vunpack.c.h.b16 %v3002
    %v3735 = vunpack.c.l.b16 %v3003
    %v3736 = vunpack.c.h.b16 %v3003
    %v3737 = vunpack.c.l.b16 %v3004
    %v3738 = vunpack.c.h.b16 %v3004
    %v3739 = vunpack.c.l.b16 %v3005
    %v3740 = vunpack.c.h.b16 %v3005
    %v3741 = vunpack.c.l.b16 %v3006
    %v3742 = vunpack.c.h.b16 %v3006
    %v3743 = vunpack.c.l.b16 %v3007
    %v3744 = vunpack.c.h.b16 %v3007
    %v3745 = vunpack.c.l.b16 %v3008
    %v3746 = vunpack.c.h.b16 %v3008
    %v3747 = vunpack.c.l.b16 %v3009
    %v3748 = vunpack.c.h.b16 %v3009
    %v3749 = vunpack.c.l.b16 %v3010
    %v3750 = vunpack.c.h.b16 %v3010
    %v3751 = vunpack.c.l.b16 %v3011
    %v3752 = vunpack.c.h.b16 %v3011
    %v3753 = vunpack.c.l.b16 %v3012
    %v3754 = vunpack.c.h.b16 %v3012
    %v3755 = vunpack.c.l.b16 %v3013
    %v3756 = vunpack.c.h.b16 %v3013
    %v3757 = vunpack.c.l.b16 %v3014
    %v3758 = vunpack.c.h.b16 %v3014
    %v3759 = vunpack.c.l.b16 %v3015
    %v3760 = vunpack.c.h.b16 %v3015
    %v3761 = vunpack.c.l.b16 %v3016
    %v3762 = vunpack.c.h.b16 %v3016
    %v3763 = vunpack.c.l.b16 %v3017
    %v3764 = vunpack.c.h.b16 %v3017
    %v3765 = vunpack.c.l.b16 %v3018
    %v3766 = vunpack.c.h.b16 %v3018
    %v3767 = vunpack.c.l.b16 %v3019
    %v3768 = vunpack.c.h.b16 %v3019
    %v3769 = vunpack.c.l.b16 %v3020
    %v3770 = vunpack.c.h.b16 %v3020
    %v3771 = vunpack.c.l.b16 %v3021
    %v3772 = vunpack.c.h.b16 %v3021
    %v3773 = vunpack.c.l.b16 %v3022
    %v3774 = vunpack.c.h.b16 %v3022
    %v3775 = vunpack.c.l.b16 %v3023
    %v3776 = vunpack.c.h.b16 %v3023
    %v3777 = vunpack.c.l.b16 %v3024
    %v3778 = vunpack.c.h.b16 %v3024
    %v3779 = vunpack.c.l.b16 %v3025
    %v3780 = vunpack.c.h.b16 %v3025
    %v3781 = vunpack.c.l.b16 %v3026
    %v3782 = vunpack.c.h.b16 %v3026
    %v3783 = vunpack.c.l.b16 %v3027
    %v3784 = vunpack.c.h.b16 %v3027
    %v3785 = vunpack.c.l.b16 %v3028
    %v3786 = vunpack.c.h.b16 %v3028
    %v3787 = vunpack.c.l.b16 %v3029
    %v3788 = vunpack.c.h.b16 %v3029
    %v3789 = vunpack.c.l.b16 %v3030
    %v3790 = vunpack.c.h.b16 %v3030
    %v3791 = vunpack.c.l.b16 %v3031
    %v3792 = vunpack.c.h.b16 %v3031
    %v3793 = vunpack.c.l.b16 %v3032
    %v3794 = vunpack.c.h.b16 %v3032
    %v3795 = vunpack.c.l.b16 %v3033
    %v3796 = vunpack.c.h.b16 %v3033
    %v3797 = vunpack.c.l.b16 %v3034
    %v3798 = vunpack.c.h.b16 %v3034
    %v3799 = vunpack.c.l.b16 %v3035
    %v3800 = vunpack.c.h.b16 %v3035
    %v3801 = vunpack.c.l.b16 %v3036
    %v3802 = vunpack.c.h.b16 %v3036
    %v3803 = vunpack.c.l.b16 %v3037
    %v3804 = vunpack.c.h.b16 %v3037
    %v3805 = vunpack.c.l.b16 %v3038
    %v3806 = vunpack.c.h.b16 %v3038
    %v3807 = vunpack.c.l.b16 %v3039
    %v3808 = vunpack.c.h.b16 %v3039
    %v3809 = vunpack.c.l.b16 %v3040
    %v3810 = vunpack.c.h.b16 %v3040
    %v3811 = vunpack.c.l.b16 %v3041
    %v3812 = vunpack.c.h.b16 %v3041
    %v3813 = vunpack.c.l.b16 %v3042
    %v3814 = vunpack.c.h.b16 %v3042
    %v3815 = vunpack.c.l.b16 %v3043
    %v3816 = vunpack.c.h.b16 %v3043
    %v3817 = vunpack.c.l.b16 %v3044
    %v3818 = vunpack.c.h.b16 %v3044
    %v3819 = vunpack.c.l.b16 %v3045
    %v3820 = vunpack.c.h.b16 %v3045
    %v3821 = vunpack.c.l.b16 %v3046
    %v3822 = vunpack.c.h.b16 %v3046
    %v3823 = vunpack.c.l.b16 %v3047
    %v3824 = vunpack.c.h.b16 %v3047
    %v3825 = vunpack.c.l.b16 %v3048
    %v3826 = vunpack.c.h.b16 %v3048
    %v3827 = vunpack.c.l.b16 %v3049
    %v3828 = vunpack.c.h.b16 %v3049
    %v3829 = vunpack.c.l.b16 %v3050
    %v3830 = vunpack.c.h.b16 %v3050
    %v3831 = vunpack.c.l.b16 %v3051
    %v3832 = vunpack.c.h.b16 %v3051
    %v3833 = vunpack.c.l.b16 %v3052
    %v3834 = vunpack.c.h.b16 %v3052
    %v3835 = vunpack.c.l.b16 %v3053
    %v3836 = vunpack.c.h.b16 %v3053
    %v3837 = vunpack.c.l.b16 %v3054
    %v3838 = vunpack.c.h.b16 %v3054
    %v3839 = vunpack.c.l.b16 %v3055
    %v3840 = vunpack.c.h.b16 %v3055
    %v3841 = vunpack.c.l.b16 %v3056
    %v3842 = vunpack.c.h.b16 %v3056
    %v3843 = vpack.c.b16 %v3335, %v3331
    %v3844 = vpack.c.b16 %v3336, %v3332
    %v3845 = vpack.c.b16 %v3337, %v3333
    %v3846 = vpack.c.b16 %v3338, %v3334
    %v3847 = vpack.c.b16 %v3343, %v3339
    %v3848 = vpack.c.b16 %v3344, %v3340
    %v3849 = vpack.c.b16 %v3345, %v3341
    %v3850 = vpack.c.b16 %v3346, %v3342
    %v3851 = vpack.c.b16 %v3351, %v3347
    %v3852 = vpack.c.b16 %v3352, %v3348
    %v3853 = vpack.c.b16 %v3353, %v3349
    %v3854 = vpack.c.b16 %v3354, %v3350
    %v3855 = vpack.c.b16 %v3359, %v3355
    %v3856 = vpack.c.b16 %v3360, %v3356
    %v3857 = vpack.c.b16 %v3361, %v3357
    %v3858 = vpack.c.b16 %v3362, %v3358
    %v3859 = vpack.c.b16 %v3367, %v3363
    %v3860 = vpack.c.b16 %v3368, %v3364
    %v3861 = vpack.c.b16 %v3369, %v3365
    %v3862 = vpack.c.b16 %v3370, %v3366
    %v3863 = vpack.c.b16 %v3375, %v3371
    %v3864 = vpack.c.b16 %v3376, %v3372
    %v3865 = vpack.c.b16 %v3377, %v3373
    %v3866 = vpack.c.b16 %v3378, %v3374
    %v3867 = vpack.c.b16 %v3383, %v3379
    %v3868 = vpack.c.b16 %v3384, %v3380
    %v3869 = vpack.c.b16 %v3385, %v3381
    %v3870 = vpack.c.b16 %v3386, %v3382
    %v3871 = vpack.c.b16 %v3391, %v3387
    %v3872 = vpack.c.b16 %v3392, %v3388
    %v3873 = vpack.c.b16 %v3393, %v3389
    %v3874 = vpack.c.b16 %v3394, %v3390
    %v3875 = vpack.c.b16 %v3399, %v3395
    %v3876 = vpack.c.b16 %v3400, %v3396
    %v3877 = vpack.c.b16 %v3401, %v3397
    %v3878 = vpack.c.b16 %v3402, %v3398
    %v3879 = vpack.c.b16 %v3407, %v3403
    %v3880 = vpack.c.b16 %v3408, %v3404
    %v3881 = vpack.c.b16 %v3409, %v3405
    %v3882 = vpack.c.b16 %v3410, %v3406
    %v3883 = vpack.c.b16 %v3415, %v3411
    %v3884 = vpack.c.b16 %v3416, %v3412
    %v3885 = vpack.c.b16 %v3417, %v3413
    %v3886 = vpack.c.b16 %v3418, %v3414
    %v3887 = vpack.c.b16 %v3423, %v3419
    %v3888 = vpack.c.b16 %v3424, %v3420
    %v3889 = vpack.c.b16 %v3425, %v3421
    %v3890 = vpack.c.b16 %v3426, %v3422
    %v3891 = vpack.c.b16 %v3431, %v3427
    %v3892 = vpack.c.b16 %v3432, %v3428
    %v3893 = vpack.c.b16 %v3433, %v3429
    %v3894 = vpack.c.b16 %v3434, %v3430
    %v3895 = vpack.c.b16 %v3439, %v3435
    %v3896 = vpack.c.b16 %v3440, %v3436
    %v3897 = vpack.c.b16 %v3441, %v3437
    %v3898 = vpack.c.b16 %v3442, %v3438
    %v3899 = vpack.c.b16 %v3447, %v3443
    %v3900 = vpack.c.b16 %v3448, %v3444
    %v3901 = vpack.c.b16 %v3449, %v3445
    %v3902 = vpack.c.b16 %v3450, %v3446
    %v3903 = vpack.c.b16 %v3455, %v3451
    %v3904 = vpack.c.b16 %v3456, %v3452
    %v3905 = vpack.c.b16 %v3457, %v3453
    %v3906 = vpack.c.b16 %v3458, %v3454
    %v3907 = vpack.c.b16 %v3463, %v3459
    %v3908 = vpack.c.b16 %v3464, %v3460
    %v3909 = vpack.c.b16 %v3465, %v3461
    %v3910 = vpack.c.b16 %v3466, %v3462
    %v3911 = vpack.c.b16 %v3471, %v3467
    %v3912 = vpack.c.b16 %v3472, %v3468
    %v3913 = vpack.c.b16 %v3473, %v3469
    %v3914 = vpack.c.b16 %v3474, %v3470
    %v3915 = vpack.c.b16 %v3479, %v3475
    %v3916 = vpack.c.b16 %v3480, %v3476
    %v3917 = vpack.c.b16 %v3481, %v3477
    %v3918 = vpack.c.b16 %v3482, %v3478
    %v3919 = vpack.c.b16 %v3487, %v3483
    %v3920 = vpack.c.b16 %v3488, %v3484
    %v3921 = vpack.c.b16 %v3489, %v3485
    %v3922 = vpack.c.b16 %v3490, %v3486
    %v3923 = vpack.c.b16 %v3495, %v3491
    %v3924 = vpack.c.b16 %v3496, %v3492
    %v3925 = vpack.c.b16 %v3497, %v3493
    %v3926 = vpack.c.b16 %v3498, %v3494
    %v3927 = vpack.c.b16 %v3503, %v3499
    %v3928 = vpack.c.b16 %v3504, %v3500
    %v3929 = vpack.c.b16 %v3505, %v3501
    %v3930 = vpack.c.b16 %v3506, %v3502
    %v3931 = vpack.c.b16 %v3511, %v3507
    %v3932 = vpack.c.b16 %v3512, %v3508
    %v3933 = vpack.c.b16 %v3513, %v3509
    %v3934 = vpack.c.b16 %v3514, %v3510
    %v3935 = vpack.c.b16 %v3519, %v3515
    %v3936 = vpack.c.b16 %v3520, %v3516
    %v3937 = vpack.c.b16 %v3521, %v3517
    %v3938 = vpack.c.b16 %v3522, %v3518
    %v3939 = vpack.c.b16 %v3527, %v3523
    %v3940 = vpack.c.b16 %v3528, %v3524
    %v3941 = vpack.c.b16 %v3529, %v3525
    %v3942 = vpack.c.b16 %v3530, %v3526
    %v3943 = vpack.c.b16 %v3535, %v3531
    %v3944 = vpack.c.b16 %v3536, %v3532
    %v3945 = vpack.c.b16 %v3537, %v3533
    %v3946 = vpack.c.b16 %v3538, %v3534
    %v3947 = vpack.c.b16 %v3543, %v3539
    %v3948 = vpack.c.b16 %v3544, %v3540
    %v3949 = vpack.c.b16 %v3545, %v3541
    %v3950 = vpack.c.b16 %v3546, %v3542
    %v3951 = vpack.c.b16 %v3551, %v3547
    %v3952 = vpack.c.b16 %v3552, %v3548
    %v3953 = vpack.c.b16 %v3553, %v3549
    %v3954 = vpack.c.b16 %v3554, %v3550
    %v3955 = vpack.c.b16 %v3559, %v3555
    %v3956 = vpack.c.b16 %v3560, %v3556
    %v3957 = vpack.c.b16 %v3561, %v3557
    %v3958 = vpack.c.b16 %v3562, %v3558
    %v3959 = vpack.c.b16 %v3567, %v3563
    %v3960 = vpack.c.b16 %v3568, %v3564
    %v3961 = vpack.c.b16 %v3569, %v3565
    %v3962 = vpack.c.b16 %v3570, %v3566
    %v3963 = vpack.c.b16 %v3575, %v3571
    %v3964 = vpack.c.b16 %v3576, %v3572
    %v3965 = vpack.c.b16 %v3577, %v3573
    %v3966 = vpack.c.b16 %v3578, %v3574
    %v3967 = vpack.c.b16 %v3583, %v3579
    %v3968 = vpack.c.b16 %v3584, %v3580
    %v3969 = vpack.c.b16 %v3585, %v3581
    %v3970 = vpack.c.b16 %v3586, %v3582
    %v3971 = vpack.c.b16 %v3591, %v3587
    %v3972 = vpack.c.b16 %v3592, %v3588
    %v3973 = vpack.c.b16 %v3593, %v3589
    %v3974 = vpack.c.b16 %v3594, %v3590
    %v3975 = vpack.c.b16 %v3599, %v3595
    %v3976 = vpack.c.b16 %v3600, %v3596
    %v3977 = vpack.c.b16 %v3601, %v3597
    %v3978 = vpack.c.b16 %v3602, %v3598
    %v3979 = vpack.c.b16 %v3607, %v3603
    %v3980 = vpack.c.b16 %v3608, %v3604
    %v3981 = vpack.c.b16 %v3609, %v3605
    %v3982 = vpack.c.b16 %v3610, %v3606
    %v3983 = vpack.c.b16 %v3615, %v3611
    %v3984 = vpack.c.b16 %v3616, %v3612
    %v3985 = vpack.c.b16 %v3617, %v3613
    %v3986 = vpack.c.b16 %v3618, %v3614
    %v3987 = vpack.c.b16 %v3623, %v3619
    %v3988 = vpack.c.b16 %v3624, %v3620
    %v3989 = vpack.c.b16 %v3625, %v3621
    %v3990 = vpack.c.b16 %v3626, %v3622
    %v3991 = vpack.c.b16 %v3631, %v3627
    %v3992 = vpack.c.b16 %v3632, %v3628
    %v3993 = vpack.c.b16 %v3633, %v3629
    %v3994 = vpack.c.b16 %v3634, %v3630
    %v3995 = vpack.c.b16 %v3639, %v3635
    %v3996 = vpack.c.b16 %v3640, %v3636
    %v3997 = vpack.c.b16 %v3641, %v3637
    %v3998 = vpack.c.b16 %v3642, %v3638
    %v3999 = vpack.c.b16 %v3647, %v3643
    %v4000 = vpack.c.b16 %v3648, %v3644
    %v4001 = vpack.c.b16 %v3649, %v3645
    %v4002 = vpack.c.b16 %v3650, %v3646
    %v4003 = vpack.c.b16 %v3655, %v3651
    %v4004 = vpack.c.b16 %v3656, %v3652
    %v4005 = vpack.c.b16 %v3657, %v3653
    %v4006 = vpack.c.b16 %v3658, %v3654
    %v4007 = vpack.c.b16 %v3663, %v3659
    %v4008 = vpack.c.b16 %v3664, %v3660
    %v4009 = vpack.c.b16 %v3665, %v3661
    %v4010 = vpack.c.b16 %v3666, %v3662
    %v4011 = vpack.c.b16 %v3671, %v3667
    %v4012 = vpack.c.b16 %v3672, %v3668
    %v4013 = vpack.c.b16 %v3673, %v3669
    %v4014 = vpack.c.b16 %v3674, %v3670
    %v4015 = vpack.c.b16 %v3679, %v3675
    %v4016 = vpack.c.b16 %v3680, %v3676
    %v4017 = vpack.c.b16 %v3681, %v3677
    %v4018 = vpack.c.b16 %v3682, %v3678
    %v4019 = vpack.c.b16 %v3687, %v3683
    %v4020 = vpack.c.b16 %v3688, %v3684
    %v4021 = vpack.c.b16 %v3689, %v3685
    %v4022 = vpack.c.b16 %v3690, %v3686
    %v4023 = vpack.c.b16 %v3695, %v3691
    %v4024 = vpack.c.b16 %v3696, %v3692
    %v4025 = vpack.c.b16 %v3697, %v3693
    %v4026 = vpack.c.b16 %v3698, %v3694
    %v4027 = vpack.c.b16 %v3703, %v3699
    %v4028 = vpack.c.b16 %v3704, %v3700
    %v4029 = vpack.c.b16 %v3705, %v3701
    %v4030 = vpack.c.b16 %v3706, %v3702
    %v4031 = vpack.c.b16 %v3711, %v3707
    %v4032 = vpack.c.b16 %v3712, %v3708
    %v4033 = vpack.c.b16 %v3713, %v3709
    %v4034 = vpack.c.b16 %v3714, %v3710
    %v4035 = vpack.c.b16 %v3719, %v3715
    %v4036 = vpack.c.b16 %v3720, %v3716
    %v4037 = vpack.c.b16 %v3721, %v3717
    %v4038 = vpack.c.b16 %v3722, %v3718
    %v4039 = vpack.c.b16 %v3727, %v3723
    %v4040 = vpack.c.b16 %v3728, %v3724
    %v4041 = vpack.c.b16 %v3729, %v3725
    %v4042 = vpack.c.b16 %v3730, %v3726
    %v4043 = vpack.c.b16 %v3735, %v3731
    %v4044 = vpack.c.b16 %v3736, %v3732
    %v4045 = vpack.c.b16 %v3737, %v3733
    %v4046 = vpack.c.b16 %v3738, %v3734
    %v4047 = vpack.c.b16 %v3743, %v3739
    %v4048 = vpack.c.b16 %v3744, %v3740
    %v4049 = vpack.c.b16 %v3745, %v3741
    %v4050 = vpack.c.b16 %v3746, %v3742
    %v4051 = vpack.c.b16 %v3751, %v3747
    %v4052 = vpack.c.b16 %v3752, %v3748
    %v4053 = vpack.c.b16 %v3753, %v3749
    %v4054 = vpack.c.b16 %v3754, %v3750
    %v4055 = vpack.c.b16 %v3759, %v3755
    %v4056 = vpack.c.b16 %v3760, %v3756
    %v4057 = vpack.c.b16 %v3761, %v3757
    %v4058 = vpack.c.b16 %v3762, %v3758
    %v4059 = vpack.c.b16 %v3767, %v3763
    %v4060 = vpack.c.b16 %v3768, %v3764
    %v4061 = vpack.c.b16 %v3769, %v3765
    %v4062 = vpack.c.b16 %v3770, %v3766
    %v4063 = vpack.c.b16 %v3775, %v3771
    %v4064 = vpack.c.b16 %v3776, %v3772
    %v4065 = vpack.c.b16 %v3777, %v3773
    %v4066 = vpack.c.b16 %v3778, %v3774
    %v4067 = vpack.c.b16 %v3783, %v3779
    %v4068 = vpack.c.b16 %v3784, %v3780
    %v4069 = vpack.c.b16 %v3785, %v3781
    %v4070 = vpack.c.b16 %v3786, %v3782
    %v4071 = vpack.c.b16 %v3791, %v3787
    %v4072 = vpack.c.b16 %v3792, %v3788
    %v4073 = vpack.c.b16 %v3793, %v3789
    %v4074 = vpack.c.b16 %v3794, %v3790
    %v4075 = vpack.c.b16 %v3799, %v3795
    %v4076 = vpack.c.b16 %v3800, %v3796
    %v4077 = vpack.c.b16 %v3801, %v3797
    %v4078 = vpack.c.b16 %v3802, %v3798
    %v4079 = vpack.c.b16 %v3807, %v3803
    %v4080 = vpack.c.b16 %v3808, %v3804
    %v4081 = vpack.c.b16 %v3809, %v3805
    %v4082 = vpack.c.b16 %v3810, %v3806
    %v4083 = vpack.c.b16 %v3815, %v3811
    %v4084 = vpack.c.b16 %v3816, %v3812
    %v4085 = vpack.c.b16 %v3817, %v3813
    %v4086 = vpack.c.b16 %v3818, %v3814
    %v4087 = vpack.c.b16 %v3823, %v3819
    %v4088 = vpack.c.b16 %v3824, %v3820
    %v4089 = vpack.c.b16 %v3825, %v3821
    %v4090 = vpack.c.b16 %v3826, %v3822
    %v4091 = vpack.c.b16 %v3831, %v3827
    %v4092 = vpack.c.b16 %v3832, %v3828
    %v4093 = vpack.c.b16 %v3833, %v3829
    %v4094 = vpack.c.b16 %v3834, %v3830
    %v4095 = vpack.c.b16 %v3839, %v3835
    %v4096 = vpack.c.b16 %v3840, %v3836
    %v4097 = vpack.c.b16 %v3841, %v3837
    %v4098 = vpack.c.b16 %v3842, %v3838
    %4355 = vmatpush.bf16.msra.mxu0 %v3871
    %4356 = vmatpush.bf16.msra.mxu0 %v3867
    %4357 = vmatpush.bf16.msra.mxu0 %v3863
    %4358 = vmatpush.bf16.msra.mxu0 %v3859
    %4359 = vmatpush.bf16.msra.mxu0 %v3855
    %4360 = vmatpush.bf16.msra.mxu0 %v3851
    %4361 = vmatpush.bf16.msra.mxu0 %v3847
    %4362 = vmatpush.bf16.msra.mxu0 %v3843
    %4363 = vmatmul.bf16.gmra.mxu0 %v3058
    %v4364 = vpop.f32.mrf.mxu0
    %v4365 = vadd.f32 %v3067, %v4364
    %v4366 = vpop.f32.mrf.mxu0
    %4367 = vdwg.mxu0
    %4368 = vmatpush.bf16.msra.mxu0 %v3903
    %4369 = vmatpush.bf16.msra.mxu0 %v3899
    %4370 = vmatpush.bf16.msra.mxu0 %v3895
    %4371 = vmatpush.bf16.msra.mxu0 %v3891
    %4372 = vmatpush.bf16.msra.mxu0 %v3887
    %4373 = vmatpush.bf16.msra.mxu0 %v3883
    %4374 = vmatpush.bf16.msra.mxu0 %v3879
    %4375 = vmatpush.bf16.msra.mxu0 %v3875
    %4376 = vmatmul.bf16.gmra.mxu0 %v3059
    %v4377 = vpop.f32.mrf.mxu0
    %v4378 = vadd.f32 %v4365, %v4377
    %v4379 = vpop.f32.mrf.mxu0
    %4380 = vdwg.mxu0
    %4381 = vmatpush.bf16.msra.mxu0 %v3935
    %4382 = vmatpush.bf16.msra.mxu0 %v3931
    %4383 = vmatpush.bf16.msra.mxu0 %v3927
    %4384 = vmatpush.bf16.msra.mxu0 %v3923
    %4385 = vmatpush.bf16.msra.mxu0 %v3919
    %4386 = vmatpush.bf16.msra.mxu0 %v3915
    %4387 = vmatpush.bf16.msra.mxu0 %v3911
    %4388 = vmatpush.bf16.msra.mxu0 %v3907
    %4389 = vmatmul.bf16.gmra.mxu0 %v3060
    %v4390 = vpop.f32.mrf.mxu0
    %v4391 = vadd.f32 %v4378, %v4390
    %v4392 = vpop.f32.mrf.mxu0
    %4393 = vdwg.mxu0
    %4394 = vmatpush.bf16.msra.mxu0 %v3967
    %4395 = vmatpush.bf16.msra.mxu0 %v3963
    %4396 = vmatpush.bf16.msra.mxu0 %v3959
    %4397 = vmatpush.bf16.msra.mxu0 %v3955
    %4398 = vmatpush.bf16.msra.mxu0 %v3951
    %4399 = vmatpush.bf16.msra.mxu0 %v3947
    %4400 = vmatpush.bf16.msra.mxu0 %v3943
    %4401 = vmatpush.bf16.msra.mxu0 %v3939
    %4402 = vmatmul.bf16.gmra.mxu0 %v3061
    %v4403 = vpop.f32.mrf.mxu0
    %v4404 = vadd.f32 %v4391, %v4403
    %v4405 = vpop.f32.mrf.mxu0
    %4406 = vdwg.mxu0
    %4407 = vmatpush.bf16.msra.mxu0 %v3999
    %4408 = vmatpush.bf16.msra.mxu0 %v3995
    %4409 = vmatpush.bf16.msra.mxu0 %v3991
    %4410 = vmatpush.bf16.msra.mxu0 %v3987
    %4411 = vmatpush.bf16.msra.mxu0 %v3983
    %4412 = vmatpush.bf16.msra.mxu0 %v3979
    %4413 = vmatpush.bf16.msra.mxu0 %v3975
    %4414 = vmatpush.bf16.msra.mxu0 %v3971
    %4415 = vmatmul.bf16.gmra.mxu0 %v3062
    %v4416 = vpop.f32.mrf.mxu0
    %v4417 = vadd.f32 %v4404, %v4416
    %v4418 = vpop.f32.mrf.mxu0
    %4419 = vdwg.mxu0
    %4420 = vmatpush.bf16.msra.mxu0 %v4031
    %4421 = vmatpush.bf16.msra.mxu0 %v4027
    %4422 = vmatpush.bf16.msra.mxu0 %v4023
    %4423 = vmatpush.bf16.msra.mxu0 %v4019
    %4424 = vmatpush.bf16.msra.mxu0 %v4015
    %4425 = vmatpush.bf16.msra.mxu0 %v4011
    %4426 = vmatpush.bf16.msra.mxu0 %v4007
    %4427 = vmatpush.bf16.msra.mxu0 %v4003
    %4428 = vmatmul.bf16.gmra.mxu0 %v3063
    %v4429 = vpop.f32.mrf.mxu0
    %v4430 = vadd.f32 %v4417, %v4429
    %v4431 = vpop.f32.mrf.mxu0
    %4432 = vdwg.mxu0
    %4433 = vmatpush.bf16.msra.mxu0 %v4063
    %4434 = vmatpush.bf16.msra.mxu0 %v4059
    %4435 = vmatpush.bf16.msra.mxu0 %v4055
    %4436 = vmatpush.bf16.msra.mxu0 %v4051
    %4437 = vmatpush.bf16.msra.mxu0 %v4047
    %4438 = vmatpush.bf16.msra.mxu0 %v4043
    %4439 = vmatpush.bf16.msra.mxu0 %v4039
    %4440 = vmatpush.bf16.msra.mxu0 %v4035
    %4441 = vmatmul.bf16.gmra.mxu0 %v3064
    %v4442 = vpop.f32.mrf.mxu0
    %v4443 = vadd.f32 %v4430, %v4442
    %v4444 = vpop.f32.mrf.mxu0
    %4445 = vdwg.mxu0
    %4446 = vmatpush.bf16.msra.mxu0 %v4095
    %4447 = vmatpush.bf16.msra.mxu0 %v4091
    %4448 = vmatpush.bf16.msra.mxu0 %v4087
    %4449 = vmatpush.bf16.msra.mxu0 %v4083
    %4450 = vmatpush.bf16.msra.mxu0 %v4079
    %4451 = vmatpush.bf16.msra.mxu0 %v4075
    %4452 = vmatpush.bf16.msra.mxu0 %v4071
    %4453 = vmatpush.bf16.msra.mxu0 %v4067
    %4454 = vmatmul.bf16.gmra.mxu0 %v3065
    %v4455 = vpop.f32.mrf.mxu0
    %v4456 = vadd.f32 %v4443, %v4455
    %v4457 = vpop.f32.mrf.mxu0
    %4458 = vdwg.mxu0
    %4459 = vmatpush.bf16.msra.mxu0 %v3872
    %4460 = vmatpush.bf16.msra.mxu0 %v3868
    %4461 = vmatpush.bf16.msra.mxu0 %v3864
    %4462 = vmatpush.bf16.msra.mxu0 %v3860
    %4463 = vmatpush.bf16.msra.mxu0 %v3856
    %4464 = vmatpush.bf16.msra.mxu0 %v3852
    %4465 = vmatpush.bf16.msra.mxu0 %v3848
    %4466 = vmatpush.bf16.msra.mxu0 %v3844
    %4467 = vmatmul.bf16.gmra.mxu0 %v3058
    %v4468 = vpop.f32.mrf.mxu0
    %v4469 = vadd.f32 %v3068, %v4468
    %v4470 = vpop.f32.mrf.mxu0
    %4471 = vdwg.mxu0
    %4472 = vmatpush.bf16.msra.mxu0 %v3904
    %4473 = vmatpush.bf16.msra.mxu0 %v3900
    %4474 = vmatpush.bf16.msra.mxu0 %v3896
    %4475 = vmatpush.bf16.msra.mxu0 %v3892
    %4476 = vmatpush.bf16.msra.mxu0 %v3888
    %4477 = vmatpush.bf16.msra.mxu0 %v3884
    %4478 = vmatpush.bf16.msra.mxu0 %v3880
    %4479 = vmatpush.bf16.msra.mxu0 %v3876
    %4480 = vmatmul.bf16.gmra.mxu0 %v3059
    %v4481 = vpop.f32.mrf.mxu0
    %v4482 = vadd.f32 %v4469, %v4481
    %v4483 = vpop.f32.mrf.mxu0
    %4484 = vdwg.mxu0
    %4485 = vmatpush.bf16.msra.mxu0 %v3936
    %4486 = vmatpush.bf16.msra.mxu0 %v3932
    %4487 = vmatpush.bf16.msra.mxu0 %v3928
    %4488 = vmatpush.bf16.msra.mxu0 %v3924
    %4489 = vmatpush.bf16.msra.mxu0 %v3920
    %4490 = vmatpush.bf16.msra.mxu0 %v3916
    %4491 = vmatpush.bf16.msra.mxu0 %v3912
    %4492 = vmatpush.bf16.msra.mxu0 %v3908
    %4493 = vmatmul.bf16.gmra.mxu0 %v3060
    %v4494 = vpop.f32.mrf.mxu0
    %v4495 = vadd.f32 %v4482, %v4494
    %v4496 = vpop.f32.mrf.mxu0
    %4497 = vdwg.mxu0
    %4498 = vmatpush.bf16.msra.mxu0 %v3968
    %4499 = vmatpush.bf16.msra.mxu0 %v3964
    %4500 = vmatpush.bf16.msra.mxu0 %v3960
    %4501 = vmatpush.bf16.msra.mxu0 %v3956
    %4502 = vmatpush.bf16.msra.mxu0 %v3952
    %4503 = vmatpush.bf16.msra.mxu0 %v3948
    %4504 = vmatpush.bf16.msra.mxu0 %v3944
    %4505 = vmatpush.bf16.msra.mxu0 %v3940
    %4506 = vmatmul.bf16.gmra.mxu0 %v3061
    %v4507 = vpop.f32.mrf.mxu0
    %v4508 = vadd.f32 %v4495, %v4507
    %v4509 = vpop.f32.mrf.mxu0
    %4510 = vdwg.mxu0
    %4511 = vmatpush.bf16.msra.mxu0 %v4000
    %4512 = vmatpush.bf16.msra.mxu0 %v3996
    %4513 = vmatpush.bf16.msra.mxu0 %v3992
    %4514 = vmatpush.bf16.msra.mxu0 %v3988
    %4515 = vmatpush.bf16.msra.mxu0 %v3984
    %4516 = vmatpush.bf16.msra.mxu0 %v3980
    %4517 = vmatpush.bf16.msra.mxu0 %v3976
    %4518 = vmatpush.bf16.msra.mxu0 %v3972
    %4519 = vmatmul.bf16.gmra.mxu0 %v3062
    %v4520 = vpop.f32.mrf.mxu0
    %v4521 = vadd.f32 %v4508, %v4520
    %v4522 = vpop.f32.mrf.mxu0
    %4523 = vdwg.mxu0
    %4524 = vmatpush.bf16.msra.mxu0 %v4032
    %4525 = vmatpush.bf16.msra.mxu0 %v4028
    %4526 = vmatpush.bf16.msra.mxu0 %v4024
    %4527 = vmatpush.bf16.msra.mxu0 %v4020
    %4528 = vmatpush.bf16.msra.mxu0 %v4016
    %4529 = vmatpush.bf16.msra.mxu0 %v4012
    %4530 = vmatpush.bf16.msra.mxu0 %v4008
    %4531 = vmatpush.bf16.msra.mxu0 %v4004
    %4532 = vmatmul.bf16.gmra.mxu0 %v3063
    %v4533 = vpop.f32.mrf.mxu0
    %v4534 = vadd.f32 %v4521, %v4533
    %v4535 = vpop.f32.mrf.mxu0
    %4536 = vdwg.mxu0
    %4537 = vmatpush.bf16.msra.mxu0 %v4064
    %4538 = vmatpush.bf16.msra.mxu0 %v4060
    %4539 = vmatpush.bf16.msra.mxu0 %v4056
    %4540 = vmatpush.bf16.msra.mxu0 %v4052
    %4541 = vmatpush.bf16.msra.mxu0 %v4048
    %4542 = vmatpush.bf16.msra.mxu0 %v4044
    %4543 = vmatpush.bf16.msra.mxu0 %v4040
    %4544 = vmatpush.bf16.msra.mxu0 %v4036
    %4545 = vmatmul.bf16.gmra.mxu0 %v3064
    %v4546 = vpop.f32.mrf.mxu0
    %v4547 = vadd.f32 %v4534, %v4546
    %v4548 = vpop.f32.mrf.mxu0
    %4549 = vdwg.mxu0
    %4550 = vmatpush.bf16.msra.mxu0 %v4096
    %4551 = vmatpush.bf16.msra.mxu0 %v4092
    %4552 = vmatpush.bf16.msra.mxu0 %v4088
    %4553 = vmatpush.bf16.msra.mxu0 %v4084
    %4554 = vmatpush.bf16.msra.mxu0 %v4080
    %4555 = vmatpush.bf16.msra.mxu0 %v4076
    %4556 = vmatpush.bf16.msra.mxu0 %v4072
    %4557 = vmatpush.bf16.msra.mxu0 %v4068
    %4558 = vmatmul.bf16.gmra.mxu0 %v3065
    %v4559 = vpop.f32.mrf.mxu0
    %v4560 = vadd.f32 %v4547, %v4559
    %v4561 = vpop.f32.mrf.mxu0
    %4562 = vdwg.mxu0
    %4563 = vmatpush.bf16.msra.mxu0 %v3873
    %4564 = vmatpush.bf16.msra.mxu0 %v3869
    %4565 = vmatpush.bf16.msra.mxu0 %v3865
    %4566 = vmatpush.bf16.msra.mxu0 %v3861
    %4567 = vmatpush.bf16.msra.mxu0 %v3857
    %4568 = vmatpush.bf16.msra.mxu0 %v3853
    %4569 = vmatpush.bf16.msra.mxu0 %v3849
    %4570 = vmatpush.bf16.msra.mxu0 %v3845
    %4571 = vmatmul.bf16.gmra.mxu0 %v3058
    %v4572 = vpop.f32.mrf.mxu0
    %v4573 = vadd.f32 %v3069, %v4572
    %v4574 = vpop.f32.mrf.mxu0
    %4575 = vdwg.mxu0
    %4576 = vmatpush.bf16.msra.mxu0 %v3905
    %4577 = vmatpush.bf16.msra.mxu0 %v3901
    %4578 = vmatpush.bf16.msra.mxu0 %v3897
    %4579 = vmatpush.bf16.msra.mxu0 %v3893
    %4580 = vmatpush.bf16.msra.mxu0 %v3889
    %4581 = vmatpush.bf16.msra.mxu0 %v3885
    %4582 = vmatpush.bf16.msra.mxu0 %v3881
    %4583 = vmatpush.bf16.msra.mxu0 %v3877
    %4584 = vmatmul.bf16.gmra.mxu0 %v3059
    %v4585 = vpop.f32.mrf.mxu0
    %v4586 = vadd.f32 %v4573, %v4585
    %v4587 = vpop.f32.mrf.mxu0
    %4588 = vdwg.mxu0
    %4589 = vmatpush.bf16.msra.mxu0 %v3937
    %4590 = vmatpush.bf16.msra.mxu0 %v3933
    %4591 = vmatpush.bf16.msra.mxu0 %v3929
    %4592 = vmatpush.bf16.msra.mxu0 %v3925
    %4593 = vmatpush.bf16.msra.mxu0 %v3921
    %4594 = vmatpush.bf16.msra.mxu0 %v3917
    %4595 = vmatpush.bf16.msra.mxu0 %v3913
    %4596 = vmatpush.bf16.msra.mxu0 %v3909
    %4597 = vmatmul.bf16.gmra.mxu0 %v3060
    %v4598 = vpop.f32.mrf.mxu0
    %v4599 = vadd.f32 %v4586, %v4598
    %v4600 = vpop.f32.mrf.mxu0
    %4601 = vdwg.mxu0
    %4602 = vmatpush.bf16.msra.mxu0 %v3969
    %4603 = vmatpush.bf16.msra.mxu0 %v3965
    %4604 = vmatpush.bf16.msra.mxu0 %v3961
    %4605 = vmatpush.bf16.msra.mxu0 %v3957
    %4606 = vmatpush.bf16.msra.mxu0 %v3953
    %4607 = vmatpush.bf16.msra.mxu0 %v3949
    %4608 = vmatpush.bf16.msra.mxu0 %v3945
    %4609 = vmatpush.bf16.msra.mxu0 %v3941
    %4610 = vmatmul.bf16.gmra.mxu0 %v3061
    %v4611 = vpop.f32.mrf.mxu0
    %v4612 = vadd.f32 %v4599, %v4611
    %v4613 = vpop.f32.mrf.mxu0
    %4614 = vdwg.mxu0
    %4615 = vmatpush.bf16.msra.mxu0 %v4001
    %4616 = vmatpush.bf16.msra.mxu0 %v3997
    %4617 = vmatpush.bf16.msra.mxu0 %v3993
    %4618 = vmatpush.bf16.msra.mxu0 %v3989
    %4619 = vmatpush.bf16.msra.mxu0 %v3985
    %4620 = vmatpush.bf16.msra.mxu0 %v3981
    %4621 = vmatpush.bf16.msra.mxu0 %v3977
    %4622 = vmatpush.bf16.msra.mxu0 %v3973
    %4623 = vmatmul.bf16.gmra.mxu0 %v3062
    %v4624 = vpop.f32.mrf.mxu0
    %v4625 = vadd.f32 %v4612, %v4624
    %v4626 = vpop.f32.mrf.mxu0
    %4627 = vdwg.mxu0
    %4628 = vmatpush.bf16.msra.mxu0 %v4033
    %4629 = vmatpush.bf16.msra.mxu0 %v4029
    %4630 = vmatpush.bf16.msra.mxu0 %v4025
    %4631 = vmatpush.bf16.msra.mxu0 %v4021
    %4632 = vmatpush.bf16.msra.mxu0 %v4017
    %4633 = vmatpush.bf16.msra.mxu0 %v4013
    %4634 = vmatpush.bf16.msra.mxu0 %v4009
    %4635 = vmatpush.bf16.msra.mxu0 %v4005
    %4636 = vmatmul.bf16.gmra.mxu0 %v3063
    %v4637 = vpop.f32.mrf.mxu0
    %v4638 = vadd.f32 %v4625, %v4637
    %v4639 = vpop.f32.mrf.mxu0
    %4640 = vdwg.mxu0
    %4641 = vmatpush.bf16.msra.mxu0 %v4065
    %4642 = vmatpush.bf16.msra.mxu0 %v4061
    %4643 = vmatpush.bf16.msra.mxu0 %v4057
    %4644 = vmatpush.bf16.msra.mxu0 %v4053
    %4645 = vmatpush.bf16.msra.mxu0 %v4049
    %4646 = vmatpush.bf16.msra.mxu0 %v4045
    %4647 = vmatpush.bf16.msra.mxu0 %v4041
    %4648 = vmatpush.bf16.msra.mxu0 %v4037
    %4649 = vmatmul.bf16.gmra.mxu0 %v3064
    %v4650 = vpop.f32.mrf.mxu0
    %v4651 = vadd.f32 %v4638, %v4650
    %v4652 = vpop.f32.mrf.mxu0
    %4653 = vdwg.mxu0
    %4654 = vmatpush.bf16.msra.mxu0 %v4097
    %4655 = vmatpush.bf16.msra.mxu0 %v4093
    %4656 = vmatpush.bf16.msra.mxu0 %v4089
    %4657 = vmatpush.bf16.msra.mxu0 %v4085
    %4658 = vmatpush.bf16.msra.mxu0 %v4081
    %4659 = vmatpush.bf16.msra.mxu0 %v4077
    %4660 = vmatpush.bf16.msra.mxu0 %v4073
    %4661 = vmatpush.bf16.msra.mxu0 %v4069
    %4662 = vmatmul.bf16.gmra.mxu0 %v3065
    %v4663 = vpop.f32.mrf.mxu0
    %v4664 = vadd.f32 %v4651, %v4663
    %v4665 = vpop.f32.mrf.mxu0
    %4666 = vdwg.mxu0
    %4667 = vmatpush.bf16.msra.mxu0 %v3874
    %4668 = vmatpush.bf16.msra.mxu0 %v3870
    %4669 = vmatpush.bf16.msra.mxu0 %v3866
    %4670 = vmatpush.bf16.msra.mxu0 %v3862
    %4671 = vmatpush.bf16.msra.mxu0 %v3858
    %4672 = vmatpush.bf16.msra.mxu0 %v3854
    %4673 = vmatpush.bf16.msra.mxu0 %v3850
    %4674 = vmatpush.bf16.msra.mxu0 %v3846
    %4675 = vmatmul.bf16.gmra.mxu0 %v3058
    %v4676 = vpop.f32.mrf.mxu0
    %v4677 = vadd.f32 %v3070, %v4676
    %v4678 = vpop.f32.mrf.mxu0
    %4679 = vdwg.mxu0
    %4680 = vmatpush.bf16.msra.mxu0 %v3906
    %4681 = vmatpush.bf16.msra.mxu0 %v3902
    %4682 = vmatpush.bf16.msra.mxu0 %v3898
    %4683 = vmatpush.bf16.msra.mxu0 %v3894
    %4684 = vmatpush.bf16.msra.mxu0 %v3890
    %4685 = vmatpush.bf16.msra.mxu0 %v3886
    %4686 = vmatpush.bf16.msra.mxu0 %v3882
    %4687 = vmatpush.bf16.msra.mxu0 %v3878
    %4688 = vmatmul.bf16.gmra.mxu0 %v3059
    %v4689 = vpop.f32.mrf.mxu0
    %v4690 = vadd.f32 %v4677, %v4689
    %v4691 = vpop.f32.mrf.mxu0
    %4692 = vdwg.mxu0
    %4693 = vmatpush.bf16.msra.mxu0 %v3938
    %4694 = vmatpush.bf16.msra.mxu0 %v3934
    %4695 = vmatpush.bf16.msra.mxu0 %v3930
    %4696 = vmatpush.bf16.msra.mxu0 %v3926
    %4697 = vmatpush.bf16.msra.mxu0 %v3922
    %4698 = vmatpush.bf16.msra.mxu0 %v3918
    %4699 = vmatpush.bf16.msra.mxu0 %v3914
    %4700 = vmatpush.bf16.msra.mxu0 %v3910
    %4701 = vmatmul.bf16.gmra.mxu0 %v3060
    %v4702 = vpop.f32.mrf.mxu0
    %v4703 = vadd.f32 %v4690, %v4702
    %v4704 = vpop.f32.mrf.mxu0
    %4705 = vdwg.mxu0
    %4706 = vmatpush.bf16.msra.mxu0 %v3970
    %4707 = vmatpush.bf16.msra.mxu0 %v3966
    %4708 = vmatpush.bf16.msra.mxu0 %v3962
    %4709 = vmatpush.bf16.msra.mxu0 %v3958
    %4710 = vmatpush.bf16.msra.mxu0 %v3954
    %4711 = vmatpush.bf16.msra.mxu0 %v3950
    %4712 = vmatpush.bf16.msra.mxu0 %v3946
    %4713 = vmatpush.bf16.msra.mxu0 %v3942
    %4714 = vmatmul.bf16.gmra.mxu0 %v3061
    %v4715 = vpop.f32.mrf.mxu0
    %v4716 = vadd.f32 %v4703, %v4715
    %v4717 = vpop.f32.mrf.mxu0
    %4718 = vdwg.mxu0
    %4719 = vmatpush.bf16.msra.mxu0 %v4002
    %4720 = vmatpush.bf16.msra.mxu0 %v3998
    %4721 = vmatpush.bf16.msra.mxu0 %v3994
    %4722 = vmatpush.bf16.msra.mxu0 %v3990
    %4723 = vmatpush.bf16.msra.mxu0 %v3986
    %4724 = vmatpush.bf16.msra.mxu0 %v3982
    %4725 = vmatpush.bf16.msra.mxu0 %v3978
    %4726 = vmatpush.bf16.msra.mxu0 %v3974
    %4727 = vmatmul.bf16.gmra.mxu0 %v3062
    %v4728 = vpop.f32.mrf.mxu0
    %v4729 = vadd.f32 %v4716, %v4728
    %v4730 = vpop.f32.mrf.mxu0
    %4731 = vdwg.mxu0
    %4732 = vmatpush.bf16.msra.mxu0 %v4034
    %4733 = vmatpush.bf16.msra.mxu0 %v4030
    %4734 = vmatpush.bf16.msra.mxu0 %v4026
    %4735 = vmatpush.bf16.msra.mxu0 %v4022
    %4736 = vmatpush.bf16.msra.mxu0 %v4018
    %4737 = vmatpush.bf16.msra.mxu0 %v4014
    %4738 = vmatpush.bf16.msra.mxu0 %v4010
    %4739 = vmatpush.bf16.msra.mxu0 %v4006
    %4740 = vmatmul.bf16.gmra.mxu0 %v3063
    %v4741 = vpop.f32.mrf.mxu0
    %v4742 = vadd.f32 %v4729, %v4741
    %v4743 = vpop.f32.mrf.mxu0
    %4744 = vdwg.mxu0
    %4745 = vmatpush.bf16.msra.mxu0 %v4066
    %4746 = vmatpush.bf16.msra.mxu0 %v4062
    %4747 = vmatpush.bf16.msra.mxu0 %v4058
    %4748 = vmatpush.bf16.msra.mxu0 %v4054
    %4749 = vmatpush.bf16.msra.mxu0 %v4050
    %4750 = vmatpush.bf16.msra.mxu0 %v4046
    %4751 = vmatpush.bf16.msra.mxu0 %v4042
    %4752 = vmatpush.bf16.msra.mxu0 %v4038
    %4753 = vmatmul.bf16.gmra.mxu0 %v3064
    %v4754 = vpop.f32.mrf.mxu0
    %v4755 = vadd.f32 %v4742, %v4754
    %v4756 = vpop.f32.mrf.mxu0
    %4757 = vdwg.mxu0
    %4758 = vmatpush.bf16.msra.mxu0 %v4098
    %4759 = vmatpush.bf16.msra.mxu0 %v4094
    %4760 = vmatpush.bf16.msra.mxu0 %v4090
    %4761 = vmatpush.bf16.msra.mxu0 %v4086
    %4762 = vmatpush.bf16.msra.mxu0 %v4082
    %4763 = vmatpush.bf16.msra.mxu0 %v4078
    %4764 = vmatpush.bf16.msra.mxu0 %v4074
    %4765 = vmatpush.bf16.msra.mxu0 %v4070
    %4766 = vmatmul.bf16.gmra.mxu0 %v3065
    %v4767 = vpop.f32.mrf.mxu0
    %v4768 = vadd.f32 %v4755, %v4767
    %v4769 = vpop.f32.mrf.mxu0
    %4770 = vdwg.mxu0
    %v4771 = vmul.f32 %v4456, 0.01
    %v4772 = vmul.f32 %v4560, 0.01
    %v4773 = vmul.f32 %v4664, 0.01
    %v4774 = vmul.f32 %v4768, 0.01
    %v4775 = vmax.f32 %v4456, %v4771
    %v4776 = vmax.f32 %v4560, %v4772
    %v4777 = vmax.f32 %v4664, %v4773
    %v4778 = vmax.f32 %v4768, %v4774
    %v4779 = vld [vmem:[#allocation16] sm:$0xff]
    %v4780 = vld [vmem:[#allocation16 + $0x8] sm:$0xff]
    %v4781 = vld [vmem:[#allocation16 + $0x10] sm:$0xff]
    %v4782 = vld [vmem:[#allocation16 + $0x18] sm:$0xff]
    %v4783 = vld [vmem:[#allocation16 + $0x20] sm:$0xff]
    %v4784 = vld [vmem:[#allocation16 + $0x28] sm:$0xff]
    %v4785 = vld [vmem:[#allocation16 + $0x30] sm:$0xff]
    %v4786 = vld [vmem:[#allocation16 + $0x38] sm:$0xff]
    %v4787 = vld [vmem:[#allocation16 + $0x40] sm:$0xff]
    %v4788 = vld [vmem:[#allocation16 + $0x48] sm:$0xff]
    %v4789 = vld [vmem:[#allocation16 + $0x50] sm:$0xff]
    %v4790 = vld [vmem:[#allocation16 + $0x58] sm:$0xff]
    %v4791 = vld [vmem:[#allocation16 + $0x60] sm:$0xff]
    %v4792 = vld [vmem:[#allocation16 + $0x68] sm:$0xff]
    %v4793 = vld [vmem:[#allocation16 + $0x70] sm:$0xff]
    %v4794 = vld [vmem:[#allocation16 + $0x78] sm:$0xff]
    %v4795 = vld [vmem:[#allocation16 + $0x80] sm:$0xff]
    %v4796 = vld [vmem:[#allocation16 + $0x88] sm:$0xff]
    %v4797 = vld [vmem:[#allocation16 + $0x90] sm:$0xff]
    %v4798 = vld [vmem:[#allocation16 + $0x98] sm:$0xff]
    %v4799 = vld [vmem:[#allocation16 + $0xa0] sm:$0xff]
    %v4800 = vld [vmem:[#allocation16 + $0xa8] sm:$0xff]
    %v4801 = vld [vmem:[#allocation16 + $0xb0] sm:$0xff]
    %v4802 = vld [vmem:[#allocation16 + $0xb8] sm:$0xff]
    %v4803 = vld [vmem:[#allocation16 + $0xc0] sm:$0xff]
    %v4804 = vld [vmem:[#allocation16 + $0xc8] sm:$0xff]
    %v4805 = vld [vmem:[#allocation16 + $0xd0] sm:$0xff]
    %v4806 = vld [vmem:[#allocation16 + $0xd8] sm:$0xff]
    %v4807 = vld [vmem:[#allocation16 + $0xe0] sm:$0xff]
    %v4808 = vld [vmem:[#allocation16 + $0xe8] sm:$0xff]
    %v4809 = vld [vmem:[#allocation16 + $0xf0] sm:$0xff]
    %v4810 = vld [vmem:[#allocation16 + $0xf8] sm:$0xff]
    %v4811 = vld [vmem:[#allocation16 + $0x100] sm:$0xff]
    %v4812 = vld [vmem:[#allocation16 + $0x108] sm:$0xff]
    %v4813 = vld [vmem:[#allocation16 + $0x110] sm:$0xff]
    %v4814 = vld [vmem:[#allocation16 + $0x118] sm:$0xff]
    %v4815 = vld [vmem:[#allocation16 + $0x120] sm:$0xff]
    %v4816 = vld [vmem:[#allocation16 + $0x128] sm:$0xff]
    %v4817 = vld [vmem:[#allocation16 + $0x130] sm:$0xff]
    %v4818 = vld [vmem:[#allocation16 + $0x138] sm:$0xff]
    %v4819 = vld [vmem:[#allocation16 + $0x140] sm:$0xff]
    %v4820 = vld [vmem:[#allocation16 + $0x148] sm:$0xff]
    %v4821 = vld [vmem:[#allocation16 + $0x150] sm:$0xff]
    %v4822 = vld [vmem:[#allocation16 + $0x158] sm:$0xff]
    %v4823 = vld [vmem:[#allocation16 + $0x160] sm:$0xff]
    %v4824 = vld [vmem:[#allocation16 + $0x168] sm:$0xff]
    %v4825 = vld [vmem:[#allocation16 + $0x170] sm:$0xff]
    %v4826 = vld [vmem:[#allocation16 + $0x178] sm:$0xff]
    %v4827 = vld [vmem:[#allocation16 + $0x180] sm:$0xff]
    %v4828 = vld [vmem:[#allocation16 + $0x188] sm:$0xff]
    %v4829 = vld [vmem:[#allocation16 + $0x190] sm:$0xff]
    %v4830 = vld [vmem:[#allocation16 + $0x198] sm:$0xff]
    %v4831 = vld [vmem:[#allocation16 + $0x1a0] sm:$0xff]
    %v4832 = vld [vmem:[#allocation16 + $0x1a8] sm:$0xff]
    %v4833 = vld [vmem:[#allocation16 + $0x1b0] sm:$0xff]
    %v4834 = vld [vmem:[#allocation16 + $0x1b8] sm:$0xff]
    %v4835 = vld [vmem:[#allocation16 + $0x1c0] sm:$0xff]
    %v4836 = vld [vmem:[#allocation16 + $0x1c8] sm:$0xff]
    %v4837 = vld [vmem:[#allocation16 + $0x1d0] sm:$0xff]
    %v4838 = vld [vmem:[#allocation16 + $0x1d8] sm:$0xff]
    %v4839 = vld [vmem:[#allocation16 + $0x1e0] sm:$0xff]
    %v4840 = vld [vmem:[#allocation16 + $0x1e8] sm:$0xff]
    %v4841 = vld [vmem:[#allocation16 + $0x1f0] sm:$0xff]
    %v4842 = vld [vmem:[#allocation16 + $0x1f8] sm:$0xff]
    %v4843 = vld [vmem:[%s10] sm:$0x3]
    %v4844 = vpack.c.bf16 %v4775, %v4775
    %v4845 = vpack.c.bf16 %v4776, %v4776
    %v4846 = vpack.c.bf16 %v4777, %v4777
    %v4847 = vpack.c.bf16 %v4778, %v4778
    %v4849 = vperm.slane %v4843, 0
    %v4850 = vperm.slane %v4843, 1
    %v4917 = vunpack.c.l.b16 %v4779
    %v4918 = vunpack.c.h.b16 %v4779
    %v4919 = vunpack.c.l.b16 %v4780
    %v4920 = vunpack.c.h.b16 %v4780
    %v4921 = vunpack.c.l.b16 %v4781
    %v4922 = vunpack.c.h.b16 %v4781
    %v4923 = vunpack.c.l.b16 %v4782
    %v4924 = vunpack.c.h.b16 %v4782
    %v4925 = vunpack.c.l.b16 %v4783
    %v4926 = vunpack.c.h.b16 %v4783
    %v4927 = vunpack.c.l.b16 %v4784
    %v4928 = vunpack.c.h.b16 %v4784
    %v4929 = vunpack.c.l.b16 %v4785
    %v4930 = vunpack.c.h.b16 %v4785
    %v4931 = vunpack.c.l.b16 %v4786
    %v4932 = vunpack.c.h.b16 %v4786
    %v4933 = vunpack.c.l.b16 %v4787
    %v4934 = vunpack.c.h.b16 %v4787
    %v4935 = vunpack.c.l.b16 %v4788
    %v4936 = vunpack.c.h.b16 %v4788
    %v4937 = vunpack.c.l.b16 %v4789
    %v4938 = vunpack.c.h.b16 %v4789
    %v4939 = vunpack.c.l.b16 %v4790
    %v4940 = vunpack.c.h.b16 %v4790
    %v4941 = vunpack.c.l.b16 %v4791
    %v4942 = vunpack.c.h.b16 %v4791
    %v4943 = vunpack.c.l.b16 %v4792
    %v4944 = vunpack.c.h.b16 %v4792
    %v4945 = vunpack.c.l.b16 %v4793
    %v4946 = vunpack.c.h.b16 %v4793
    %v4947 = vunpack.c.l.b16 %v4794
    %v4948 = vunpack.c.h.b16 %v4794
    %v4949 = vunpack.c.l.b16 %v4795
    %v4950 = vunpack.c.h.b16 %v4795
    %v4951 = vunpack.c.l.b16 %v4796
    %v4952 = vunpack.c.h.b16 %v4796
    %v4953 = vunpack.c.l.b16 %v4797
    %v4954 = vunpack.c.h.b16 %v4797
    %v4955 = vunpack.c.l.b16 %v4798
    %v4956 = vunpack.c.h.b16 %v4798
    %v4957 = vunpack.c.l.b16 %v4799
    %v4958 = vunpack.c.h.b16 %v4799
    %v4959 = vunpack.c.l.b16 %v4800
    %v4960 = vunpack.c.h.b16 %v4800
    %v4961 = vunpack.c.l.b16 %v4801
    %v4962 = vunpack.c.h.b16 %v4801
    %v4963 = vunpack.c.l.b16 %v4802
    %v4964 = vunpack.c.h.b16 %v4802
    %v4965 = vunpack.c.l.b16 %v4803
    %v4966 = vunpack.c.h.b16 %v4803
    %v4967 = vunpack.c.l.b16 %v4804
    %v4968 = vunpack.c.h.b16 %v4804
    %v4969 = vunpack.c.l.b16 %v4805
    %v4970 = vunpack.c.h.b16 %v4805
    %v4971 = vunpack.c.l.b16 %v4806
    %v4972 = vunpack.c.h.b16 %v4806
    %v4973 = vunpack.c.l.b16 %v4807
    %v4974 = vunpack.c.h.b16 %v4807
    %v4975 = vunpack.c.l.b16 %v4808
    %v4976 = vunpack.c.h.b16 %v4808
    %v4977 = vunpack.c.l.b16 %v4809
    %v4978 = vunpack.c.h.b16 %v4809
    %v4979 = vunpack.c.l.b16 %v4810
    %v4980 = vunpack.c.h.b16 %v4810
    %v4981 = vunpack.c.l.b16 %v4811
    %v4982 = vunpack.c.h.b16 %v4811
    %v4983 = vunpack.c.l.b16 %v4812
    %v4984 = vunpack.c.h.b16 %v4812
    %v4985 = vunpack.c.l.b16 %v4813
    %v4986 = vunpack.c.h.b16 %v4813
    %v4987 = vunpack.c.l.b16 %v4814
    %v4988 = vunpack.c.h.b16 %v4814
    %v4989 = vunpack.c.l.b16 %v4815
    %v4990 = vunpack.c.h.b16 %v4815
    %v4991 = vunpack.c.l.b16 %v4816
    %v4992 = vunpack.c.h.b16 %v4816
    %v4993 = vunpack.c.l.b16 %v4817
    %v4994 = vunpack.c.h.b16 %v4817
    %v4995 = vunpack.c.l.b16 %v4818
    %v4996 = vunpack.c.h.b16 %v4818
    %v4997 = vunpack.c.l.b16 %v4819
    %v4998 = vunpack.c.h.b16 %v4819
    %v4999 = vunpack.c.l.b16 %v4820
    %v5000 = vunpack.c.h.b16 %v4820
    %v5001 = vunpack.c.l.b16 %v4821
    %v5002 = vunpack.c.h.b16 %v4821
    %v5003 = vunpack.c.l.b16 %v4822
    %v5004 = vunpack.c.h.b16 %v4822
    %v5005 = vunpack.c.l.b16 %v4823
    %v5006 = vunpack.c.h.b16 %v4823
    %v5007 = vunpack.c.l.b16 %v4824
    %v5008 = vunpack.c.h.b16 %v4824
    %v5009 = vunpack.c.l.b16 %v4825
    %v5010 = vunpack.c.h.b16 %v4825
    %v5011 = vunpack.c.l.b16 %v4826
    %v5012 = vunpack.c.h.b16 %v4826
    %v5013 = vunpack.c.l.b16 %v4827
    %v5014 = vunpack.c.h.b16 %v4827
    %v5015 = vunpack.c.l.b16 %v4828
    %v5016 = vunpack.c.h.b16 %v4828
    %v5017 = vunpack.c.l.b16 %v4829
    %v5018 = vunpack.c.h.b16 %v4829
    %v5019 = vunpack.c.l.b16 %v4830
    %v5020 = vunpack.c.h.b16 %v4830
    %v5021 = vunpack.c.l.b16 %v4831
    %v5022 = vunpack.c.h.b16 %v4831
    %v5023 = vunpack.c.l.b16 %v4832
    %v5024 = vunpack.c.h.b16 %v4832
    %v5025 = vunpack.c.l.b16 %v4833
    %v5026 = vunpack.c.h.b16 %v4833
    %v5027 = vunpack.c.l.b16 %v4834
    %v5028 = vunpack.c.h.b16 %v4834
    %v5029 = vunpack.c.l.b16 %v4835
    %v5030 = vunpack.c.h.b16 %v4835
    %v5031 = vunpack.c.l.b16 %v4836
    %v5032 = vunpack.c.h.b16 %v4836
    %v5033 = vunpack.c.l.b16 %v4837
    %v5034 = vunpack.c.h.b16 %v4837
    %v5035 = vunpack.c.l.b16 %v4838
    %v5036 = vunpack.c.h.b16 %v4838
    %v5037 = vunpack.c.l.b16 %v4839
    %v5038 = vunpack.c.h.b16 %v4839
    %v5039 = vunpack.c.l.b16 %v4840
    %v5040 = vunpack.c.h.b16 %v4840
    %v5041 = vunpack.c.l.b16 %v4841
    %v5042 = vunpack.c.h.b16 %v4841
    %v5043 = vunpack.c.l.b16 %v4842
    %v5044 = vunpack.c.h.b16 %v4842
    %v5045 = vpack.c.b16 %v4919, %v4917
    %v5046 = vpack.c.b16 %v4920, %v4918
    %v5047 = vpack.c.b16 %v4923, %v4921
    %v5048 = vpack.c.b16 %v4924, %v4922
    %v5049 = vpack.c.b16 %v4927, %v4925
    %v5050 = vpack.c.b16 %v4928, %v4926
    %v5051 = vpack.c.b16 %v4931, %v4929
    %v5052 = vpack.c.b16 %v4932, %v4930
    %v5053 = vpack.c.b16 %v4935, %v4933
    %v5054 = vpack.c.b16 %v4936, %v4934
    %v5055 = vpack.c.b16 %v4939, %v4937
    %v5056 = vpack.c.b16 %v4940, %v4938
    %v5057 = vpack.c.b16 %v4943, %v4941
    %v5058 = vpack.c.b16 %v4944, %v4942
    %v5059 = vpack.c.b16 %v4947, %v4945
    %v5060 = vpack.c.b16 %v4948, %v4946
    %v5061 = vpack.c.b16 %v4951, %v4949
    %v5062 = vpack.c.b16 %v4952, %v4950
    %v5063 = vpack.c.b16 %v4955, %v4953
    %v5064 = vpack.c.b16 %v4956, %v4954
    %v5065 = vpack.c.b16 %v4959, %v4957
    %v5066 = vpack.c.b16 %v4960, %v4958
    %v5067 = vpack.c.b16 %v4963, %v4961
    %v5068 = vpack.c.b16 %v4964, %v4962
    %v5069 = vpack.c.b16 %v4967, %v4965
    %v5070 = vpack.c.b16 %v4968, %v4966
    %v5071 = vpack.c.b16 %v4971, %v4969
    %v5072 = vpack.c.b16 %v4972, %v4970
    %v5073 = vpack.c.b16 %v4975, %v4973
    %v5074 = vpack.c.b16 %v4976, %v4974
    %v5075 = vpack.c.b16 %v4979, %v4977
    %v5076 = vpack.c.b16 %v4980, %v4978
    %v5077 = vpack.c.b16 %v4983, %v4981
    %v5078 = vpack.c.b16 %v4984, %v4982
    %v5079 = vpack.c.b16 %v4987, %v4985
    %v5080 = vpack.c.b16 %v4988, %v4986
    %v5081 = vpack.c.b16 %v4991, %v4989
    %v5082 = vpack.c.b16 %v4992, %v4990
    %v5083 = vpack.c.b16 %v4995, %v4993
    %v5084 = vpack.c.b16 %v4996, %v4994
    %v5085 = vpack.c.b16 %v4999, %v4997
    %v5086 = vpack.c.b16 %v5000, %v4998
    %v5087 = vpack.c.b16 %v5003, %v5001
    %v5088 = vpack.c.b16 %v5004, %v5002
    %v5089 = vpack.c.b16 %v5007, %v5005
    %v5090 = vpack.c.b16 %v5008, %v5006
    %v5091 = vpack.c.b16 %v5011, %v5009
    %v5092 = vpack.c.b16 %v5012, %v5010
    %v5093 = vpack.c.b16 %v5015, %v5013
    %v5094 = vpack.c.b16 %v5016, %v5014
    %v5095 = vpack.c.b16 %v5019, %v5017
    %v5096 = vpack.c.b16 %v5020, %v5018
    %v5097 = vpack.c.b16 %v5023, %v5021
    %v5098 = vpack.c.b16 %v5024, %v5022
    %v5099 = vpack.c.b16 %v5027, %v5025
    %v5100 = vpack.c.b16 %v5028, %v5026
    %v5101 = vpack.c.b16 %v5031, %v5029
    %v5102 = vpack.c.b16 %v5032, %v5030
    %v5103 = vpack.c.b16 %v5035, %v5033
    %v5104 = vpack.c.b16 %v5036, %v5034
    %v5105 = vpack.c.b16 %v5039, %v5037
    %v5106 = vpack.c.b16 %v5040, %v5038
    %v5107 = vpack.c.b16 %v5043, %v5041
    %v5108 = vpack.c.b16 %v5044, %v5042
    %5173 = vmatpush.bf16.msra.mxu0 %v5059
    %5174 = vmatpush.bf16.msra.mxu0 %v5057
    %5175 = vmatpush.bf16.msra.mxu0 %v5055
    %5176 = vmatpush.bf16.msra.mxu0 %v5053
    %5177 = vmatpush.bf16.msra.mxu0 %v5051
    %5178 = vmatpush.bf16.msra.mxu0 %v5049
    %5179 = vmatpush.bf16.msra.mxu0 %v5047
    %5180 = vmatpush.bf16.msra.mxu0 %v5045
    %5181 = vmatmul.bf16.gmra.mxu0 %v4844
    %v5182 = vpop.f32.mrf.mxu0
    %v5183 = vadd.f32 %v4849, %v5182
    %v5184 = vpop.f32.mrf.mxu0
    %5185 = vdwg.mxu0
    %5186 = vmatpush.bf16.msra.mxu0 %v5075
    %5187 = vmatpush.bf16.msra.mxu0 %v5073
    %5188 = vmatpush.bf16.msra.mxu0 %v5071
    %5189 = vmatpush.bf16.msra.mxu0 %v5069
    %5190 = vmatpush.bf16.msra.mxu0 %v5067
    %5191 = vmatpush.bf16.msra.mxu0 %v5065
    %5192 = vmatpush.bf16.msra.mxu0 %v5063
    %5193 = vmatpush.bf16.msra.mxu0 %v5061
    %5194 = vmatmul.bf16.gmra.mxu0 %v4845
    %v5195 = vpop.f32.mrf.mxu0
    %v5196 = vadd.f32 %v5183, %v5195
    %v5197 = vpop.f32.mrf.mxu0
    %5198 = vdwg.mxu0
    %5199 = vmatpush.bf16.msra.mxu0 %v5091
    %5200 = vmatpush.bf16.msra.mxu0 %v5089
    %5201 = vmatpush.bf16.msra.mxu0 %v5087
    %5202 = vmatpush.bf16.msra.mxu0 %v5085
    %5203 = vmatpush.bf16.msra.mxu0 %v5083
    %5204 = vmatpush.bf16.msra.mxu0 %v5081
    %5205 = vmatpush.bf16.msra.mxu0 %v5079
    %5206 = vmatpush.bf16.msra.mxu0 %v5077
    %5207 = vmatmul.bf16.gmra.mxu0 %v4846
    %v5208 = vpop.f32.mrf.mxu0
    %v5209 = vadd.f32 %v5196, %v5208
    %v5210 = vpop.f32.mrf.mxu0
    %5211 = vdwg.mxu0
    %5212 = vmatpush.bf16.msra.mxu0 %v5107
    %5213 = vmatpush.bf16.msra.mxu0 %v5105
    %5214 = vmatpush.bf16.msra.mxu0 %v5103
    %5215 = vmatpush.bf16.msra.mxu0 %v5101
    %5216 = vmatpush.bf16.msra.mxu0 %v5099
    %5217 = vmatpush.bf16.msra.mxu0 %v5097
    %5218 = vmatpush.bf16.msra.mxu0 %v5095
    %5219 = vmatpush.bf16.msra.mxu0 %v5093
    %5220 = vmatmul.bf16.gmra.mxu0 %v4847
    %v5221 = vpop.f32.mrf.mxu0
    %v5222 = vadd.f32 %v5209, %v5221
    %v5223 = vpop.f32.mrf.mxu0
    %5224 = vdwg.mxu0
    %5225 = vmatpush.bf16.msra.mxu0 %v5060
    %5226 = vmatpush.bf16.msra.mxu0 %v5058
    %5227 = vmatpush.bf16.msra.mxu0 %v5056
    %5228 = vmatpush.bf16.msra.mxu0 %v5054
    %5229 = vmatpush.bf16.msra.mxu0 %v5052
    %5230 = vmatpush.bf16.msra.mxu0 %v5050
    %5231 = vmatpush.bf16.msra.mxu0 %v5048
    %5232 = vmatpush.bf16.msra.mxu0 %v5046
    %5233 = vmatmul.bf16.gmra.mxu0 %v4844
    %v5234 = vpop.f32.mrf.mxu0
    %v5235 = vadd.f32 %v4850, %v5234
    %v5236 = vpop.f32.mrf.mxu0
    %5237 = vdwg.mxu0
    %5238 = vmatpush.bf16.msra.mxu0 %v5076
    %5239 = vmatpush.bf16.msra.mxu0 %v5074
    %5240 = vmatpush.bf16.msra.mxu0 %v5072
    %5241 = vmatpush.bf16.msra.mxu0 %v5070
    %5242 = vmatpush.bf16.msra.mxu0 %v5068
    %5243 = vmatpush.bf16.msra.mxu0 %v5066
    %5244 = vmatpush.bf16.msra.mxu0 %v5064
    %5245 = vmatpush.bf16.msra.mxu0 %v5062
    %5246 = vmatmul.bf16.gmra.mxu0 %v4845
    %v5247 = vpop.f32.mrf.mxu0
    %v5248 = vadd.f32 %v5235, %v5247
    %v5249 = vpop.f32.mrf.mxu0
    %5250 = vdwg.mxu0
    %5251 = vmatpush.bf16.msra.mxu0 %v5092
    %5252 = vmatpush.bf16.msra.mxu0 %v5090
    %5253 = vmatpush.bf16.msra.mxu0 %v5088
    %5254 = vmatpush.bf16.msra.mxu0 %v5086
    %5255 = vmatpush.bf16.msra.mxu0 %v5084
    %5256 = vmatpush.bf16.msra.mxu0 %v5082
    %5257 = vmatpush.bf16.msra.mxu0 %v5080
    %5258 = vmatpush.bf16.msra.mxu0 %v5078
    %5259 = vmatmul.bf16.gmra.mxu0 %v4846
    %v5260 = vpop.f32.mrf.mxu0
    %v5261 = vadd.f32 %v5248, %v5260
    %v5262 = vpop.f32.mrf.mxu0
    %5263 = vdwg.mxu0
    %5264 = vmatpush.bf16.msra.mxu0 %v5108
    %5265 = vmatpush.bf16.msra.mxu0 %v5106
    %5266 = vmatpush.bf16.msra.mxu0 %v5104
    %5267 = vmatpush.bf16.msra.mxu0 %v5102
    %5268 = vmatpush.bf16.msra.mxu0 %v5100
    %5269 = vmatpush.bf16.msra.mxu0 %v5098
    %5270 = vmatpush.bf16.msra.mxu0 %v5096
    %5271 = vmatpush.bf16.msra.mxu0 %v5094
    %5272 = vmatmul.bf16.gmra.mxu0 %v4847
    %v5273 = vpop.f32.mrf.mxu0
    %v5274 = vadd.f32 %v5261, %v5273
    %v5275 = vpop.f32.mrf.mxu0
    %5276 = vdwg.mxu0
    %v5277 = vmul.f32 %v5222, 0.01
    %v5278 = vmul.f32 %v5274, 0.01
    %v5279 = vmax.f32 %v5222, %v5277
    %v5280 = vmax.f32 %v5274, %v5278
    %v5281 = vld [vmem:[#allocation17] sm:$0xf]
    %v5282 = vld [vmem:[#allocation17 + $0x4] sm:$0xf]
    %v5283 = vld [vmem:[#allocation17 + $0x8] sm:$0xf]
    %v5284 = vld [vmem:[#allocation17 + $0xc] sm:$0xf]
    %v5285 = vld [vmem:[#allocation17 + $0x10] sm:$0xf]
    %v5286 = vld [vmem:[#allocation17 + $0x14] sm:$0xf]
    %v5287 = vld [vmem:[#allocation17 + $0x18] sm:$0xf]
    %v5288 = vld [vmem:[#allocation17 + $0x1c] sm:$0xf]
    %v5289 = vld [vmem:[#allocation17 + $0x20] sm:$0xf]
    %v5290 = vld [vmem:[#allocation17 + $0x24] sm:$0xf]
    %v5291 = vld [vmem:[#allocation17 + $0x28] sm:$0xf]
    %v5292 = vld [vmem:[#allocation17 + $0x2c] sm:$0xf]
    %v5293 = vld [vmem:[#allocation17 + $0x30] sm:$0xf]
    %v5294 = vld [vmem:[#allocation17 + $0x34] sm:$0xf]
    %v5295 = vld [vmem:[#allocation17 + $0x38] sm:$0xf]
    %v5296 = vld [vmem:[#allocation17 + $0x3c] sm:$0xf]
    %v5297 = vld [vmem:[#allocation17 + $0x40] sm:$0xf]
    %v5298 = vld [vmem:[#allocation17 + $0x44] sm:$0xf]
    %v5299 = vld [vmem:[#allocation17 + $0x48] sm:$0xf]
    %v5300 = vld [vmem:[#allocation17 + $0x4c] sm:$0xf]
    %v5301 = vld [vmem:[#allocation17 + $0x50] sm:$0xf]
    %v5302 = vld [vmem:[#allocation17 + $0x54] sm:$0xf]
    %v5303 = vld [vmem:[#allocation17 + $0x58] sm:$0xf]
    %v5304 = vld [vmem:[#allocation17 + $0x5c] sm:$0xf]
    %v5305 = vld [vmem:[#allocation17 + $0x60] sm:$0xf]
    %v5306 = vld [vmem:[#allocation17 + $0x64] sm:$0xf]
    %v5307 = vld [vmem:[#allocation17 + $0x68] sm:$0xf]
    %v5308 = vld [vmem:[#allocation17 + $0x6c] sm:$0xf]
    %v5309 = vld [vmem:[#allocation17 + $0x70] sm:$0xf]
    %v5310 = vld [vmem:[#allocation17 + $0x74] sm:$0xf]
    %v5311 = vld [vmem:[#allocation17 + $0x78] sm:$0xf]
    %v5312 = vld [vmem:[#allocation17 + $0x7c] sm:$0xf]
    %v5313 = vld [vmem:[%s12] sm:$0x1]
    %v5314 = vpack.c.bf16 %v5279, %v5279
    %v5315 = vpack.c.bf16 %v5280, %v5280
    %v5317 = vperm.slane %v5313, 0
    %v5351 = vunpack.c.l.b16 %v5281
    %v5352 = vunpack.c.l.b16 %v5282
    %v5353 = vunpack.c.l.b16 %v5283
    %v5354 = vunpack.c.l.b16 %v5284
    %v5355 = vunpack.c.l.b16 %v5285
    %v5356 = vunpack.c.l.b16 %v5286
    %v5357 = vunpack.c.l.b16 %v5287
    %v5358 = vunpack.c.l.b16 %v5288
    %v5359 = vunpack.c.l.b16 %v5289
    %v5360 = vunpack.c.l.b16 %v5290
    %v5361 = vunpack.c.l.b16 %v5291
    %v5362 = vunpack.c.l.b16 %v5292
    %v5363 = vunpack.c.l.b16 %v5293
    %v5364 = vunpack.c.l.b16 %v5294
    %v5365 = vunpack.c.l.b16 %v5295
    %v5366 = vunpack.c.l.b16 %v5296
    %v5367 = vunpack.c.l.b16 %v5297
    %v5368 = vunpack.c.l.b16 %v5298
    %v5369 = vunpack.c.l.b16 %v5299
    %v5370 = vunpack.c.l.b16 %v5300
    %v5371 = vunpack.c.l.b16 %v5301
    %v5372 = vunpack.c.l.b16 %v5302
    %v5373 = vunpack.c.l.b16 %v5303
    %v5374 = vunpack.c.l.b16 %v5304
    %v5375 = vunpack.c.l.b16 %v5305
    %v5376 = vunpack.c.l.b16 %v5306
    %v5377 = vunpack.c.l.b16 %v5307
    %v5378 = vunpack.c.l.b16 %v5308
    %v5379 = vunpack.c.l.b16 %v5309
    %v5380 = vunpack.c.l.b16 %v5310
    %v5381 = vunpack.c.l.b16 %v5311
    %v5382 = vunpack.c.l.b16 %v5312
    %v5383 = vpack.c.b16 %v5352, %v5351
    %v5384 = vpack.c.b16 %v5354, %v5353
    %v5385 = vpack.c.b16 %v5356, %v5355
    %v5386 = vpack.c.b16 %v5358, %v5357
    %v5387 = vpack.c.b16 %v5360, %v5359
    %v5388 = vpack.c.b16 %v5362, %v5361
    %v5389 = vpack.c.b16 %v5364, %v5363
    %v5390 = vpack.c.b16 %v5366, %v5365
    %v5391 = vpack.c.b16 %v5368, %v5367
    %v5392 = vpack.c.b16 %v5370, %v5369
    %v5393 = vpack.c.b16 %v5372, %v5371
    %v5394 = vpack.c.b16 %v5374, %v5373
    %v5395 = vpack.c.b16 %v5376, %v5375
    %v5396 = vpack.c.b16 %v5378, %v5377
    %v5397 = vpack.c.b16 %v5380, %v5379
    %v5398 = vpack.c.b16 %v5382, %v5381
    %5415 = vmatpush.bf16.msra.mxu0 %v5390
    %5416 = vmatpush.bf16.msra.mxu0 %v5389
    %5417 = vmatpush.bf16.msra.mxu0 %v5388
    %5418 = vmatpush.bf16.msra.mxu0 %v5387
    %5419 = vmatpush.bf16.msra.mxu0 %v5386
    %5420 = vmatpush.bf16.msra.mxu0 %v5385
    %5421 = vmatpush.bf16.msra.mxu0 %v5384
    %5422 = vmatpush.bf16.msra.mxu0 %v5383
    %5423 = vmatmul.bf16.gmra.mxu0 %v5314
    %v5424 = vpop.f32.mrf.mxu0
    %v5425 = vadd.f32 %v5317, %v5424
    %v5426 = vpop.f32.mrf.mxu0
    %5427 = vdwg.mxu0
    %5428 = vmatpush.bf16.msra.mxu0 %v5398
    %5429 = vmatpush.bf16.msra.mxu0 %v5397
    %5430 = vmatpush.bf16.msra.mxu0 %v5396
    %5431 = vmatpush.bf16.msra.mxu0 %v5395
    %5432 = vmatpush.bf16.msra.mxu0 %v5394
    %5433 = vmatpush.bf16.msra.mxu0 %v5393
    %5434 = vmatpush.bf16.msra.mxu0 %v5392
    %5435 = vmatpush.bf16.msra.mxu0 %v5391
    %5436 = vmatmul.bf16.gmra.mxu0 %v5315
    %v5437 = vpop.f32.mrf.mxu0
    %v5438 = vadd.f32 %v5425, %v5437
    %v5439 = vpop.f32.mrf.mxu0
    %5440 = vdwg.mxu0
    %v5441 = vmul.f32 %v5438, 0.01
    %v5442 = vmax.f32 %v5438, %v5441
    %v5443 = vld [vmem:[#allocation19] sm:$0xf]
    %v5444 = vld [vmem:[#allocation19 + $0x4] sm:$0xf]
    %v5445 = vld [vmem:[#allocation19 + $0x8] sm:$0xf]
    %v5446 = vld [vmem:[#allocation19 + $0xc] sm:$0xf]
    %v5447 = vld [vmem:[#allocation19 + $0x10] sm:$0xf]
    %v5448 = vld [vmem:[#allocation19 + $0x14] sm:$0xf]
    %v5449 = vld [vmem:[#allocation19 + $0x18] sm:$0xf]
    %v5450 = vld [vmem:[#allocation19 + $0x1c] sm:$0xf]
    %v5451 = vld [vmem:[#allocation19 + $0x20] sm:$0xf]
    %v5452 = vld [vmem:[#allocation19 + $0x24] sm:$0xf]
    %v5453 = vld [vmem:[#allocation19 + $0x28] sm:$0xf]
    %v5454 = vld [vmem:[#allocation19 + $0x2c] sm:$0xf]
    %v5455 = vld [vmem:[#allocation19 + $0x30] sm:$0xf]
    %v5456 = vld [vmem:[#allocation19 + $0x34] sm:$0xf]
    %v5457 = vld [vmem:[#allocation19 + $0x38] sm:$0xf]
    %v5458 = vld [vmem:[#allocation19 + $0x3c] sm:$0xf]
    %v5459 = vld [vmem:[%s14] sm:$0x1]
    %v5460 = vpack.c.bf16 %v5442, %v5442
    %v5462 = vperm.slane %v5459, 0
    %v5480 = vunpack.c.l.b16 %v5443
    %v5481 = vunpack.c.l.b16 %v5444
    %v5482 = vunpack.c.l.b16 %v5445
    %v5483 = vunpack.c.l.b16 %v5446
    %v5484 = vunpack.c.l.b16 %v5447
    %v5485 = vunpack.c.l.b16 %v5448
    %v5486 = vunpack.c.l.b16 %v5449
    %v5487 = vunpack.c.l.b16 %v5450
    %v5488 = vunpack.c.l.b16 %v5451
    %v5489 = vunpack.c.l.b16 %v5452
    %v5490 = vunpack.c.l.b16 %v5453
    %v5491 = vunpack.c.l.b16 %v5454
    %v5492 = vunpack.c.l.b16 %v5455
    %v5493 = vunpack.c.l.b16 %v5456
    %v5494 = vunpack.c.l.b16 %v5457
    %v5495 = vunpack.c.l.b16 %v5458
    %v5496 = vpack.c.b16 %v5481, %v5480
    %v5497 = vpack.c.b16 %v5483, %v5482
    %v5498 = vpack.c.b16 %v5485, %v5484
    %v5499 = vpack.c.b16 %v5487, %v5486
    %v5500 = vpack.c.b16 %v5489, %v5488
    %v5501 = vpack.c.b16 %v5491, %v5490
    %v5502 = vpack.c.b16 %v5493, %v5492
    %v5503 = vpack.c.b16 %v5495, %v5494
    %5512 = vmatpush.bf16.msra.mxu0 %v5503
    %5513 = vmatpush.bf16.msra.mxu0 %v5502
    %5514 = vmatpush.bf16.msra.mxu0 %v5501
    %5515 = vmatpush.bf16.msra.mxu0 %v5500
    %5516 = vmatpush.bf16.msra.mxu0 %v5499
    %5517 = vmatpush.bf16.msra.mxu0 %v5498
    %5518 = vmatpush.bf16.msra.mxu0 %v5497
    %5519 = vmatpush.bf16.msra.mxu0 %v5496
    %5520 = vmatmul.bf16.gmra.mxu0 %v5460
    %v5521 = vpop.f32.mrf.mxu0
    %v5522 = vadd.f32 %v5462, %v5521
    %v5523 = vpop.f32.mrf.mxu0
    %5524 = vdwg.mxu0
    %v5525 = vmul.f32 %v5522, 0.01
    %v5526 = vmax.f32 %v5522, %v5525
    %v5527 = vld [vmem:[#allocation20] sm:$0xf]
    %v5528 = vld [vmem:[#allocation20 + $0x4] sm:$0xf]
    %v5529 = vld [vmem:[#allocation20 + $0x8] sm:$0xf]
    %v5530 = vld [vmem:[#allocation20 + $0xc] sm:$0xf]
    %v5531 = vld [vmem:[#allocation20 + $0x10] sm:$0xf]
    %v5532 = vld [vmem:[#allocation20 + $0x14] sm:$0xf]
    %v5533 = vld [vmem:[#allocation20 + $0x18] sm:$0xf]
    %v5534 = vld [vmem:[#allocation20 + $0x1c] sm:$0xf]
    %v5535 = vld [vmem:[#allocation20 + $0x20] sm:$0xf]
    %v5536 = vld [vmem:[#allocation20 + $0x24] sm:$0xf]
    %v5537 = vld [vmem:[#allocation20 + $0x28] sm:$0xf]
    %v5538 = vld [vmem:[#allocation20 + $0x2c] sm:$0xf]
    %v5539 = vld [vmem:[#allocation20 + $0x30] sm:$0xf]
    %v5540 = vld [vmem:[#allocation20 + $0x34] sm:$0xf]
    %v5541 = vld [vmem:[#allocation20 + $0x38] sm:$0xf]
    %v5542 = vld [vmem:[#allocation20 + $0x3c] sm:$0xf]
    %v5543 = vld [vmem:[%s16] sm:$0x1]
    %v5544 = vpack.c.bf16 %v5526, %v5526
    %v5546 = vperm.slane %v5543, 0
    %v5564 = vunpack.c.l.b16 %v5527
    %v5565 = vunpack.c.l.b16 %v5528
    %v5566 = vunpack.c.l.b16 %v5529
    %v5567 = vunpack.c.l.b16 %v5530
    %v5568 = vunpack.c.l.b16 %v5531
    %v5569 = vunpack.c.l.b16 %v5532
    %v5570 = vunpack.c.l.b16 %v5533
    %v5571 = vunpack.c.l.b16 %v5534
    %v5572 = vunpack.c.l.b16 %v5535
    %v5573 = vunpack.c.l.b16 %v5536
    %v5574 = vunpack.c.l.b16 %v5537
    %v5575 = vunpack.c.l.b16 %v5538
    %v5576 = vunpack.c.l.b16 %v5539
    %v5577 = vunpack.c.l.b16 %v5540
    %v5578 = vunpack.c.l.b16 %v5541
    %v5579 = vunpack.c.l.b16 %v5542
    %v5580 = vpack.c.b16 %v5565, %v5564
    %v5581 = vpack.c.b16 %v5567, %v5566
    %v5582 = vpack.c.b16 %v5569, %v5568
    %v5583 = vpack.c.b16 %v5571, %v5570
    %v5584 = vpack.c.b16 %v5573, %v5572
    %v5585 = vpack.c.b16 %v5575, %v5574
    %v5586 = vpack.c.b16 %v5577, %v5576
    %v5587 = vpack.c.b16 %v5579, %v5578
    %5596 = vmatpush.bf16.msra.mxu0 %v5587
    %5597 = vmatpush.bf16.msra.mxu0 %v5586
    %5598 = vmatpush.bf16.msra.mxu0 %v5585
    %5599 = vmatpush.bf16.msra.mxu0 %v5584
    %5600 = vmatpush.bf16.msra.mxu0 %v5583
    %5601 = vmatpush.bf16.msra.mxu0 %v5582
    %5602 = vmatpush.bf16.msra.mxu0 %v5581
    %5603 = vmatpush.bf16.msra.mxu0 %v5580
    %5604 = vmatmul.bf16.gmra.mxu0 %v5544
    %v5605 = vpop.f32.mrf.mxu0
    %v5606 = vadd.f32 %v5546, %v5605
    %v5607 = vpop.f32.mrf.mxu0
    %5608 = vdwg.mxu0
    %v5609 = vsub.f32 0.0, %v5606
    %v5610 = vmul.f32 %v5609, 1.442695
    %v5611 = vpow.pop %v5610
    %v5612 = vadd.f32 %v5611, 1.0
    %v5613 = vrcp.pop %v5612
    %v5614 = vmul.f32 %v5612, %v5613
    %v5615 = vsub.f32 1.0, %v5614
    %v5616 = vmul.f32 %v5613, %v5615
    %v5617 = vadd.f32 %v5613, %v5616
    %vm5618 = vweird.f32 %v5612
    %vm5619 = vweird.f32 %v5613
    %vm5620 = vmor %vm5618, %vm5619
    %v5621 = vsel %vm5620, %v5613, %v5617
    %v5622 = vand.u32 2147483647, %v5612
    %vm5623 = vcmp.eq.f32.partialorder %v5622, 8.507059e+37
    %v5624 = vand.u32 %v5612, 2147483648
    %v5625 = vor.u32 1.1754944e-38, %v5624
    %v5626 = vsel %vm5623, %v5625, %v5621
    %v5627 = vmul.f32 1.0, %v5626
    %5628 = vst [vmem:[#allocation22] sm:$0xff] %v5627
    // Predicated region
    $region118: #{tpu_custom_call.1} parent=1 // pred_check
      _
    $region119: #{tpu_custom_call.1} parent=1 // pred_check_branch
      %5630 = sbr.rel (0) target = $region121
    $region120: #{tpu_custom_call.1} parent=1 // pred_region
      %5632 = vsyncadd [#allocation4], 0
      %s5634 = sshll.u32 [#allocation22], 4
      %s5635 = int_to_ptr.vmem [resolvable:$true] %s5634
      %s5636 = sshll.u32 %s17, 4
      %s5637 = int_to_ptr.hbm [resolvable:$true] %s5636
      %5639 = dma.vmem_to_hbm [thread:$0]  %s5635, 128, %s5637, [#allocation4]
    $region121: #{tpu_custom_call.1} parent=1 // pred_fallthru
      _
    // Predicated region
    $region122: #{tpu_custom_call.1} parent=1 // pred_check
      _
    $region123: #{tpu_custom_call.1} parent=1 // pred_check_branch
      %5641 = sbr.rel (0) target = $region125
    $region124: #{tpu_custom_call.1} parent=1 // pred_region
      %5643 = dma.done [#allocation4], 128
    $region125: #{tpu_custom_call.1} parent=1 // pred_fallthru
      _
    %5644 = vsyncpa [#allocation3], 1
    %5645 = vsyncpa [#allocation6], 1
    %5646 = vsyncpa [#allocation9], 1
    %5647 = vsyncpa [#allocation12], 1
    %5648 = vsyncpa [#allocation15], 1
    %5649 = vsyncpa [#allocation18], 1
    %5650 = vsyncpa [#allocation21], 1
    %5651 = vsyncpa [#allocation4], 1

</llo_original>
